<compile_context>
chip_gen: v7x
topology: tpu7x:2x2x1
jax: 0.10.0
libtpu: 0.0.40
codegen_flags: <defaults>
</compile_context>

<pallas_src>
import jax
import jax.numpy as jnp
import numpy as np
from jax.experimental import pallas as pl
from jax.experimental.pallas import tpu as pltpu

EPS = 1e-5
H = W = 16
HW = H * W
PAD = 24           # zero rows above/below the activation slab in the shift scratch (>= W+1)
KIN1 = 32          # conv1 im2col K (27 real columns, zero-padded to 32)
K3 = 144           # im2col K of the 16->16 3x3 conv (9 taps x 16 channels)

# bf16 weight-slab row offsets (every weight starts at lane 0; offsets are multiples of 16)
W1_OFF = 0         # rows   0: 32  -> (32,16)  conv1 im2col weight (rows 27:32 zero)
WR1_OFF = 32       # rows  32: 48  -> (16,16)  res 1x1 conv
WR2_OFF = 48       # rows  48:192  -> (144,16) res 3x3 conv im2col weight
WSLAB_ROWS = 192

# f32 rows-slab layout
#   rows 0..5 : g1, be1, g2, be2, g3, be3           (lanes 0:16)
#   rows 8:56 : folded tail weight  (48,10) at lanes 0:10
#   row  56   : folded tail bias    (10 lanes)
WF_OFF = 8
BF_ROW = 56
ROWS_ROWS = 64


# ----------------------------------------------------------------------------- kernel helpers
def _bn_relu(z, gamma, beta):
    """nn.BatchNorm2d (training mode, biased batch variance) + ReLU on a (HW, 16) slab.

    sum and sum-of-squares are fused into one cross-sublane reduction over [z | z*z];
    one-pass variance is clamped at 0 before rsqrt; scale/shift folded into one FMA.
    """
    stats = jnp.sum(jnp.concatenate([z, z * z], axis=-1), axis=0, keepdims=True) * (1.0 / HW)
    mean = stats[:, 0:16]
    var = jnp.maximum(stats[:, 16:32] - mean * mean, 0.0)
    scale = gamma * jax.lax.rsqrt(var + EPS)
    return jnp.maximum(z * scale + (beta - mean * scale), 0.0)


# ----------------------------------------------------------------------------- fused kernel
def _fused_kernel(xcol_ref, wslab_ref, rows_ref, out_ref, pad_ref):
    # zero the padding rows of the shift scratch (the middle HW rows are overwritten later)
    pad_ref[0:PAD, :] = jnp.zeros((PAD, 16), jnp.float32)
    pad_ref[PAD + HW:PAD + HW + PAD, :] = jnp.zeros((PAD, 16), jnp.float32)

    # hoisted full-shape left/right image-border masks (x position of each flattened row)
    xpos = jax.lax.broadcasted_iota(jnp.int32, (HW, 16), 0) % W
    keep_l = xpos >= 1          # valid when reading x-1
    keep_r = xpos <= W - 2      # valid when reading x+1

    # BN affine parameters
    bnp = rows_ref[0:8, 0:16]                                     # (8, 16) f32
    g1, be1 = bnp[0:1], bnp[1:2]
    g2, be2 = bnp[2:3], bnp[3:4]
    g3, be3 = bnp[4:5], bnp[5:6]

    # conv1 (3x3, 3->16, pad 1): ONE im2col matmul (im2col built in the wrapper).
    # b1 is cancelled by BN1's mean subtraction / folded into the tail bias.
    xcol = xcol_ref[...]                                          # (HW, 32) f32
    y1 = jnp.dot(xcol.astype(jnp.bfloat16), wslab_ref[W1_OFF:W1_OFF + KIN1, 0:16],
                 preferred_element_type=jnp.float32)              # (HW, 16)
    a1 = _bn_relu(y1, g1, be1)

    # res 1x1 conv 16->16 (br1 cancelled by BN2), BN2 + ReLU
    z2 = jnp.dot(a1.astype(jnp.bfloat16), wslab_ref[WR1_OFF:WR1_OFF + 16, 0:16],
                 preferred_element_type=jnp.float32)
    a2 = _bn_relu(z2, g2, be2)

    # res 3x3 conv 16->16 (br2 cancelled by BN3): in-kernel im2col -> ONE (HW,144)x(144,16)
    # matmul.  Top/bottom image borders come from the zero pad rows of the scratch; the
    # left/right borders are fixed with the two hoisted masks.
    pad_ref[PAD:PAD + HW, :] = a2
    chunks = []
    for kh in range(3):
        for kw in range(3):
            s = (kh - 1) * W + (kw - 1)
            t = pad_ref[PAD + s:PAD + s + HW, :]
            if kw == 0:
                t = jnp.where(keep_l, t, 0.0)
            elif kw == 2:
                t = jnp.where(keep_r, t, 0.0)
            chunks.append(t)
    patches = jnp.concatenate(chunks, axis=-1)                    # (HW, 144) f32
    z3 = jnp.dot(patches.astype(jnp.bfloat16), wslab_ref[WR2_OFF:WR2_OFF + K3, 0:16],
                 preferred_element_type=jnp.float32)
    a3 = _bn_relu(z3, g3, be3)

    # Everything after BN3+ReLU is affine in (a3, xcol): res 1x1 16->64 (+br3), the skip
    # branch conv2(conv1(x)) (+bc2 + b1@wc2), the residual add, adaptive_avg_pool2d((1,1))
    # and the fc were folded offline into one tiny f32 matmul on the column sums.
    csum = jnp.concatenate([jnp.sum(a3, axis=0, keepdims=True),      # (1,16)
                            jnp.sum(xcol, axis=0, keepdims=True)],   # (1,32)
                           axis=-1)                                  # (1,48)
    out_ref[...] = (jnp.dot(csum, rows_ref[WF_OFF:WF_OFF + 48, :],
                            preferred_element_type=jnp.float32)
                    + rows_ref[BF_ROW:BF_ROW + 1, :])


# ----------------------------------------------------------------------------- wrapper
@jax.jit
def test_model_forward(x_nchw, p):
    """x_nchw: (1, 3, 16, 16) float32 -> (1, 10) float32."""
    # conv1 im2col built in the wrapper (x is a kernel input): (HW, 27) zero-padded to (HW, 32)
    ximg = jnp.transpose(x_nchw[0], (1, 2, 0))                    # (H, W, 3)
    xpad = jnp.pad(ximg, ((1, 1), (1, 1), (0, 0)))
    taps = [xpad[kh:kh + H, kw:kw + W, :] for kh in range(3) for kw in range(3)]
    xcol = jnp.concatenate(taps, axis=-1).reshape(HW, 27)
    xcol = jnp.pad(xcol, ((0, 0), (0, KIN1 - 27)))                # (HW, 32) f32

    flops = 2 * HW * (KIN1 * 16 + 16 * 16 + K3 * 16) + 2 * 48 * 128
    bytes_accessed = 4 * (HW * KIN1 + ROWS_ROWS * 128 + 128) + 2 * WSLAB_ROWS * 128

    out = pl.pallas_call(
        _fused_kernel,
        out_shape=jax.ShapeDtypeStruct((1, 128), jnp.float32),
        in_specs=[pl.BlockSpec(memory_space=pltpu.MemorySpace.VMEM)] * 3,
        out_specs=pl.BlockSpec(memory_space=pltpu.MemorySpace.VMEM),
        scratch_shapes=[pltpu.VMEM((PAD + HW + PAD, 16), jnp.float32)],
        cost_estimate=pl.CostEstimate(flops=flops, transcendentals=48,
                                      bytes_accessed=bytes_accessed),
    )(xcol, p['wslab'], p['rows'])
    return out[:, :10]


# ----------------------------------------------------------------------------- params
def init_raw_params(key):
    ks = jax.random.split(key, 18)
    rnd = lambda k, s, sc=0.1: sc * jax.random.normal(k, s, dtype=jnp.float32)
    return dict(
        w1=rnd(ks[0], (16, 3, 3, 3)),   b1=rnd(ks[1], (16,)),     # conv1
        wr1=rnd(ks[2], (16, 16, 1, 1)), br1=rnd(ks[3], (16,)),    # res conv 1x1
        wr2=rnd(ks[4], (16, 16, 3, 3)), br2=rnd(ks[5], (16,)),    # res conv 3x3
        wr3=rnd(ks[6], (64, 16, 1, 1)), br3=rnd(ks[7], (64,)),    # res conv 1x1 -> 64
        wc2=rnd(ks[8], (64, 16, 1, 1)), bc2=rnd(ks[9], (64,)),    # conv2 (skip)
        wfc=rnd(ks[10], (10, 64)),      bfc=rnd(ks[11], (10,)),   # fc
        g1=1.0 + rnd(ks[12], (16,)), be1=rnd(ks[13], (16,)),      # BN affine params
        g2=1.0 + rnd(ks[14], (16,)), be2=rnd(ks[15], (16,)),
        g3=1.0 + rnd(ks[16], (16,)), be3=rnd(ks[17], (16,)),
    )


def to_kernel_params(r):
    """Pack PyTorch-layout weights into 2 lane-dense slabs (3 kernel inputs incl. the image)."""
    w1 = np.asarray(r['w1'], np.float32)          # (16, 3, 3, 3)  OIHW
    wr2 = np.asarray(r['wr2'], np.float32)        # (16, 16, 3, 3)
    wr1m = np.asarray(r['wr1'])[:, :, 0, 0].T     # (16, 16)  in x out
    wr3m = np.asarray(r['wr3'])[:, :, 0, 0].T     # (16, 64)
    wc2m = np.asarray(r['wc2'])[:, :, 0, 0].T     # (16, 64)
    wfcT = np.asarray(r['wfc'], np.float32).T     # (64, 10)

    # --- bf16 weight slab, lane-dense (192,128); all weights start at lane 0 ---
    wslab = np.zeros((WSLAB_ROWS, 128), np.float32)
    for kh in range(3):
        for kw in range(3):
            k = kh * 3 + kw
            wslab[W1_OFF + 3 * k:W1_OFF + 3 * k + 3, 0:16] = w1[:, :, kh, kw].T
            wslab[WR2_OFF + 16 * k:WR2_OFF + 16 * k + 16, 0:16] = wr2[:, :, kh, kw].T
    wslab[WR1_OFF:WR1_OFF + 16, 0:16] = wr1m

    # --- f32 rows slab: BN params + folded tail (1x1 16->64, skip conv2∘conv1, pool, fc) ---
    # b1/br1/br2 are cancelled exactly by the following training-mode BatchNorm mean
    # subtraction; b1's skip-branch effect + bc2 + br3 + 1/HW pool scale + fc are folded here.
    rows = np.zeros((ROWS_ROWS, 128), np.float32)
    rows[0, :16], rows[1, :16] = np.asarray(r['g1']), np.asarray(r['be1'])
    rows[2, :16], rows[3, :16] = np.asarray(r['g2']), np.asarray(r['be2'])
    rows[4, :16], rows[5, :16] = np.asarray(r['g3']), np.asarray(r['be3'])

    w1c = wslab[W1_OFF:W1_OFF + KIN1, 0:16]                        # (32,16) f32, exact
    wskip = w1c @ wc2m                                             # (32,64) conv2 ∘ conv1
    rows[WF_OFF:WF_OFF + 16, 0:10] = wr3m @ wfcT / HW              # a3 path
    rows[WF_OFF + 16:WF_OFF + 48, 0:10] = wskip @ wfcT / HW        # skip path (from x im2col)
    bc2p = np.asarray(r['bc2']) + np.asarray(r['b1']) @ wc2m
    rows[BF_ROW, 0:10] = (np.asarray(r['br3']) + bc2p) @ wfcT + np.asarray(r['bfc'])

    return dict(wslab=jnp.asarray(wslab, dtype=jnp.bfloat16),
                rows=jnp.asarray(rows, dtype=jnp.float32))


# ----------------------------------------------------------------------------- pure-JAX reference
def reference_forward(x, r):
    def conv(x, w, b, pad):
        y = jax.lax.conv_general_dilated(
            x, w, (1, 1), [(pad, pad), (pad, pad)],
            dimension_numbers=('NCHW', 'OIHW', 'NCHW'))
        return y + b.reshape(1, -1, 1, 1)

    def bn_relu(x, g, be):
        mean = jnp.mean(x, axis=(0, 2, 3), keepdims=True)
        var = jnp.mean((x - mean) ** 2, axis=(0, 2, 3), keepdims=True)
        y = (x - mean) * (g.reshape(1, -1, 1, 1) * jax.lax.rsqrt(var + EPS)) + be.reshape(1, -1, 1, 1)
        return jnp.maximum(y, 0.0)

    y1 = conv(x, r['w1'], r['b1'], 1)
    t = bn_relu(y1, r['g1'], r['be1'])
    t = conv(t, r['wr1'], r['br1'], 0)
    t = bn_relu(t, r['g2'], r['be2'])
    t = conv(t, r['wr2'], r['br2'], 1)
    t = bn_relu(t, r['g3'], r['be3'])
    t = conv(t, r['wr3'], r['br3'], 0)
    y = t + conv(y1, r['wc2'], r['bc2'], 0)
    y = jnp.mean(y, axis=(2, 3)).reshape(1, 64)
    return y @ r['wfc'].T + r['bfc'].reshape(1, -1)


# ----------------------------------------------------------------------------- main
if __name__ == "__main__":
    key = jax.random.PRNGKey(0)
    k_x, k_p = jax.random.split(key)
    x = jax.random.normal(k_x, (1, 3, H, W), dtype=jnp.float32)   # NCHW; batch must be 1 (view(1, 64))

    raw = init_raw_params(k_p)
    kparams = to_kernel_params(raw)

    out = jax.block_until_ready(test_model_forward(x, kparams))
    ref = jax.block_until_ready(reference_forward(x, raw))
    assert out.shape == (1, 10)
    np.testing.assert_allclose(np.asarray(out), np.asarray(ref), rtol=1e-2, atol=1e-2)
    print("KERNEL_OK")
</pallas_src>

<mosaic_0001>
module attributes {stable_mosaic.version = 11 : i64} {
  func.func @_fused_kernel(%arg0: memref<256x32xf32, #tpu.memory_space<vmem>>, %arg1: memref<192x128xbf16, #tpu.memory_space<vmem>>, %arg2: memref<64x128xf32, #tpu.memory_space<vmem>>, %arg3: memref<1x128xf32, #tpu.memory_space<vmem>>, %arg4: memref<304x16xf32, #tpu.memory_space<vmem>>) attributes {dimension_semantics = [], scalar_prefetch = 0 : i64, scratch_operands = 1 : i64, tpu.core_type = #tpu.core_type<tc>} {
    %cst = arith.constant 0.000000e+00 : f32
    %0 = vector.broadcast %cst : f32 to vector<24x16xf32>
    %c0 = arith.constant 0 : index
    %c0_0 = arith.constant 0 : index
    %1 = vector.load %arg4[%c0, %c0_0] : memref<304x16xf32, #tpu.memory_space<vmem>>, vector<24x16xf32>
    tpu.vector_store %arg4[%c0, %c0_0], %0 {strides = array<i32>} : memref<304x16xf32, #tpu.memory_space<vmem>>, vector<24x16xf32>,
    %cst_1 = arith.constant 0.000000e+00 : f32
    %2 = vector.broadcast %cst_1 : f32 to vector<24x16xf32>
    %c280 = arith.constant 280 : index
    %c0_2 = arith.constant 0 : index
    %3 = vector.load %arg4[%c280, %c0_2] : memref<304x16xf32, #tpu.memory_space<vmem>>, vector<24x16xf32>
    tpu.vector_store %arg4[%c280, %c0_2], %2 {strides = array<i32>} : memref<304x16xf32, #tpu.memory_space<vmem>>, vector<24x16xf32>,
    %4 = tpu.iota {dimensions = array<i32: 0>} : vector<256x16xi32>
    %c16_i32 = arith.constant 16 : i32
    %c0_i32 = arith.constant 0 : i32
    %5 = arith.cmpi eq, %c16_i32, %c0_i32 : i32
    %c1_i32 = arith.constant 1 : i32
    %6 = arith.select %5, %c1_i32, %c16_i32 : i32
    %7 = vector.broadcast %6 : i32 to vector<256x16xi32>
    %8 = arith.remsi %4, %7 : vector<256x16xi32>
    %c0_i32_3 = arith.constant 0 : i32
    %9 = vector.broadcast %c0_i32_3 : i32 to vector<256x16xi32>
    %10 = arith.cmpi ne, %8, %9 : vector<256x16xi32>
    %c0_i32_4 = arith.constant 0 : i32
    %11 = vector.broadcast %c0_i32_4 : i32 to vector<256x16xi32>
    %12 = arith.cmpi slt, %8, %11 : vector<256x16xi32>
    %c0_i32_5 = arith.constant 0 : i32
    %13 = arith.cmpi slt, %6, %c0_i32_5 : i32
    %14 = vector.broadcast %13 : i1 to vector<256x16xi1>
    %15 = vector.broadcast %14 : vector<256x16xi1> to vector<256x16xi1>
    %16 = arith.xori %12, %15 : vector<256x16xi1>
    %17 = arith.andi %16, %10 : vector<256x16xi1>
    %18 = vector.broadcast %6 : i32 to vector<256x16xi32>
    %19 = arith.addi %8, %18 : vector<256x16xi32>
    %20 = arith.select %17, %19, %8 : vector<256x16xi1>, vector<256x16xi32>
    %c1_i32_6 = arith.constant 1 : i32
    %21 = vector.broadcast %c1_i32_6 : i32 to vector<256x16xi32>
    %22 = arith.cmpi sge, %20, %21 : vector<256x16xi32>
    %c14_i32 = arith.constant 14 : i32
    %23 = vector.broadcast %c14_i32 : i32 to vector<256x16xi32>
    %24 = arith.cmpi sle, %20, %23 : vector<256x16xi32>
    %c0_7 = arith.constant 0 : index
    %c0_8 = arith.constant 0 : index
    %25 = vector.load %arg2[%c0_7, %c0_8] : memref<64x128xf32, #tpu.memory_space<vmem>>, vector<8x16xf32>
    %26 = vector.extract_strided_slice %25 {offsets = [0, 0], sizes = [1, 16], strides = [1, 1]} : vector<8x16xf32> to vector<1x16xf32>
    %27 = vector.extract_strided_slice %25 {offsets = [1, 0], sizes = [1, 16], strides = [1, 1]} : vector<8x16xf32> to vector<1x16xf32>
    %28 = vector.extract_strided_slice %25 {offsets = [2, 0], sizes = [1, 16], strides = [1, 1]} : vector<8x16xf32> to vector<1x16xf32>
    %29 = vector.extract_strided_slice %25 {offsets = [3, 0], sizes = [1, 16], strides = [1, 1]} : vector<8x16xf32> to vector<1x16xf32>
    %30 = vector.extract_strided_slice %25 {offsets = [4, 0], sizes = [1, 16], strides = [1, 1]} : vector<8x16xf32> to vector<1x16xf32>
    %31 = vector.extract_strided_slice %25 {offsets = [5, 0], sizes = [1, 16], strides = [1, 1]} : vector<8x16xf32> to vector<1x16xf32>
    %c0_9 = arith.constant 0 : index
    %c0_10 = arith.constant 0 : index
    %32 = vector.load %arg0[%c0_9, %c0_10] : memref<256x32xf32, #tpu.memory_space<vmem>>, vector<256x32xf32>
    %33 = arith.truncf %32 : vector<256x32xf32> to vector<256x32xbf16>
    %c0_11 = arith.constant 0 : index
    %c0_12 = arith.constant 0 : index
    %34 = vector.load %arg1[%c0_11, %c0_12] : memref<192x128xbf16, #tpu.memory_space<vmem>>, vector<32x16xbf16>
    %cst_13 = arith.constant dense<0.000000e+00> : vector<256x16xf32>
    %35 = tpu.matmul %33, %34, %cst_13 {dimension_numbers = #tpu.dot_dimension_numbers<[1], [0], [0], [1], [0, 0, 1, 1], [], []>} : vector<256x32xbf16>, vector<32x16xbf16>, vector<256x16xf32> -> vector<256x16xf32>
    %36 = arith.mulf %35, %35 : vector<256x16xf32>
    %37 = tpu.concatenate %35, %36 in 1 : vector<256x16xf32>, vector<256x16xf32> -> vector<256x32xf32>
    %cst_14 = arith.constant dense<0.000000e+00> : vector<32xf32>
    %38 = vector.multi_reduction <add>, %37, %cst_14 [0] : vector<256x32xf32> to vector<32xf32>
    %39 = vector.shape_cast %38 : vector<32xf32> to vector<1x32xf32>
    %cst_15 = arith.constant 3.906250e-03 : f32
    %40 = vector.broadcast %cst_15 : f32 to vector<1x32xf32>
    %41 = arith.mulf %39, %40 : vector<1x32xf32>
    %42 = vector.extract_strided_slice %41 {offsets = [0, 0], sizes = [1, 16], strides = [1, 1]} : vector<1x32xf32> to vector<1x16xf32>
    %43 = vector.extract_strided_slice %41 {offsets = [0, 16], sizes = [1, 16], strides = [1, 1]} : vector<1x32xf32> to vector<1x16xf32>
    %44 = arith.mulf %42, %42 : vector<1x16xf32>
    %45 = arith.subf %43, %44 : vector<1x16xf32>
    %cst_16 = arith.constant 0.000000e+00 : f32
    %46 = vector.broadcast %cst_16 : f32 to vector<1x16xf32>
    %47 = arith.maximumf %45, %46 : vector<1x16xf32>
    %cst_17 = arith.constant 9.99999974E-6 : f32
    %48 = vector.broadcast %cst_17 : f32 to vector<1x16xf32>
    %49 = arith.addf %47, %48 : vector<1x16xf32>
    %50 = math.rsqrt %49 : vector<1x16xf32>
    %51 = arith.mulf %26, %50 : vector<1x16xf32>
    %52 = vector.broadcast %51 : vector<1x16xf32> to vector<256x16xf32>
    %53 = arith.mulf %35, %52 : vector<256x16xf32>
    %54 = arith.mulf %42, %51 : vector<1x16xf32>
    %55 = arith.subf %27, %54 : vector<1x16xf32>
    %56 = vector.broadcast %55 : vector<1x16xf32> to vector<256x16xf32>
    %57 = arith.addf %53, %56 : vector<256x16xf32>
    %cst_18 = arith.constant 0.000000e+00 : f32
    %58 = vector.broadcast %cst_18 : f32 to vector<256x16xf32>
    %59 = arith.maximumf %57, %58 : vector<256x16xf32>
    %60 = arith.truncf %59 : vector<256x16xf32> to vector<256x16xbf16>
    %c32 = arith.constant 32 : index
    %c0_19 = arith.constant 0 : index
    %61 = vector.load %arg1[%c32, %c0_19] : memref<192x128xbf16, #tpu.memory_space<vmem>>, vector<16x16xbf16>
    %cst_20 = arith.constant dense<0.000000e+00> : vector<256x16xf32>
    %62 = tpu.matmul %60, %61, %cst_20 {dimension_numbers = #tpu.dot_dimension_numbers<[1], [0], [0], [1], [0, 0, 1, 1], [], []>} : vector<256x16xbf16>, vector<16x16xbf16>, vector<256x16xf32> -> vector<256x16xf32>
    %63 = arith.mulf %62, %62 : vector<256x16xf32>
    %64 = tpu.concatenate %62, %63 in 1 : vector<256x16xf32>, vector<256x16xf32> -> vector<256x32xf32>
    %cst_21 = arith.constant dense<0.000000e+00> : vector<32xf32>
    %65 = vector.multi_reduction <add>, %64, %cst_21 [0] : vector<256x32xf32> to vector<32xf32>
    %66 = vector.shape_cast %65 : vector<32xf32> to vector<1x32xf32>
    %cst_22 = arith.constant 3.906250e-03 : f32
    %67 = vector.broadcast %cst_22 : f32 to vector<1x32xf32>
    %68 = arith.mulf %66, %67 : vector<1x32xf32>
    %69 = vector.extract_strided_slice %68 {offsets = [0, 0], sizes = [1, 16], strides = [1, 1]} : vector<1x32xf32> to vector<1x16xf32>
    %70 = vector.extract_strided_slice %68 {offsets = [0, 16], sizes = [1, 16], strides = [1, 1]} : vector<1x32xf32> to vector<1x16xf32>
    %71 = arith.mulf %69, %69 : vector<1x16xf32>
    %72 = arith.subf %70, %71 : vector<1x16xf32>
    %cst_23 = arith.constant 0.000000e+00 : f32
    %73 = vector.broadcast %cst_23 : f32 to vector<1x16xf32>
    %74 = arith.maximumf %72, %73 : vector<1x16xf32>
    %cst_24 = arith.constant 9.99999974E-6 : f32
    %75 = vector.broadcast %cst_24 : f32 to vector<1x16xf32>
    %76 = arith.addf %74, %75 : vector<1x16xf32>
    %77 = math.rsqrt %76 : vector<1x16xf32>
    %78 = arith.mulf %28, %77 : vector<1x16xf32>
    %79 = vector.broadcast %78 : vector<1x16xf32> to vector<256x16xf32>
    %80 = arith.mulf %62, %79 : vector<256x16xf32>
    %81 = arith.mulf %69, %78 : vector<1x16xf32>
    %82 = arith.subf %29, %81 : vector<1x16xf32>
    %83 = vector.broadcast %82 : vector<1x16xf32> to vector<256x16xf32>
    %84 = arith.addf %80, %83 : vector<256x16xf32>
    %cst_25 = arith.constant 0.000000e+00 : f32
    %85 = vector.broadcast %cst_25 : f32 to vector<256x16xf32>
    %86 = arith.maximumf %84, %85 : vector<256x16xf32>
    %c24 = arith.constant 24 : index
    %c0_26 = arith.constant 0 : index
    %87 = vector.load %arg4[%c24, %c0_26] : memref<304x16xf32, #tpu.memory_space<vmem>>, vector<256x16xf32>
    tpu.vector_store %arg4[%c24, %c0_26], %86 {strides = array<i32>} : memref<304x16xf32, #tpu.memory_space<vmem>>, vector<256x16xf32>,
    %c7 = arith.constant 7 : index
    %c0_27 = arith.constant 0 : index
    %88 = vector.load %arg4[%c7, %c0_27] : memref<304x16xf32, #tpu.memory_space<vmem>>, vector<256x16xf32>
    %cst_28 = arith.constant 0.000000e+00 : f32
    %89 = vector.broadcast %cst_28 : f32 to vector<256x16xf32>
    %90 = arith.select %22, %88, %89 : vector<256x16xi1>, vector<256x16xf32>
    %c8 = arith.constant 8 : index
    %c0_29 = arith.constant 0 : index
    %91 = vector.load %arg4[%c8, %c0_29] : memref<304x16xf32, #tpu.memory_space<vmem>>, vector<256x16xf32>
    %c9 = arith.constant 9 : index
    %c0_30 = arith.constant 0 : index
    %92 = vector.load %arg4[%c9, %c0_30] : memref<304x16xf32, #tpu.memory_space<vmem>>, vector<256x16xf32>
    %cst_31 = arith.constant 0.000000e+00 : f32
    %93 = vector.broadcast %cst_31 : f32 to vector<256x16xf32>
    %94 = arith.select %24, %92, %93 : vector<256x16xi1>, vector<256x16xf32>
    %c23 = arith.constant 23 : index
    %c0_32 = arith.constant 0 : index
    %95 = vector.load %arg4[%c23, %c0_32] : memref<304x16xf32, #tpu.memory_space<vmem>>, vector<256x16xf32>
    %cst_33 = arith.constant 0.000000e+00 : f32
    %96 = vector.broadcast %cst_33 : f32 to vector<256x16xf32>
    %97 = arith.select %22, %95, %96 : vector<256x16xi1>, vector<256x16xf32>
    %c24_34 = arith.constant 24 : index
    %c0_35 = arith.constant 0 : index
    %98 = vector.load %arg4[%c24_34, %c0_35] : memref<304x16xf32, #tpu.memory_space<vmem>>, vector<256x16xf32>
    %c25 = arith.constant 25 : index
    %c0_36 = arith.constant 0 : index
    %99 = vector.load %arg4[%c25, %c0_36] : memref<304x16xf32, #tpu.memory_space<vmem>>, vector<256x16xf32>
    %cst_37 = arith.constant 0.000000e+00 : f32
    %100 = vector.broadcast %cst_37 : f32 to vector<256x16xf32>
    %101 = arith.select %24, %99, %100 : vector<256x16xi1>, vector<256x16xf32>
    %c39 = arith.constant 39 : index
    %c0_38 = arith.constant 0 : index
    %102 = vector.load %arg4[%c39, %c0_38] : memref<304x16xf32, #tpu.memory_space<vmem>>, vector<256x16xf32>
    %cst_39 = arith.constant 0.000000e+00 : f32
    %103 = vector.broadcast %cst_39 : f32 to vector<256x16xf32>
    %104 = arith.select %22, %102, %103 : vector<256x16xi1>, vector<256x16xf32>
    %c40 = arith.constant 40 : index
    %c0_40 = arith.constant 0 : index
    %105 = vector.load %arg4[%c40, %c0_40] : memref<304x16xf32, #tpu.memory_space<vmem>>, vector<256x16xf32>
    %c41 = arith.constant 41 : index
    %c0_41 = arith.constant 0 : index
    %106 = vector.load %arg4[%c41, %c0_41] : memref<304x16xf32, #tpu.memory_space<vmem>>, vector<256x16xf32>
    %cst_42 = arith.constant 0.000000e+00 : f32
    %107 = vector.broadcast %cst_42 : f32 to vector<256x16xf32>
    %108 = arith.select %24, %106, %107 : vector<256x16xi1>, vector<256x16xf32>
    %109 = tpu.concatenate %90, %91, %94, %97, %98, %101, %104, %105, %108 in 1 : vector<256x16xf32>, vector<256x16xf32>, vector<256x16xf32>, vector<256x16xf32>, vector<256x16xf32>, vector<256x16xf32>, vector<256x16xf32>, vector<256x16xf32>, vector<256x16xf32> -> vector<256x144xf32>
    %110 = arith.truncf %109 : vector<256x144xf32> to vector<256x144xbf16>
    %c48 = arith.constant 48 : index
    %c0_43 = arith.constant 0 : index
    %111 = vector.load %arg1[%c48, %c0_43] : memref<192x128xbf16, #tpu.memory_space<vmem>>, vector<144x16xbf16>
    %cst_44 = arith.constant dense<0.000000e+00> : vector<256x16xf32>
    %112 = tpu.matmul %110, %111, %cst_44 {dimension_numbers = #tpu.dot_dimension_numbers<[1], [0], [0], [1], [0, 0, 1, 1], [], []>} : vector<256x144xbf16>, vector<144x16xbf16>, vector<256x16xf32> -> vector<256x16xf32>
    %113 = arith.mulf %112, %112 : vector<256x16xf32>
    %114 = tpu.concatenate %112, %113 in 1 : vector<256x16xf32>, vector<256x16xf32> -> vector<256x32xf32>
    %cst_45 = arith.constant dense<0.000000e+00> : vector<32xf32>
    %115 = vector.multi_reduction <add>, %114, %cst_45 [0] : vector<256x32xf32> to vector<32xf32>
    %116 = vector.shape_cast %115 : vector<32xf32> to vector<1x32xf32>
    %cst_46 = arith.constant 3.906250e-03 : f32
    %117 = vector.broadcast %cst_46 : f32 to vector<1x32xf32>
    %118 = arith.mulf %116, %117 : vector<1x32xf32>
    %119 = vector.extract_strided_slice %118 {offsets = [0, 0], sizes = [1, 16], strides = [1, 1]} : vector<1x32xf32> to vector<1x16xf32>
    %120 = vector.extract_strided_slice %118 {offsets = [0, 16], sizes = [1, 16], strides = [1, 1]} : vector<1x32xf32> to vector<1x16xf32>
    %121 = arith.mulf %119, %119 : vector<1x16xf32>
    %122 = arith.subf %120, %121 : vector<1x16xf32>
    %cst_47 = arith.constant 0.000000e+00 : f32
    %123 = vector.broadcast %cst_47 : f32 to vector<1x16xf32>
    %124 = arith.maximumf %122, %123 : vector<1x16xf32>
    %cst_48 = arith.constant 9.99999974E-6 : f32
    %125 = vector.broadcast %cst_48 : f32 to vector<1x16xf32>
    %126 = arith.addf %124, %125 : vector<1x16xf32>
    %127 = math.rsqrt %126 : vector<1x16xf32>
    %128 = arith.mulf %30, %127 : vector<1x16xf32>
    %129 = vector.broadcast %128 : vector<1x16xf32> to vector<256x16xf32>
    %130 = arith.mulf %112, %129 : vector<256x16xf32>
    %131 = arith.mulf %119, %128 : vector<1x16xf32>
    %132 = arith.subf %31, %131 : vector<1x16xf32>
    %133 = vector.broadcast %132 : vector<1x16xf32> to vector<256x16xf32>
    %134 = arith.addf %130, %133 : vector<256x16xf32>
    %cst_49 = arith.constant 0.000000e+00 : f32
    %135 = vector.broadcast %cst_49 : f32 to vector<256x16xf32>
    %136 = arith.maximumf %134, %135 : vector<256x16xf32>
    %cst_50 = arith.constant dense<0.000000e+00> : vector<16xf32>
    %137 = vector.multi_reduction <add>, %136, %cst_50 [0] : vector<256x16xf32> to vector<16xf32>
    %138 = vector.shape_cast %137 : vector<16xf32> to vector<1x16xf32>
    %cst_51 = arith.constant dense<0.000000e+00> : vector<32xf32>
    %139 = vector.multi_reduction <add>, %32, %cst_51 [0] : vector<256x32xf32> to vector<32xf32>
    %140 = vector.shape_cast %139 : vector<32xf32> to vector<1x32xf32>
    %141 = tpu.concatenate %138, %140 in 1 : vector<1x16xf32>, vector<1x32xf32> -> vector<1x48xf32>
    %c8_52 = arith.constant 8 : index
    %c0_53 = arith.constant 0 : index
    %142 = vector.load %arg2[%c8_52, %c0_53] : memref<64x128xf32, #tpu.memory_space<vmem>>, vector<48x128xf32>
    %cst_54 = arith.constant dense<0.000000e+00> : vector<1x128xf32>
    %143 = tpu.matmul %141, %142, %cst_54 {dimension_numbers = #tpu.dot_dimension_numbers<[1], [0], [0], [1], [0, 0, 1, 1], [], []>} : vector<1x48xf32>, vector<48x128xf32>, vector<1x128xf32> -> vector<1x128xf32>
    %c56 = arith.constant 56 : index
    %c0_55 = arith.constant 0 : index
    %144 = vector.load %arg2[%c56, %c0_55] : memref<64x128xf32, #tpu.memory_space<vmem>>, vector<1x128xf32>
    %145 = arith.addf %143, %144 : vector<1x128xf32>
    %c0_56 = arith.constant 0 : index
    %c0_57 = arith.constant 0 : index
    %146 = vector.load %arg3[%c0_56, %c0_57] : memref<1x128xf32, #tpu.memory_space<vmem>>, vector<1x128xf32>
    tpu.vector_store %arg3[%c0_56, %c0_57], %145 {strides = array<i32>} : memref<1x128xf32, #tpu.memory_space<vmem>>, vector<1x128xf32>,
    return
  }
}

</mosaic_0001>

<llo_original>
// kernel: test_model_forward.1
$region0: #{test_model_forward.1}
  #allocation0 [shape = 'u32[]', space=smem, size = 0x4, offset = 0x4, fixed_abs, tag = 'smem constant byte address 0x4 - core index']
  #allocation1 [shape = 'u32[144,128]{1,0:T(1,128)}', space=vmem, size = 0x12000, scoped, tag = 'internal scratch']
  #allocation2 [shape = 'f32[304,16]{1,0:T(8,128)}', space=vmem, size = 0x26000, scoped, tag = 'scratch operand']
  %s0 = inlined_call_operand.vmem [shape: f32[256,32], index: 0, kind: input, shape index: {}]
  %s1 = inlined_call_operand.vmem [shape: bf16[192,128], index: 1, kind: input, shape index: {}]
  %s2 = inlined_call_operand.vmem [shape: f32[64,128], index: 2, kind: input, shape index: {}]
  %s3 = inlined_call_operand.hbm [shape: f32[1,128], index: 3, kind: output, shape index: {}]
  %s4 = sld [smem:[#allocation0]]
  $region22: #{test_model_forward.1} parent=0
    _
  %s6 = ssub.s32 1, %s4
  %s7 = scalar_select 0, %s6, %s4
  $region1: #{test_model_forward.1} parent=0
    #allocation3 [shape = 'u8[512]{0}', space=vmem, size = 0x400, scoped, tag = 'output window, operand 0, single buffered']
    #allocation4 [shape = 's32[1]{0}', space=sflag, size = 0x4, scoped, tag = 'scoped memory for test_model_forward.1']
    %8 = vsyncpa [#allocation4], 0
    // Predicated region
    $region2: #{test_model_forward.1} parent=1 // pred_check
      _
    $region3: #{test_model_forward.1} parent=1 // pred_check_branch
      %10 = sbr.rel (0) target = $region5
    $region4: #{test_model_forward.1} parent=1 // pred_region
      _
    $region5: #{test_model_forward.1} parent=1 // pred_fallthru
      _
    // Predicated region
    $region6: #{test_model_forward.1} parent=1 // pred_check
      _
    $region7: #{test_model_forward.1} parent=1 // pred_check_branch
      %12 = sbr.rel (0) target = $region9
    $region8: #{test_model_forward.1} parent=1 // pred_region
      _
    $region9: #{test_model_forward.1} parent=1 // pred_fallthru
      _
    // Predicated region
    $region10: #{test_model_forward.1} parent=1 // pred_check
      _
    $region11: #{test_model_forward.1} parent=1 // pred_check_branch
      %14 = sbr.rel (0) target = $region13
    $region12: #{test_model_forward.1} parent=1 // pred_region
      _
    $region13: #{test_model_forward.1} parent=1 // pred_fallthru
      _
    %vm16 = vcmask 130048
    %17 = vst.msk [vmem:[#allocation2] sm:$0xff] %vm16, 0.0
    %18 = vst.msk [vmem:[#allocation2 + $0x8] sm:$0xff] %vm16, 0.0
    %19 = vst.msk [vmem:[#allocation2 + $0x10] sm:$0xff] %vm16, 0.0
    %20 = vst.msk [vmem:[#allocation2 + $0x118] sm:$0xff] %vm16, 0.0
    %21 = vst.msk [vmem:[#allocation2 + $0x120] sm:$0xff] %vm16, 0.0
    %22 = vst.msk [vmem:[#allocation2 + $0x128] sm:$0xff] %vm16, 0.0
    %v23 = vlaneseq
    %v24 = vshrl.u32 %v23, 7
    %v25 = vadd.s32 %v24, 8
    %v26 = vadd.s32 %v24, 16
    %v27 = vadd.s32 %v24, 24
    %v28 = vadd.s32 %v24, 32
    %v29 = vadd.s32 %v24, 40
    %v30 = vadd.s32 %v24, 48
    %v31 = vadd.s32 %v24, 56
    %v32 = vadd.s32 %v24, 64
    %v33 = vadd.s32 %v24, 72
    %v34 = vadd.s32 %v24, 80
    %v35 = vadd.s32 %v24, 88
    %v36 = vadd.s32 %v24, 96
    %v37 = vadd.s32 %v24, 104
    %v38 = vadd.s32 %v24, 112
    %v39 = vadd.s32 %v24, 120
    %v40 = vadd.s32 %v24, 128
    %v41 = vadd.s32 %v24, 136
    %v42 = vadd.s32 %v24, 144
    %v43 = vadd.s32 %v24, 152
    %v44 = vadd.s32 %v24, 160
    %v45 = vadd.s32 %v24, 168
    %v46 = vadd.s32 %v24, 176
    %v47 = vadd.s32 %v24, 184
    %v48 = vadd.s32 %v24, 192
    %v49 = vadd.s32 %v24, 200
    %v50 = vadd.s32 %v24, 208
    %v51 = vadd.s32 %v24, 216
    %v52 = vadd.s32 %v24, 224
    %v53 = vadd.s32 %v24, 232
    %v54 = vadd.s32 %v24, 240
    %v55 = vadd.s32 %v24, 248
    %vm56 = vcmp.lt.s32.totalorder %v24, 0
    %v57 = vsub.s32 0, %v24
    %v58 = vsel %vm56, %v57, %v24
    %v59 = vshrl.u32 %v58, 4
    %v60 = vand.u32 %v58, 15
    %v61 = vsub.s32 0, %v60
    %v62 = vsel %vm56, %v61, %v60
    %vm63 = vcmp.lt.s32.totalorder %v25, 0
    %v64 = vsub.s32 0, %v25
    %v65 = vsel %vm63, %v64, %v25
    %v66 = vshrl.u32 %v65, 4
    %v67 = vand.u32 %v65, 15
    %v68 = vsub.s32 0, %v67
    %v69 = vsel %vm63, %v68, %v67
    %vm70 = vcmp.lt.s32.totalorder %v26, 0
    %v71 = vsub.s32 0, %v26
    %v72 = vsel %vm70, %v71, %v26
    %v73 = vshrl.u32 %v72, 4
    %v74 = vand.u32 %v72, 15
    %v75 = vsub.s32 0, %v74
    %v76 = vsel %vm70, %v75, %v74
    %vm77 = vcmp.lt.s32.totalorder %v27, 0
    %v78 = vsub.s32 0, %v27
    %v79 = vsel %vm77, %v78, %v27
    %v80 = vshrl.u32 %v79, 4
    %v81 = vand.u32 %v79, 15
    %v82 = vsub.s32 0, %v81
    %v83 = vsel %vm77, %v82, %v81
    %vm84 = vcmp.lt.s32.totalorder %v28, 0
    %v85 = vsub.s32 0, %v28
    %v86 = vsel %vm84, %v85, %v28
    %v87 = vshrl.u32 %v86, 4
    %v88 = vand.u32 %v86, 15
    %v89 = vsub.s32 0, %v88
    %v90 = vsel %vm84, %v89, %v88
    %vm91 = vcmp.lt.s32.totalorder %v29, 0
    %v92 = vsub.s32 0, %v29
    %v93 = vsel %vm91, %v92, %v29
    %v94 = vshrl.u32 %v93, 4
    %v95 = vand.u32 %v93, 15
    %v96 = vsub.s32 0, %v95
    %v97 = vsel %vm91, %v96, %v95
    %vm98 = vcmp.lt.s32.totalorder %v30, 0
    %v99 = vsub.s32 0, %v30
    %v100 = vsel %vm98, %v99, %v30
    %v101 = vshrl.u32 %v100, 4
    %v102 = vand.u32 %v100, 15
    %v103 = vsub.s32 0, %v102
    %v104 = vsel %vm98, %v103, %v102
    %vm105 = vcmp.lt.s32.totalorder %v31, 0
    %v106 = vsub.s32 0, %v31
    %v107 = vsel %vm105, %v106, %v31
    %v108 = vshrl.u32 %v107, 4
    %v109 = vand.u32 %v107, 15
    %v110 = vsub.s32 0, %v109
    %v111 = vsel %vm105, %v110, %v109
    %vm112 = vcmp.lt.s32.totalorder %v32, 0
    %v113 = vsub.s32 0, %v32
    %v114 = vsel %vm112, %v113, %v32
    %v115 = vshrl.u32 %v114, 4
    %v116 = vand.u32 %v114, 15
    %v117 = vsub.s32 0, %v116
    %v118 = vsel %vm112, %v117, %v116
    %vm119 = vcmp.lt.s32.totalorder %v33, 0
    %v120 = vsub.s32 0, %v33
    %v121 = vsel %vm119, %v120, %v33
    %v122 = vshrl.u32 %v121, 4
    %v123 = vand.u32 %v121, 15
    %v124 = vsub.s32 0, %v123
    %v125 = vsel %vm119, %v124, %v123
    %vm126 = vcmp.lt.s32.totalorder %v34, 0
    %v127 = vsub.s32 0, %v34
    %v128 = vsel %vm126, %v127, %v34
    %v129 = vshrl.u32 %v128, 4
    %v130 = vand.u32 %v128, 15
    %v131 = vsub.s32 0, %v130
    %v132 = vsel %vm126, %v131, %v130
    %vm133 = vcmp.lt.s32.totalorder %v35, 0
    %v134 = vsub.s32 0, %v35
    %v135 = vsel %vm133, %v134, %v35
    %v136 = vshrl.u32 %v135, 4
    %v137 = vand.u32 %v135, 15
    %v138 = vsub.s32 0, %v137
    %v139 = vsel %vm133, %v138, %v137
    %vm140 = vcmp.lt.s32.totalorder %v36, 0
    %v141 = vsub.s32 0, %v36
    %v142 = vsel %vm140, %v141, %v36
    %v143 = vshrl.u32 %v142, 4
    %v144 = vand.u32 %v142, 15
    %v145 = vsub.s32 0, %v144
    %v146 = vsel %vm140, %v145, %v144
    %vm147 = vcmp.lt.s32.totalorder %v37, 0
    %v148 = vsub.s32 0, %v37
    %v149 = vsel %vm147, %v148, %v37
    %v150 = vshrl.u32 %v149, 4
    %v151 = vand.u32 %v149, 15
    %v152 = vsub.s32 0, %v151
    %v153 = vsel %vm147, %v152, %v151
    %vm154 = vcmp.lt.s32.totalorder %v38, 0
    %v155 = vsub.s32 0, %v38
    %v156 = vsel %vm154, %v155, %v38
    %v157 = vshrl.u32 %v156, 4
    %v158 = vand.u32 %v156, 15
    %v159 = vsub.s32 0, %v158
    %v160 = vsel %vm154, %v159, %v158
    %vm161 = vcmp.lt.s32.totalorder %v39, 0
    %v162 = vsub.s32 0, %v39
    %v163 = vsel %vm161, %v162, %v39
    %v164 = vshrl.u32 %v163, 4
    %v165 = vand.u32 %v163, 15
    %v166 = vsub.s32 0, %v165
    %v167 = vsel %vm161, %v166, %v165
    %vm168 = vcmp.lt.s32.totalorder %v40, 0
    %v169 = vsub.s32 0, %v40
    %v170 = vsel %vm168, %v169, %v40
    %v171 = vshrl.u32 %v170, 4
    %v172 = vand.u32 %v170, 15
    %v173 = vsub.s32 0, %v172
    %v174 = vsel %vm168, %v173, %v172
    %vm175 = vcmp.lt.s32.totalorder %v41, 0
    %v176 = vsub.s32 0, %v41
    %v177 = vsel %vm175, %v176, %v41
    %v178 = vshrl.u32 %v177, 4
    %v179 = vand.u32 %v177, 15
    %v180 = vsub.s32 0, %v179
    %v181 = vsel %vm175, %v180, %v179
    %vm182 = vcmp.lt.s32.totalorder %v42, 0
    %v183 = vsub.s32 0, %v42
    %v184 = vsel %vm182, %v183, %v42
    %v185 = vshrl.u32 %v184, 4
    %v186 = vand.u32 %v184, 15
    %v187 = vsub.s32 0, %v186
    %v188 = vsel %vm182, %v187, %v186
    %vm189 = vcmp.lt.s32.totalorder %v43, 0
    %v190 = vsub.s32 0, %v43
    %v191 = vsel %vm189, %v190, %v43
    %v192 = vshrl.u32 %v191, 4
    %v193 = vand.u32 %v191, 15
    %v194 = vsub.s32 0, %v193
    %v195 = vsel %vm189, %v194, %v193
    %vm196 = vcmp.lt.s32.totalorder %v44, 0
    %v197 = vsub.s32 0, %v44
    %v198 = vsel %vm196, %v197, %v44
    %v199 = vshrl.u32 %v198, 4
    %v200 = vand.u32 %v198, 15
    %v201 = vsub.s32 0, %v200
    %v202 = vsel %vm196, %v201, %v200
    %vm203 = vcmp.lt.s32.totalorder %v45, 0
    %v204 = vsub.s32 0, %v45
    %v205 = vsel %vm203, %v204, %v45
    %v206 = vshrl.u32 %v205, 4
    %v207 = vand.u32 %v205, 15
    %v208 = vsub.s32 0, %v207
    %v209 = vsel %vm203, %v208, %v207
    %vm210 = vcmp.lt.s32.totalorder %v46, 0
    %v211 = vsub.s32 0, %v46
    %v212 = vsel %vm210, %v211, %v46
    %v213 = vshrl.u32 %v212, 4
    %v214 = vand.u32 %v212, 15
    %v215 = vsub.s32 0, %v214
    %v216 = vsel %vm210, %v215, %v214
    %vm217 = vcmp.lt.s32.totalorder %v47, 0
    %v218 = vsub.s32 0, %v47
    %v219 = vsel %vm217, %v218, %v47
    %v220 = vshrl.u32 %v219, 4
    %v221 = vand.u32 %v219, 15
    %v222 = vsub.s32 0, %v221
    %v223 = vsel %vm217, %v222, %v221
    %vm224 = vcmp.lt.s32.totalorder %v48, 0
    %v225 = vsub.s32 0, %v48
    %v226 = vsel %vm224, %v225, %v48
    %v227 = vshrl.u32 %v226, 4
    %v228 = vand.u32 %v226, 15
    %v229 = vsub.s32 0, %v228
    %v230 = vsel %vm224, %v229, %v228
    %vm231 = vcmp.lt.s32.totalorder %v49, 0
    %v232 = vsub.s32 0, %v49
    %v233 = vsel %vm231, %v232, %v49
    %v234 = vshrl.u32 %v233, 4
    %v235 = vand.u32 %v233, 15
    %v236 = vsub.s32 0, %v235
    %v237 = vsel %vm231, %v236, %v235
    %vm238 = vcmp.lt.s32.totalorder %v50, 0
    %v239 = vsub.s32 0, %v50
    %v240 = vsel %vm238, %v239, %v50
    %v241 = vshrl.u32 %v240, 4
    %v242 = vand.u32 %v240, 15
    %v243 = vsub.s32 0, %v242
    %v244 = vsel %vm238, %v243, %v242
    %vm245 = vcmp.lt.s32.totalorder %v51, 0
    %v246 = vsub.s32 0, %v51
    %v247 = vsel %vm245, %v246, %v51
    %v248 = vshrl.u32 %v247, 4
    %v249 = vand.u32 %v247, 15
    %v250 = vsub.s32 0, %v249
    %v251 = vsel %vm245, %v250, %v249
    %vm252 = vcmp.lt.s32.totalorder %v52, 0
    %v253 = vsub.s32 0, %v52
    %v254 = vsel %vm252, %v253, %v52
    %v255 = vshrl.u32 %v254, 4
    %v256 = vand.u32 %v254, 15
    %v257 = vsub.s32 0, %v256
    %v258 = vsel %vm252, %v257, %v256
    %vm259 = vcmp.lt.s32.totalorder %v53, 0
    %v260 = vsub.s32 0, %v53
    %v261 = vsel %vm259, %v260, %v53
    %v262 = vshrl.u32 %v261, 4
    %v263 = vand.u32 %v261, 15
    %v264 = vsub.s32 0, %v263
    %v265 = vsel %vm259, %v264, %v263
    %vm266 = vcmp.lt.s32.totalorder %v54, 0
    %v267 = vsub.s32 0, %v54
    %v268 = vsel %vm266, %v267, %v54
    %v269 = vshrl.u32 %v268, 4
    %v270 = vand.u32 %v268, 15
    %v271 = vsub.s32 0, %v270
    %v272 = vsel %vm266, %v271, %v270
    %vm273 = vcmp.lt.s32.totalorder %v55, 0
    %v274 = vsub.s32 0, %v55
    %v275 = vsel %vm273, %v274, %v55
    %v276 = vshrl.u32 %v275, 4
    %v277 = vand.u32 %v275, 15
    %v278 = vsub.s32 0, %v277
    %v279 = vsel %vm273, %v278, %v277
    %vm280 = vcmp.ne.s32.totalorder %v62, 0
    %vm281 = vcmp.ne.s32.totalorder %v69, 0
    %vm282 = vcmp.ne.s32.totalorder %v76, 0
    %vm283 = vcmp.ne.s32.totalorder %v83, 0
    %vm284 = vcmp.ne.s32.totalorder %v90, 0
    %vm285 = vcmp.ne.s32.totalorder %v97, 0
    %vm286 = vcmp.ne.s32.totalorder %v104, 0
    %vm287 = vcmp.ne.s32.totalorder %v111, 0
    %vm288 = vcmp.ne.s32.totalorder %v118, 0
    %vm289 = vcmp.ne.s32.totalorder %v125, 0
    %vm290 = vcmp.ne.s32.totalorder %v132, 0
    %vm291 = vcmp.ne.s32.totalorder %v139, 0
    %vm292 = vcmp.ne.s32.totalorder %v146, 0
    %vm293 = vcmp.ne.s32.totalorder %v153, 0
    %vm294 = vcmp.ne.s32.totalorder %v160, 0
    %vm295 = vcmp.ne.s32.totalorder %v167, 0
    %vm296 = vcmp.ne.s32.totalorder %v174, 0
    %vm297 = vcmp.ne.s32.totalorder %v181, 0
    %vm298 = vcmp.ne.s32.totalorder %v188, 0
    %vm299 = vcmp.ne.s32.totalorder %v195, 0
    %vm300 = vcmp.ne.s32.totalorder %v202, 0
    %vm301 = vcmp.ne.s32.totalorder %v209, 0
    %vm302 = vcmp.ne.s32.totalorder %v216, 0
    %vm303 = vcmp.ne.s32.totalorder %v223, 0
    %vm304 = vcmp.ne.s32.totalorder %v230, 0
    %vm305 = vcmp.ne.s32.totalorder %v237, 0
    %vm306 = vcmp.ne.s32.totalorder %v244, 0
    %vm307 = vcmp.ne.s32.totalorder %v251, 0
    %vm308 = vcmp.ne.s32.totalorder %v258, 0
    %vm309 = vcmp.ne.s32.totalorder %v265, 0
    %vm310 = vcmp.ne.s32.totalorder %v272, 0
    %vm311 = vcmp.ne.s32.totalorder %v279, 0
    %vm312 = vcmp.lt.s32.totalorder %v62, 0
    %vm313 = vcmp.lt.s32.totalorder %v69, 0
    %vm314 = vcmp.lt.s32.totalorder %v76, 0
    %vm315 = vcmp.lt.s32.totalorder %v83, 0
    %vm316 = vcmp.lt.s32.totalorder %v90, 0
    %vm317 = vcmp.lt.s32.totalorder %v97, 0
    %vm318 = vcmp.lt.s32.totalorder %v104, 0
    %vm319 = vcmp.lt.s32.totalorder %v111, 0
    %vm320 = vcmp.lt.s32.totalorder %v118, 0
    %vm321 = vcmp.lt.s32.totalorder %v125, 0
    %vm322 = vcmp.lt.s32.totalorder %v132, 0
    %vm323 = vcmp.lt.s32.totalorder %v139, 0
    %vm324 = vcmp.lt.s32.totalorder %v146, 0
    %vm325 = vcmp.lt.s32.totalorder %v153, 0
    %vm326 = vcmp.lt.s32.totalorder %v160, 0
    %vm327 = vcmp.lt.s32.totalorder %v167, 0
    %vm328 = vcmp.lt.s32.totalorder %v174, 0
    %vm329 = vcmp.lt.s32.totalorder %v181, 0
    %vm330 = vcmp.lt.s32.totalorder %v188, 0
    %vm331 = vcmp.lt.s32.totalorder %v195, 0
    %vm332 = vcmp.lt.s32.totalorder %v202, 0
    %vm333 = vcmp.lt.s32.totalorder %v209, 0
    %vm334 = vcmp.lt.s32.totalorder %v216, 0
    %vm335 = vcmp.lt.s32.totalorder %v223, 0
    %vm336 = vcmp.lt.s32.totalorder %v230, 0
    %vm337 = vcmp.lt.s32.totalorder %v237, 0
    %vm338 = vcmp.lt.s32.totalorder %v244, 0
    %vm339 = vcmp.lt.s32.totalorder %v251, 0
    %vm340 = vcmp.lt.s32.totalorder %v258, 0
    %vm341 = vcmp.lt.s32.totalorder %v265, 0
    %vm342 = vcmp.lt.s32.totalorder %v272, 0
    %vm343 = vcmp.lt.s32.totalorder %v279, 0
    %vm344 = vmand %vm312, %vm280
    %vm345 = vmand %vm313, %vm281
    %vm346 = vmand %vm314, %vm282
    %vm347 = vmand %vm315, %vm283
    %vm348 = vmand %vm316, %vm284
    %vm349 = vmand %vm317, %vm285
    %vm350 = vmand %vm318, %vm286
    %vm351 = vmand %vm319, %vm287
    %vm352 = vmand %vm320, %vm288
    %vm353 = vmand %vm321, %vm289
    %vm354 = vmand %vm322, %vm290
    %vm355 = vmand %vm323, %vm291
    %vm356 = vmand %vm324, %vm292
    %vm357 = vmand %vm325, %vm293
    %vm358 = vmand %vm326, %vm294
    %vm359 = vmand %vm327, %vm295
    %vm360 = vmand %vm328, %vm296
    %vm361 = vmand %vm329, %vm297
    %vm362 = vmand %vm330, %vm298
    %vm363 = vmand %vm331, %vm299
    %vm364 = vmand %vm332, %vm300
    %vm365 = vmand %vm333, %vm301
    %vm366 = vmand %vm334, %vm302
    %vm367 = vmand %vm335, %vm303
    %vm368 = vmand %vm336, %vm304
    %vm369 = vmand %vm337, %vm305
    %vm370 = vmand %vm338, %vm306
    %vm371 = vmand %vm339, %vm307
    %vm372 = vmand %vm340, %vm308
    %vm373 = vmand %vm341, %vm309
    %vm374 = vmand %vm342, %vm310
    %vm375 = vmand %vm343, %vm311
    %v376 = vadd.s32 %v62, 16
    %v377 = vadd.s32 %v69, 16
    %v378 = vadd.s32 %v76, 16
    %v379 = vadd.s32 %v83, 16
    %v380 = vadd.s32 %v90, 16
    %v381 = vadd.s32 %v97, 16
    %v382 = vadd.s32 %v104, 16
    %v383 = vadd.s32 %v111, 16
    %v384 = vadd.s32 %v118, 16
    %v385 = vadd.s32 %v125, 16
    %v386 = vadd.s32 %v132, 16
    %v387 = vadd.s32 %v139, 16
    %v388 = vadd.s32 %v146, 16
    %v389 = vadd.s32 %v153, 16
    %v390 = vadd.s32 %v160, 16
    %v391 = vadd.s32 %v167, 16
    %v392 = vadd.s32 %v174, 16
    %v393 = vadd.s32 %v181, 16
    %v394 = vadd.s32 %v188, 16
    %v395 = vadd.s32 %v195, 16
    %v396 = vadd.s32 %v202, 16
    %v397 = vadd.s32 %v209, 16
    %v398 = vadd.s32 %v216, 16
    %v399 = vadd.s32 %v223, 16
    %v400 = vadd.s32 %v230, 16
    %v401 = vadd.s32 %v237, 16
    %v402 = vadd.s32 %v244, 16
    %v403 = vadd.s32 %v251, 16
    %v404 = vadd.s32 %v258, 16
    %v405 = vadd.s32 %v265, 16
    %v406 = vadd.s32 %v272, 16
    %v407 = vadd.s32 %v279, 16
    %v408 = vsel %vm344, %v376, %v62
    %v409 = vsel %vm345, %v377, %v69
    %v410 = vsel %vm346, %v378, %v76
    %v411 = vsel %vm347, %v379, %v83
    %v412 = vsel %vm348, %v380, %v90
    %v413 = vsel %vm349, %v381, %v97
    %v414 = vsel %vm350, %v382, %v104
    %v415 = vsel %vm351, %v383, %v111
    %v416 = vsel %vm352, %v384, %v118
    %v417 = vsel %vm353, %v385, %v125
    %v418 = vsel %vm354, %v386, %v132
    %v419 = vsel %vm355, %v387, %v139
    %v420 = vsel %vm356, %v388, %v146
    %v421 = vsel %vm357, %v389, %v153
    %v422 = vsel %vm358, %v390, %v160
    %v423 = vsel %vm359, %v391, %v167
    %v424 = vsel %vm360, %v392, %v174
    %v425 = vsel %vm361, %v393, %v181
    %v426 = vsel %vm362, %v394, %v188
    %v427 = vsel %vm363, %v395, %v195
    %v428 = vsel %vm364, %v396, %v202
    %v429 = vsel %vm365, %v397, %v209
    %v430 = vsel %vm366, %v398, %v216
    %v431 = vsel %vm367, %v399, %v223
    %v432 = vsel %vm368, %v400, %v230
    %v433 = vsel %vm369, %v401, %v237
    %v434 = vsel %vm370, %v402, %v244
    %v435 = vsel %vm371, %v403, %v251
    %v436 = vsel %vm372, %v404, %v258
    %v437 = vsel %vm373, %v405, %v265
    %v438 = vsel %vm374, %v406, %v272
    %v439 = vsel %vm375, %v407, %v279
    %vm440 = vcmp.ge.s32.totalorder %v408, 1
    %vm441 = vcmp.ge.s32.totalorder %v409, 1
    %vm442 = vcmp.ge.s32.totalorder %v410, 1
    %vm443 = vcmp.ge.s32.totalorder %v411, 1
    %vm444 = vcmp.ge.s32.totalorder %v412, 1
    %vm445 = vcmp.ge.s32.totalorder %v413, 1
    %vm446 = vcmp.ge.s32.totalorder %v414, 1
    %vm447 = vcmp.ge.s32.totalorder %v415, 1
    %vm448 = vcmp.ge.s32.totalorder %v416, 1
    %vm449 = vcmp.ge.s32.totalorder %v417, 1
    %vm450 = vcmp.ge.s32.totalorder %v418, 1
    %vm451 = vcmp.ge.s32.totalorder %v419, 1
    %vm452 = vcmp.ge.s32.totalorder %v420, 1
    %vm453 = vcmp.ge.s32.totalorder %v421, 1
    %vm454 = vcmp.ge.s32.totalorder %v422, 1
    %vm455 = vcmp.ge.s32.totalorder %v423, 1
    %vm456 = vcmp.ge.s32.totalorder %v424, 1
    %vm457 = vcmp.ge.s32.totalorder %v425, 1
    %vm458 = vcmp.ge.s32.totalorder %v426, 1
    %vm459 = vcmp.ge.s32.totalorder %v427, 1
    %vm460 = vcmp.ge.s32.totalorder %v428, 1
    %vm461 = vcmp.ge.s32.totalorder %v429, 1
    %vm462 = vcmp.ge.s32.totalorder %v430, 1
    %vm463 = vcmp.ge.s32.totalorder %v431, 1
    %vm464 = vcmp.ge.s32.totalorder %v432, 1
    %vm465 = vcmp.ge.s32.totalorder %v433, 1
    %vm466 = vcmp.ge.s32.totalorder %v434, 1
    %vm467 = vcmp.ge.s32.totalorder %v435, 1
    %vm468 = vcmp.ge.s32.totalorder %v436, 1
    %vm469 = vcmp.ge.s32.totalorder %v437, 1
    %vm470 = vcmp.ge.s32.totalorder %v438, 1
    %vm471 = vcmp.ge.s32.totalorder %v439, 1
    %vm472 = vcmp.le.s32.totalorder %v408, 14
    %vm473 = vcmp.le.s32.totalorder %v409, 14
    %vm474 = vcmp.le.s32.totalorder %v410, 14
    %vm475 = vcmp.le.s32.totalorder %v411, 14
    %vm476 = vcmp.le.s32.totalorder %v412, 14
    %vm477 = vcmp.le.s32.totalorder %v413, 14
    %vm478 = vcmp.le.s32.totalorder %v414, 14
    %vm479 = vcmp.le.s32.totalorder %v415, 14
    %vm480 = vcmp.le.s32.totalorder %v416, 14
    %vm481 = vcmp.le.s32.totalorder %v417, 14
    %vm482 = vcmp.le.s32.totalorder %v418, 14
    %vm483 = vcmp.le.s32.totalorder %v419, 14
    %vm484 = vcmp.le.s32.totalorder %v420, 14
    %vm485 = vcmp.le.s32.totalorder %v421, 14
    %vm486 = vcmp.le.s32.totalorder %v422, 14
    %vm487 = vcmp.le.s32.totalorder %v423, 14
    %vm488 = vcmp.le.s32.totalorder %v424, 14
    %vm489 = vcmp.le.s32.totalorder %v425, 14
    %vm490 = vcmp.le.s32.totalorder %v426, 14
    %vm491 = vcmp.le.s32.totalorder %v427, 14
    %vm492 = vcmp.le.s32.totalorder %v428, 14
    %vm493 = vcmp.le.s32.totalorder %v429, 14
    %vm494 = vcmp.le.s32.totalorder %v430, 14
    %vm495 = vcmp.le.s32.totalorder %v431, 14
    %vm496 = vcmp.le.s32.totalorder %v432, 14
    %vm497 = vcmp.le.s32.totalorder %v433, 14
    %vm498 = vcmp.le.s32.totalorder %v434, 14
    %vm499 = vcmp.le.s32.totalorder %v435, 14
    %vm500 = vcmp.le.s32.totalorder %v436, 14
    %vm501 = vcmp.le.s32.totalorder %v437, 14
    %vm502 = vcmp.le.s32.totalorder %v438, 14
    %vm503 = vcmp.le.s32.totalorder %v439, 14
    %v504 = vld [vmem:[%s2] sm:$0xff]
    %v505 = vld [vmem:[%s0] sm:$0xff]
    %v506 = vld [vmem:[%s0 + $0x8] sm:$0xff]
    %v507 = vld [vmem:[%s0 + $0x10] sm:$0xff]
    %v508 = vld [vmem:[%s0 + $0x18] sm:$0xff]
    %v509 = vld [vmem:[%s0 + $0x20] sm:$0xff]
    %v510 = vld [vmem:[%s0 + $0x28] sm:$0xff]
    %v511 = vld [vmem:[%s0 + $0x30] sm:$0xff]
    %v512 = vld [vmem:[%s0 + $0x38] sm:$0xff]
    %v513 = vld [vmem:[%s0 + $0x40] sm:$0xff]
    %v514 = vld [vmem:[%s0 + $0x48] sm:$0xff]
    %v515 = vld [vmem:[%s0 + $0x50] sm:$0xff]
    %v516 = vld [vmem:[%s0 + $0x58] sm:$0xff]
    %v517 = vld [vmem:[%s0 + $0x60] sm:$0xff]
    %v518 = vld [vmem:[%s0 + $0x68] sm:$0xff]
    %v519 = vld [vmem:[%s0 + $0x70] sm:$0xff]
    %v520 = vld [vmem:[%s0 + $0x78] sm:$0xff]
    %v521 = vld [vmem:[%s0 + $0x80] sm:$0xff]
    %v522 = vld [vmem:[%s0 + $0x88] sm:$0xff]
    %v523 = vld [vmem:[%s0 + $0x90] sm:$0xff]
    %v524 = vld [vmem:[%s0 + $0x98] sm:$0xff]
    %v525 = vld [vmem:[%s0 + $0xa0] sm:$0xff]
    %v526 = vld [vmem:[%s0 + $0xa8] sm:$0xff]
    %v527 = vld [vmem:[%s0 + $0xb0] sm:$0xff]
    %v528 = vld [vmem:[%s0 + $0xb8] sm:$0xff]
    %v529 = vld [vmem:[%s0 + $0xc0] sm:$0xff]
    %v530 = vld [vmem:[%s0 + $0xc8] sm:$0xff]
    %v531 = vld [vmem:[%s0 + $0xd0] sm:$0xff]
    %v532 = vld [vmem:[%s0 + $0xd8] sm:$0xff]
    %v533 = vld [vmem:[%s0 + $0xe0] sm:$0xff]
    %v534 = vld [vmem:[%s0 + $0xe8] sm:$0xff]
    %v535 = vld [vmem:[%s0 + $0xf0] sm:$0xff]
    %v536 = vld [vmem:[%s0 + $0xf8] sm:$0xff]
    %v537 = vpack.c.bf16 %v506, %v505
    %v538 = vpack.c.bf16 %v508, %v507
    %v539 = vpack.c.bf16 %v510, %v509
    %v540 = vpack.c.bf16 %v512, %v511
    %v541 = vpack.c.bf16 %v514, %v513
    %v542 = vpack.c.bf16 %v516, %v515
    %v543 = vpack.c.bf16 %v518, %v517
    %v544 = vpack.c.bf16 %v520, %v519
    %v545 = vpack.c.bf16 %v522, %v521
    %v546 = vpack.c.bf16 %v524, %v523
    %v547 = vpack.c.bf16 %v526, %v525
    %v548 = vpack.c.bf16 %v528, %v527
    %v549 = vpack.c.bf16 %v530, %v529
    %v550 = vpack.c.bf16 %v532, %v531
    %v551 = vpack.c.bf16 %v534, %v533
    %v552 = vpack.c.bf16 %v536, %v535
    %v553 = vld [vmem:[%s1] sm:$0xf]
    %v554 = vld [vmem:[%s1 + $0x4] sm:$0xf]
    %v555 = vld [vmem:[%s1 + $0x8] sm:$0xf]
    %v556 = vld [vmem:[%s1 + $0xc] sm:$0xf]
    %v561 = vunpack.c.l.b16 %v553
    %v562 = vunpack.c.l.b16 %v554
    %v563 = vunpack.c.l.b16 %v555
    %v564 = vunpack.c.l.b16 %v556
    %v565 = vpack.c.b16 %v562, %v561
    %v566 = vpack.c.b16 %v564, %v563
    %vm569 = vcmask 261120
    %v571 = vsel %vm569, %v537, 0
    %v574 = vsel %vm569, %v538, 0
    %v577 = vsel %vm569, %v539, 0
    %v580 = vsel %vm569, %v540, 0
    %v583 = vsel %vm569, %v541, 0
    %v586 = vsel %vm569, %v542, 0
    %v589 = vsel %vm569, %v543, 0
    %v592 = vsel %vm569, %v544, 0
    %v595 = vsel %vm569, %v545, 0
    %v598 = vsel %vm569, %v546, 0
    %v601 = vsel %vm569, %v547, 0
    %v604 = vsel %vm569, %v548, 0
    %v607 = vsel %vm569, %v549, 0
    %v610 = vsel %vm569, %v550, 0
    %v613 = vsel %vm569, %v551, 0
    %v616 = vsel %vm569, %v552, 0
    %618 = vmatprep.subr.bf16.mxu0 0
    %619 = vmatpush1.bf16.msra.mxu0 %v565
    %620 = vmatprep.subr.bf16.mxu0 0
    %621 = vmatpush1.bf16.msra.mxu0 %v566
    %622 = vmatprep.subr.bf16.mxu0 0
    %623 = vmatpush1.bf16.msra.mxu0 0
    %624 = vmatprep.subr.bf16.mxu0 0
    %625 = vmatpush1.bf16.msra.mxu0 0
    %626 = vmatprep.subr.bf16.mxu0 0
    %627 = vmatpush1.bf16.msra.mxu0 0
    %628 = vmatprep.subr.bf16.mxu0 0
    %629 = vmatpush1.bf16.msra.mxu0 0
    %630 = vmatprep.subr.bf16.mxu0 0
    %631 = vmatpush1.bf16.msra.mxu0 0
    %632 = vmatprep.subr.bf16.mxu0 0
    %633 = vmatpush1.bf16.msra.mxu0 0
    %634 = vmatprep.subr.bf16.mxu0 0
    %635 = vmatpush1.bf16.msra.mxu0 0
    %636 = vmatprep.subr.bf16.mxu0 0
    %637 = vmatpush1.bf16.msra.mxu0 0
    %638 = vmatprep.subr.bf16.mxu0 0
    %639 = vmatpush1.bf16.msra.mxu0 0
    %640 = vmatprep.subr.bf16.mxu0 0
    %641 = vmatpush1.bf16.msra.mxu0 0
    %642 = vmatprep.subr.bf16.mxu0 0
    %643 = vmatpush1.bf16.msra.mxu0 0
    %644 = vmatprep.subr.bf16.mxu0 0
    %645 = vmatpush1.bf16.msra.mxu0 0
    %646 = vmatprep.subr.bf16.mxu0 0
    %647 = vmatpush1.bf16.msra.mxu0 0
    %648 = vmatprep.subr.bf16.mxu0 0
    %649 = vmatpush1.bf16.msra.mxu0 0
    %650 = vmatprep.mubr.bf16.mxu0 0
    %651 = vmatmul.mubr.bf16.gmra.mrb[0].mxu0 %v571
    %v652 = vpop.f32.mrb[0].mxu0
    %v653 = vadd.f32 0.0, %v652
    %v654 = vpop.f32.mrb[0].mxu0
    %v655 = vpop.f32.mrb[0].mxu0
    %v656 = vadd.f32 0.0, %v655
    %v657 = vpop.f32.mrb[0].mxu0
    %658 = vmatprep.mubr.bf16.mxu0 0
    %659 = vmatmul.mubr.bf16.gmra.mrb[0].mxu0 %v574
    %v660 = vpop.f32.mrb[0].mxu0
    %v661 = vadd.f32 0.0, %v660
    %v662 = vpop.f32.mrb[0].mxu0
    %v663 = vpop.f32.mrb[0].mxu0
    %v664 = vadd.f32 0.0, %v663
    %v665 = vpop.f32.mrb[0].mxu0
    %666 = vmatprep.mubr.bf16.mxu0 0
    %667 = vmatmul.mubr.bf16.gmra.mrb[0].mxu0 %v577
    %v668 = vpop.f32.mrb[0].mxu0
    %v669 = vadd.f32 0.0, %v668
    %v670 = vpop.f32.mrb[0].mxu0
    %v671 = vpop.f32.mrb[0].mxu0
    %v672 = vadd.f32 0.0, %v671
    %v673 = vpop.f32.mrb[0].mxu0
    %674 = vmatprep.mubr.bf16.mxu0 0
    %675 = vmatmul.mubr.bf16.gmra.mrb[0].mxu0 %v580
    %v676 = vpop.f32.mrb[0].mxu0
    %v677 = vadd.f32 0.0, %v676
    %v678 = vpop.f32.mrb[0].mxu0
    %v679 = vpop.f32.mrb[0].mxu0
    %v680 = vadd.f32 0.0, %v679
    %v681 = vpop.f32.mrb[0].mxu0
    %682 = vmatprep.mubr.bf16.mxu0 0
    %683 = vmatmul.mubr.bf16.gmra.mrb[0].mxu0 %v583
    %v684 = vpop.f32.mrb[0].mxu0
    %v685 = vadd.f32 0.0, %v684
    %v686 = vpop.f32.mrb[0].mxu0
    %v687 = vpop.f32.mrb[0].mxu0
    %v688 = vadd.f32 0.0, %v687
    %v689 = vpop.f32.mrb[0].mxu0
    %690 = vmatprep.mubr.bf16.mxu0 0
    %691 = vmatmul.mubr.bf16.gmra.mrb[0].mxu0 %v586
    %v692 = vpop.f32.mrb[0].mxu0
    %v693 = vadd.f32 0.0, %v692
    %v694 = vpop.f32.mrb[0].mxu0
    %v695 = vpop.f32.mrb[0].mxu0
    %v696 = vadd.f32 0.0, %v695
    %v697 = vpop.f32.mrb[0].mxu0
    %698 = vmatprep.mubr.bf16.mxu0 0
    %699 = vmatmul.mubr.bf16.gmra.mrb[0].mxu0 %v589
    %v700 = vpop.f32.mrb[0].mxu0
    %v701 = vadd.f32 0.0, %v700
    %v702 = vpop.f32.mrb[0].mxu0
    %v703 = vpop.f32.mrb[0].mxu0
    %v704 = vadd.f32 0.0, %v703
    %v705 = vpop.f32.mrb[0].mxu0
    %706 = vmatprep.mubr.bf16.mxu0 0
    %707 = vmatmul.mubr.bf16.gmra.mrb[0].mxu0 %v592
    %v708 = vpop.f32.mrb[0].mxu0
    %v709 = vadd.f32 0.0, %v708
    %v710 = vpop.f32.mrb[0].mxu0
    %v711 = vpop.f32.mrb[0].mxu0
    %v712 = vadd.f32 0.0, %v711
    %v713 = vpop.f32.mrb[0].mxu0
    %714 = vmatprep.mubr.bf16.mxu0 0
    %715 = vmatmul.mubr.bf16.gmra.mrb[0].mxu0 %v595
    %v716 = vpop.f32.mrb[0].mxu0
    %v717 = vadd.f32 0.0, %v716
    %v718 = vpop.f32.mrb[0].mxu0
    %v719 = vpop.f32.mrb[0].mxu0
    %v720 = vadd.f32 0.0, %v719
    %v721 = vpop.f32.mrb[0].mxu0
    %722 = vmatprep.mubr.bf16.mxu0 0
    %723 = vmatmul.mubr.bf16.gmra.mrb[0].mxu0 %v598
    %v724 = vpop.f32.mrb[0].mxu0
    %v725 = vadd.f32 0.0, %v724
    %v726 = vpop.f32.mrb[0].mxu0
    %v727 = vpop.f32.mrb[0].mxu0
    %v728 = vadd.f32 0.0, %v727
    %v729 = vpop.f32.mrb[0].mxu0
    %730 = vmatprep.mubr.bf16.mxu0 0
    %731 = vmatmul.mubr.bf16.gmra.mrb[0].mxu0 %v601
    %v732 = vpop.f32.mrb[0].mxu0
    %v733 = vadd.f32 0.0, %v732
    %v734 = vpop.f32.mrb[0].mxu0
    %v735 = vpop.f32.mrb[0].mxu0
    %v736 = vadd.f32 0.0, %v735
    %v737 = vpop.f32.mrb[0].mxu0
    %738 = vmatprep.mubr.bf16.mxu0 0
    %739 = vmatmul.mubr.bf16.gmra.mrb[0].mxu0 %v604
    %v740 = vpop.f32.mrb[0].mxu0
    %v741 = vadd.f32 0.0, %v740
    %v742 = vpop.f32.mrb[0].mxu0
    %v743 = vpop.f32.mrb[0].mxu0
    %v744 = vadd.f32 0.0, %v743
    %v745 = vpop.f32.mrb[0].mxu0
    %746 = vmatprep.mubr.bf16.mxu0 0
    %747 = vmatmul.mubr.bf16.gmra.mrb[0].mxu0 %v607
    %v748 = vpop.f32.mrb[0].mxu0
    %v749 = vadd.f32 0.0, %v748
    %v750 = vpop.f32.mrb[0].mxu0
    %v751 = vpop.f32.mrb[0].mxu0
    %v752 = vadd.f32 0.0, %v751
    %v753 = vpop.f32.mrb[0].mxu0
    %754 = vmatprep.mubr.bf16.mxu0 0
    %755 = vmatmul.mubr.bf16.gmra.mrb[0].mxu0 %v610
    %v756 = vpop.f32.mrb[0].mxu0
    %v757 = vadd.f32 0.0, %v756
    %v758 = vpop.f32.mrb[0].mxu0
    %v759 = vpop.f32.mrb[0].mxu0
    %v760 = vadd.f32 0.0, %v759
    %v761 = vpop.f32.mrb[0].mxu0
    %762 = vmatprep.mubr.bf16.mxu0 0
    %763 = vmatmul.mubr.bf16.gmra.mrb[0].mxu0 %v613
    %v764 = vpop.f32.mrb[0].mxu0
    %v765 = vadd.f32 0.0, %v764
    %v766 = vpop.f32.mrb[0].mxu0
    %v767 = vpop.f32.mrb[0].mxu0
    %v768 = vadd.f32 0.0, %v767
    %v769 = vpop.f32.mrb[0].mxu0
    %770 = vmatprep.mubr.bf16.mxu0 0
    %771 = vmatmul.mubr.bf16.gmra.mrb[0].mxu0 %v616
    %v772 = vpop.f32.mrb[0].mxu0
    %v773 = vadd.f32 0.0, %v772
    %v774 = vpop.f32.mrb[0].mxu0
    %v775 = vpop.f32.mrb[0].mxu0
    %v776 = vadd.f32 0.0, %v775
    %v777 = vpop.f32.mrb[0].mxu0
    %778 = vdwg.mxu0
    %v779 = vmul.f32 %v653, %v653
    %v780 = vmul.f32 %v656, %v656
    %v781 = vmul.f32 %v661, %v661
    %v782 = vmul.f32 %v664, %v664
    %v783 = vmul.f32 %v669, %v669
    %v784 = vmul.f32 %v672, %v672
    %v785 = vmul.f32 %v677, %v677
    %v786 = vmul.f32 %v680, %v680
    %v787 = vmul.f32 %v685, %v685
    %v788 = vmul.f32 %v688, %v688
    %v789 = vmul.f32 %v693, %v693
    %v790 = vmul.f32 %v696, %v696
    %v791 = vmul.f32 %v701, %v701
    %v792 = vmul.f32 %v704, %v704
    %v793 = vmul.f32 %v709, %v709
    %v794 = vmul.f32 %v712, %v712
    %v795 = vmul.f32 %v717, %v717
    %v796 = vmul.f32 %v720, %v720
    %v797 = vmul.f32 %v725, %v725
    %v798 = vmul.f32 %v728, %v728
    %v799 = vmul.f32 %v733, %v733
    %v800 = vmul.f32 %v736, %v736
    %v801 = vmul.f32 %v741, %v741
    %v802 = vmul.f32 %v744, %v744
    %v803 = vmul.f32 %v749, %v749
    %v804 = vmul.f32 %v752, %v752
    %v805 = vmul.f32 %v757, %v757
    %v806 = vmul.f32 %v760, %v760
    %v807 = vmul.f32 %v765, %v765
    %v808 = vmul.f32 %v768, %v768
    %v809 = vmul.f32 %v773, %v773
    %v810 = vmul.f32 %v776, %v776
    %843 = vrot.lane.b32.xlu0 %v779, 16
    %v844 = vpop.permute.xlu0 %843
    %845 = vrot.lane.b32.xlu0 %v780, 16
    %v846 = vpop.permute.xlu0 %845
    %847 = vrot.lane.b32.xlu0 %v781, 16
    %v848 = vpop.permute.xlu0 %847
    %849 = vrot.lane.b32.xlu0 %v782, 16
    %v850 = vpop.permute.xlu0 %849
    %851 = vrot.lane.b32.xlu0 %v783, 16
    %v852 = vpop.permute.xlu0 %851
    %853 = vrot.lane.b32.xlu0 %v784, 16
    %v854 = vpop.permute.xlu0 %853
    %855 = vrot.lane.b32.xlu0 %v785, 16
    %v856 = vpop.permute.xlu0 %855
    %857 = vrot.lane.b32.xlu0 %v786, 16
    %v858 = vpop.permute.xlu0 %857
    %859 = vrot.lane.b32.xlu0 %v787, 16
    %v860 = vpop.permute.xlu0 %859
    %861 = vrot.lane.b32.xlu0 %v788, 16
    %v862 = vpop.permute.xlu0 %861
    %863 = vrot.lane.b32.xlu0 %v789, 16
    %v864 = vpop.permute.xlu0 %863
    %865 = vrot.lane.b32.xlu0 %v790, 16
    %v866 = vpop.permute.xlu0 %865
    %867 = vrot.lane.b32.xlu0 %v791, 16
    %v868 = vpop.permute.xlu0 %867
    %869 = vrot.lane.b32.xlu0 %v792, 16
    %v870 = vpop.permute.xlu0 %869
    %871 = vrot.lane.b32.xlu0 %v793, 16
    %v872 = vpop.permute.xlu0 %871
    %873 = vrot.lane.b32.xlu0 %v794, 16
    %v874 = vpop.permute.xlu0 %873
    %875 = vrot.lane.b32.xlu0 %v795, 16
    %v876 = vpop.permute.xlu0 %875
    %877 = vrot.lane.b32.xlu0 %v796, 16
    %v878 = vpop.permute.xlu0 %877
    %879 = vrot.lane.b32.xlu0 %v797, 16
    %v880 = vpop.permute.xlu0 %879
    %881 = vrot.lane.b32.xlu0 %v798, 16
    %v882 = vpop.permute.xlu0 %881
    %883 = vrot.lane.b32.xlu0 %v799, 16
    %v884 = vpop.permute.xlu0 %883
    %885 = vrot.lane.b32.xlu0 %v800, 16
    %v886 = vpop.permute.xlu0 %885
    %887 = vrot.lane.b32.xlu0 %v801, 16
    %v888 = vpop.permute.xlu0 %887
    %889 = vrot.lane.b32.xlu0 %v802, 16
    %v890 = vpop.permute.xlu0 %889
    %891 = vrot.lane.b32.xlu0 %v803, 16
    %v892 = vpop.permute.xlu0 %891
    %893 = vrot.lane.b32.xlu0 %v804, 16
    %v894 = vpop.permute.xlu0 %893
    %895 = vrot.lane.b32.xlu0 %v805, 16
    %v896 = vpop.permute.xlu0 %895
    %897 = vrot.lane.b32.xlu0 %v806, 16
    %v898 = vpop.permute.xlu0 %897
    %899 = vrot.lane.b32.xlu0 %v807, 16
    %v900 = vpop.permute.xlu0 %899
    %901 = vrot.lane.b32.xlu0 %v808, 16
    %v902 = vpop.permute.xlu0 %901
    %903 = vrot.lane.b32.xlu0 %v809, 16
    %v904 = vpop.permute.xlu0 %903
    %905 = vrot.lane.b32.xlu0 %v810, 16
    %v906 = vpop.permute.xlu0 %905
    %v939 = vsel %vm16, %v653, %v844
    %v940 = vsel %vm16, %v656, %v846
    %v941 = vsel %vm16, %v661, %v848
    %v942 = vsel %vm16, %v664, %v850
    %v943 = vsel %vm16, %v669, %v852
    %v944 = vsel %vm16, %v672, %v854
    %v945 = vsel %vm16, %v677, %v856
    %v946 = vsel %vm16, %v680, %v858
    %v947 = vsel %vm16, %v685, %v860
    %v948 = vsel %vm16, %v688, %v862
    %v949 = vsel %vm16, %v693, %v864
    %v950 = vsel %vm16, %v696, %v866
    %v951 = vsel %vm16, %v701, %v868
    %v952 = vsel %vm16, %v704, %v870
    %v953 = vsel %vm16, %v709, %v872
    %v954 = vsel %vm16, %v712, %v874
    %v955 = vsel %vm16, %v717, %v876
    %v956 = vsel %vm16, %v720, %v878
    %v957 = vsel %vm16, %v725, %v880
    %v958 = vsel %vm16, %v728, %v882
    %v959 = vsel %vm16, %v733, %v884
    %v960 = vsel %vm16, %v736, %v886
    %v961 = vsel %vm16, %v741, %v888
    %v962 = vsel %vm16, %v744, %v890
    %v963 = vsel %vm16, %v749, %v892
    %v964 = vsel %vm16, %v752, %v894
    %v965 = vsel %vm16, %v757, %v896
    %v966 = vsel %vm16, %v760, %v898
    %v967 = vsel %vm16, %v765, %v900
    %v968 = vsel %vm16, %v768, %v902
    %v969 = vsel %vm16, %v773, %v904
    %v970 = vsel %vm16, %v776, %v906
    %v971 = vsel %vm569, %v939, 0.0
    %v972 = vsel %vm569, %v940, 0.0
    %v973 = vadd.f32 %v971, %v972
    %v974 = vsel %vm569, %v941, 0.0
    %v975 = vadd.f32 %v973, %v974
    %v976 = vsel %vm569, %v942, 0.0
    %v977 = vadd.f32 %v975, %v976
    %v978 = vsel %vm569, %v943, 0.0
    %v979 = vadd.f32 %v977, %v978
    %v980 = vsel %vm569, %v944, 0.0
    %v981 = vadd.f32 %v979, %v980
    %v982 = vsel %vm569, %v945, 0.0
    %v983 = vadd.f32 %v981, %v982
    %v984 = vsel %vm569, %v946, 0.0
    %v985 = vadd.f32 %v983, %v984
    %v986 = vsel %vm569, %v947, 0.0
    %v987 = vadd.f32 %v985, %v986
    %v988 = vsel %vm569, %v948, 0.0
    %v989 = vadd.f32 %v987, %v988
    %v990 = vsel %vm569, %v949, 0.0
    %v991 = vadd.f32 %v989, %v990
    %v992 = vsel %vm569, %v950, 0.0
    %v993 = vadd.f32 %v991, %v992
    %v994 = vsel %vm569, %v951, 0.0
    %v995 = vadd.f32 %v993, %v994
    %v996 = vsel %vm569, %v952, 0.0
    %v997 = vadd.f32 %v995, %v996
    %v998 = vsel %vm569, %v953, 0.0
    %v999 = vadd.f32 %v997, %v998
    %v1000 = vsel %vm569, %v954, 0.0
    %v1001 = vadd.f32 %v999, %v1000
    %v1002 = vsel %vm569, %v955, 0.0
    %v1003 = vadd.f32 %v1001, %v1002
    %v1004 = vsel %vm569, %v956, 0.0
    %v1005 = vadd.f32 %v1003, %v1004
    %v1006 = vsel %vm569, %v957, 0.0
    %v1007 = vadd.f32 %v1005, %v1006
    %v1008 = vsel %vm569, %v958, 0.0
    %v1009 = vadd.f32 %v1007, %v1008
    %v1010 = vsel %vm569, %v959, 0.0
    %v1011 = vadd.f32 %v1009, %v1010
    %v1012 = vsel %vm569, %v960, 0.0
    %v1013 = vadd.f32 %v1011, %v1012
    %v1014 = vsel %vm569, %v961, 0.0
    %v1015 = vadd.f32 %v1013, %v1014
    %v1016 = vsel %vm569, %v962, 0.0
    %v1017 = vadd.f32 %v1015, %v1016
    %v1018 = vsel %vm569, %v963, 0.0
    %v1019 = vadd.f32 %v1017, %v1018
    %v1020 = vsel %vm569, %v964, 0.0
    %v1021 = vadd.f32 %v1019, %v1020
    %v1022 = vsel %vm569, %v965, 0.0
    %v1023 = vadd.f32 %v1021, %v1022
    %v1024 = vsel %vm569, %v966, 0.0
    %v1025 = vadd.f32 %v1023, %v1024
    %v1026 = vsel %vm569, %v967, 0.0
    %v1027 = vadd.f32 %v1025, %v1026
    %v1028 = vsel %vm569, %v968, 0.0
    %v1029 = vadd.f32 %v1027, %v1028
    %v1030 = vsel %vm569, %v969, 0.0
    %v1031 = vadd.f32 %v1029, %v1030
    %v1032 = vsel %vm569, %v970, 0.0
    %v1033 = vadd.f32 %v1031, %v1032
    %v1034 = vrot.slane %v1033, 4
    %v1035 = vadd.f32 %v1033, %v1034
    %v1036 = vrot.slane %v1035, 2
    %v1037 = vadd.f32 %v1035, %v1036
    %v1038 = vrot.slane %v1037, 1
    %v1039 = vadd.f32 %v1037, %v1038
    %v1040 = vmul.f32 %v1039, 0.00390625
    %v1041 = vmul.f32 %v1040, %v1040
    %1043 = vrot.lane.b32.xlu0 %v1041, 16
    %v1044 = vpop.permute.xlu0 %1043
    %v1046 = vsub.f32 %v1040, %v1044
    %v1047 = vmax.f32 %v1046, 0.0
    %v1048 = vadd.f32 %v1047, 1e-05
    %v1049 = vrsqrt.pop %v1048
    %1051 = vrot.lane.b32.xlu0 %v1049, 112
    %v1052 = vpop.permute.xlu0 %1051
    %v1054 = vmul.f32 %v504, %v1052
    %v1055 = vlaneseq
    %v1056 = vshrl.u32 %v1055, 7
    %v1057 = vsub.s32 0, %v1056
    %v1058 = vrot.slane %v1054, %v1057
    %v1059 = vmul.f32 %v653, %v1058
    %v1060 = vmul.f32 %v656, %v1058
    %v1061 = vmul.f32 %v661, %v1058
    %v1062 = vmul.f32 %v664, %v1058
    %v1063 = vmul.f32 %v669, %v1058
    %v1064 = vmul.f32 %v672, %v1058
    %v1065 = vmul.f32 %v677, %v1058
    %v1066 = vmul.f32 %v680, %v1058
    %v1067 = vmul.f32 %v685, %v1058
    %v1068 = vmul.f32 %v688, %v1058
    %v1069 = vmul.f32 %v693, %v1058
    %v1070 = vmul.f32 %v696, %v1058
    %v1071 = vmul.f32 %v701, %v1058
    %v1072 = vmul.f32 %v704, %v1058
    %v1073 = vmul.f32 %v709, %v1058
    %v1074 = vmul.f32 %v712, %v1058
    %v1075 = vmul.f32 %v717, %v1058
    %v1076 = vmul.f32 %v720, %v1058
    %v1077 = vmul.f32 %v725, %v1058
    %v1078 = vmul.f32 %v728, %v1058
    %v1079 = vmul.f32 %v733, %v1058
    %v1080 = vmul.f32 %v736, %v1058
    %v1081 = vmul.f32 %v741, %v1058
    %v1082 = vmul.f32 %v744, %v1058
    %v1083 = vmul.f32 %v749, %v1058
    %v1084 = vmul.f32 %v752, %v1058
    %v1085 = vmul.f32 %v757, %v1058
    %v1086 = vmul.f32 %v760, %v1058
    %v1087 = vmul.f32 %v765, %v1058
    %v1088 = vmul.f32 %v768, %v1058
    %v1089 = vmul.f32 %v773, %v1058
    %v1090 = vmul.f32 %v776, %v1058
    %v1091 = vmul.f32 %v1040, %v1054
    %v1093 = vrot.slane %v1091, 7
    %v1095 = vsub.f32 %v504, %v1093
    %v1096 = vlaneseq
    %v1097 = vshrl.u32 %v1096, 7
    %v1098 = vsub.s32 1, %v1097
    %v1099 = vrot.slane %v1095, %v1098
    %v1100 = vadd.f32 %v1059, %v1099
    %v1101 = vadd.f32 %v1060, %v1099
    %v1102 = vadd.f32 %v1061, %v1099
    %v1103 = vadd.f32 %v1062, %v1099
    %v1104 = vadd.f32 %v1063, %v1099
    %v1105 = vadd.f32 %v1064, %v1099
    %v1106 = vadd.f32 %v1065, %v1099
    %v1107 = vadd.f32 %v1066, %v1099
    %v1108 = vadd.f32 %v1067, %v1099
    %v1109 = vadd.f32 %v1068, %v1099
    %v1110 = vadd.f32 %v1069, %v1099
    %v1111 = vadd.f32 %v1070, %v1099
    %v1112 = vadd.f32 %v1071, %v1099
    %v1113 = vadd.f32 %v1072, %v1099
    %v1114 = vadd.f32 %v1073, %v1099
    %v1115 = vadd.f32 %v1074, %v1099
    %v1116 = vadd.f32 %v1075, %v1099
    %v1117 = vadd.f32 %v1076, %v1099
    %v1118 = vadd.f32 %v1077, %v1099
    %v1119 = vadd.f32 %v1078, %v1099
    %v1120 = vadd.f32 %v1079, %v1099
    %v1121 = vadd.f32 %v1080, %v1099
    %v1122 = vadd.f32 %v1081, %v1099
    %v1123 = vadd.f32 %v1082, %v1099
    %v1124 = vadd.f32 %v1083, %v1099
    %v1125 = vadd.f32 %v1084, %v1099
    %v1126 = vadd.f32 %v1085, %v1099
    %v1127 = vadd.f32 %v1086, %v1099
    %v1128 = vadd.f32 %v1087, %v1099
    %v1129 = vadd.f32 %v1088, %v1099
    %v1130 = vadd.f32 %v1089, %v1099
    %v1131 = vadd.f32 %v1090, %v1099
    %v1132 = vmax.f32 %v1100, 0.0
    %v1133 = vmax.f32 %v1101, 0.0
    %v1134 = vmax.f32 %v1102, 0.0
    %v1135 = vmax.f32 %v1103, 0.0
    %v1136 = vmax.f32 %v1104, 0.0
    %v1137 = vmax.f32 %v1105, 0.0
    %v1138 = vmax.f32 %v1106, 0.0
    %v1139 = vmax.f32 %v1107, 0.0
    %v1140 = vmax.f32 %v1108, 0.0
    %v1141 = vmax.f32 %v1109, 0.0
    %v1142 = vmax.f32 %v1110, 0.0
    %v1143 = vmax.f32 %v1111, 0.0
    %v1144 = vmax.f32 %v1112, 0.0
    %v1145 = vmax.f32 %v1113, 0.0
    %v1146 = vmax.f32 %v1114, 0.0
    %v1147 = vmax.f32 %v1115, 0.0
    %v1148 = vmax.f32 %v1116, 0.0
    %v1149 = vmax.f32 %v1117, 0.0
    %v1150 = vmax.f32 %v1118, 0.0
    %v1151 = vmax.f32 %v1119, 0.0
    %v1152 = vmax.f32 %v1120, 0.0
    %v1153 = vmax.f32 %v1121, 0.0
    %v1154 = vmax.f32 %v1122, 0.0
    %v1155 = vmax.f32 %v1123, 0.0
    %v1156 = vmax.f32 %v1124, 0.0
    %v1157 = vmax.f32 %v1125, 0.0
    %v1158 = vmax.f32 %v1126, 0.0
    %v1159 = vmax.f32 %v1127, 0.0
    %v1160 = vmax.f32 %v1128, 0.0
    %v1161 = vmax.f32 %v1129, 0.0
    %v1162 = vmax.f32 %v1130, 0.0
    %v1163 = vmax.f32 %v1131, 0.0
    %v1164 = vpack.c.bf16 %v1133, %v1132
    %v1165 = vpack.c.bf16 %v1135, %v1134
    %v1166 = vpack.c.bf16 %v1137, %v1136
    %v1167 = vpack.c.bf16 %v1139, %v1138
    %v1168 = vpack.c.bf16 %v1141, %v1140
    %v1169 = vpack.c.bf16 %v1143, %v1142
    %v1170 = vpack.c.bf16 %v1145, %v1144
    %v1171 = vpack.c.bf16 %v1147, %v1146
    %v1172 = vpack.c.bf16 %v1149, %v1148
    %v1173 = vpack.c.bf16 %v1151, %v1150
    %v1174 = vpack.c.bf16 %v1153, %v1152
    %v1175 = vpack.c.bf16 %v1155, %v1154
    %v1176 = vpack.c.bf16 %v1157, %v1156
    %v1177 = vpack.c.bf16 %v1159, %v1158
    %v1178 = vpack.c.bf16 %v1161, %v1160
    %v1179 = vpack.c.bf16 %v1163, %v1162
    %v1180 = vld [vmem:[%s1 + $0x10] sm:$0xf]
    %v1181 = vld [vmem:[%s1 + $0x14] sm:$0xf]
    %v1184 = vunpack.c.l.b16 %v1180
    %v1185 = vunpack.c.l.b16 %v1181
    %v1186 = vpack.c.b16 %v1185, %v1184
    %v1189 = vsel %vm16, %v1164, 0
    %v1192 = vsel %vm16, %v1165, 0
    %v1195 = vsel %vm16, %v1166, 0
    %v1198 = vsel %vm16, %v1167, 0
    %v1201 = vsel %vm16, %v1168, 0
    %v1204 = vsel %vm16, %v1169, 0
    %v1207 = vsel %vm16, %v1170, 0
    %v1210 = vsel %vm16, %v1171, 0
    %v1213 = vsel %vm16, %v1172, 0
    %v1216 = vsel %vm16, %v1173, 0
    %v1219 = vsel %vm16, %v1174, 0
    %v1222 = vsel %vm16, %v1175, 0
    %v1225 = vsel %vm16, %v1176, 0
    %v1228 = vsel %vm16, %v1177, 0
    %v1231 = vsel %vm16, %v1178, 0
    %v1234 = vsel %vm16, %v1179, 0
    %1236 = vmatprep.subr.bf16.mxu0 0
    %1237 = vmatpush1.bf16.msra.mxu0 %v1186
    %1238 = vmatprep.subr.bf16.mxu0 0
    %1239 = vmatpush1.bf16.msra.mxu0 0
    %1240 = vmatprep.subr.bf16.mxu0 0
    %1241 = vmatpush1.bf16.msra.mxu0 0
    %1242 = vmatprep.subr.bf16.mxu0 0
    %1243 = vmatpush1.bf16.msra.mxu0 0
    %1244 = vmatprep.subr.bf16.mxu0 0
    %1245 = vmatpush1.bf16.msra.mxu0 0
    %1246 = vmatprep.subr.bf16.mxu0 0
    %1247 = vmatpush1.bf16.msra.mxu0 0
    %1248 = vmatprep.subr.bf16.mxu0 0
    %1249 = vmatpush1.bf16.msra.mxu0 0
    %1250 = vmatprep.subr.bf16.mxu0 0
    %1251 = vmatpush1.bf16.msra.mxu0 0
    %1252 = vmatprep.subr.bf16.mxu0 0
    %1253 = vmatpush1.bf16.msra.mxu0 0
    %1254 = vmatprep.subr.bf16.mxu0 0
    %1255 = vmatpush1.bf16.msra.mxu0 0
    %1256 = vmatprep.subr.bf16.mxu0 0
    %1257 = vmatpush1.bf16.msra.mxu0 0
    %1258 = vmatprep.subr.bf16.mxu0 0
    %1259 = vmatpush1.bf16.msra.mxu0 0
    %1260 = vmatprep.subr.bf16.mxu0 0
    %1261 = vmatpush1.bf16.msra.mxu0 0
    %1262 = vmatprep.subr.bf16.mxu0 0
    %1263 = vmatpush1.bf16.msra.mxu0 0
    %1264 = vmatprep.subr.bf16.mxu0 0
    %1265 = vmatpush1.bf16.msra.mxu0 0
    %1266 = vmatprep.subr.bf16.mxu0 0
    %1267 = vmatpush1.bf16.msra.mxu0 0
    %1268 = vmatprep.mubr.bf16.mxu0 0
    %1269 = vmatmul.mubr.bf16.gmra.mrb[0].mxu0 %v1189
    %v1270 = vpop.f32.mrb[0].mxu0
    %v1271 = vadd.f32 0.0, %v1270
    %v1272 = vpop.f32.mrb[0].mxu0
    %v1273 = vpop.f32.mrb[0].mxu0
    %v1274 = vadd.f32 0.0, %v1273
    %v1275 = vpop.f32.mrb[0].mxu0
    %1276 = vmatprep.mubr.bf16.mxu0 0
    %1277 = vmatmul.mubr.bf16.gmra.mrb[0].mxu0 %v1192
    %v1278 = vpop.f32.mrb[0].mxu0
    %v1279 = vadd.f32 0.0, %v1278
    %v1280 = vpop.f32.mrb[0].mxu0
    %v1281 = vpop.f32.mrb[0].mxu0
    %v1282 = vadd.f32 0.0, %v1281
    %v1283 = vpop.f32.mrb[0].mxu0
    %1284 = vmatprep.mubr.bf16.mxu0 0
    %1285 = vmatmul.mubr.bf16.gmra.mrb[0].mxu0 %v1195
    %v1286 = vpop.f32.mrb[0].mxu0
    %v1287 = vadd.f32 0.0, %v1286
    %v1288 = vpop.f32.mrb[0].mxu0
    %v1289 = vpop.f32.mrb[0].mxu0
    %v1290 = vadd.f32 0.0, %v1289
    %v1291 = vpop.f32.mrb[0].mxu0
    %1292 = vmatprep.mubr.bf16.mxu0 0
    %1293 = vmatmul.mubr.bf16.gmra.mrb[0].mxu0 %v1198
    %v1294 = vpop.f32.mrb[0].mxu0
    %v1295 = vadd.f32 0.0, %v1294
    %v1296 = vpop.f32.mrb[0].mxu0
    %v1297 = vpop.f32.mrb[0].mxu0
    %v1298 = vadd.f32 0.0, %v1297
    %v1299 = vpop.f32.mrb[0].mxu0
    %1300 = vmatprep.mubr.bf16.mxu0 0
    %1301 = vmatmul.mubr.bf16.gmra.mrb[0].mxu0 %v1201
    %v1302 = vpop.f32.mrb[0].mxu0
    %v1303 = vadd.f32 0.0, %v1302
    %v1304 = vpop.f32.mrb[0].mxu0
    %v1305 = vpop.f32.mrb[0].mxu0
    %v1306 = vadd.f32 0.0, %v1305
    %v1307 = vpop.f32.mrb[0].mxu0
    %1308 = vmatprep.mubr.bf16.mxu0 0
    %1309 = vmatmul.mubr.bf16.gmra.mrb[0].mxu0 %v1204
    %v1310 = vpop.f32.mrb[0].mxu0
    %v1311 = vadd.f32 0.0, %v1310
    %v1312 = vpop.f32.mrb[0].mxu0
    %v1313 = vpop.f32.mrb[0].mxu0
    %v1314 = vadd.f32 0.0, %v1313
    %v1315 = vpop.f32.mrb[0].mxu0
    %1316 = vmatprep.mubr.bf16.mxu0 0
    %1317 = vmatmul.mubr.bf16.gmra.mrb[0].mxu0 %v1207
    %v1318 = vpop.f32.mrb[0].mxu0
    %v1319 = vadd.f32 0.0, %v1318
    %v1320 = vpop.f32.mrb[0].mxu0
    %v1321 = vpop.f32.mrb[0].mxu0
    %v1322 = vadd.f32 0.0, %v1321
    %v1323 = vpop.f32.mrb[0].mxu0
    %1324 = vmatprep.mubr.bf16.mxu0 0
    %1325 = vmatmul.mubr.bf16.gmra.mrb[0].mxu0 %v1210
    %v1326 = vpop.f32.mrb[0].mxu0
    %v1327 = vadd.f32 0.0, %v1326
    %v1328 = vpop.f32.mrb[0].mxu0
    %v1329 = vpop.f32.mrb[0].mxu0
    %v1330 = vadd.f32 0.0, %v1329
    %v1331 = vpop.f32.mrb[0].mxu0
    %1332 = vmatprep.mubr.bf16.mxu0 0
    %1333 = vmatmul.mubr.bf16.gmra.mrb[0].mxu0 %v1213
    %v1334 = vpop.f32.mrb[0].mxu0
    %v1335 = vadd.f32 0.0, %v1334
    %v1336 = vpop.f32.mrb[0].mxu0
    %v1337 = vpop.f32.mrb[0].mxu0
    %v1338 = vadd.f32 0.0, %v1337
    %v1339 = vpop.f32.mrb[0].mxu0
    %1340 = vmatprep.mubr.bf16.mxu0 0
    %1341 = vmatmul.mubr.bf16.gmra.mrb[0].mxu0 %v1216
    %v1342 = vpop.f32.mrb[0].mxu0
    %v1343 = vadd.f32 0.0, %v1342
    %v1344 = vpop.f32.mrb[0].mxu0
    %v1345 = vpop.f32.mrb[0].mxu0
    %v1346 = vadd.f32 0.0, %v1345
    %v1347 = vpop.f32.mrb[0].mxu0
    %1348 = vmatprep.mubr.bf16.mxu0 0
    %1349 = vmatmul.mubr.bf16.gmra.mrb[0].mxu0 %v1219
    %v1350 = vpop.f32.mrb[0].mxu0
    %v1351 = vadd.f32 0.0, %v1350
    %v1352 = vpop.f32.mrb[0].mxu0
    %v1353 = vpop.f32.mrb[0].mxu0
    %v1354 = vadd.f32 0.0, %v1353
    %v1355 = vpop.f32.mrb[0].mxu0
    %1356 = vmatprep.mubr.bf16.mxu0 0
    %1357 = vmatmul.mubr.bf16.gmra.mrb[0].mxu0 %v1222
    %v1358 = vpop.f32.mrb[0].mxu0
    %v1359 = vadd.f32 0.0, %v1358
    %v1360 = vpop.f32.mrb[0].mxu0
    %v1361 = vpop.f32.mrb[0].mxu0
    %v1362 = vadd.f32 0.0, %v1361
    %v1363 = vpop.f32.mrb[0].mxu0
    %1364 = vmatprep.mubr.bf16.mxu0 0
    %1365 = vmatmul.mubr.bf16.gmra.mrb[0].mxu0 %v1225
    %v1366 = vpop.f32.mrb[0].mxu0
    %v1367 = vadd.f32 0.0, %v1366
    %v1368 = vpop.f32.mrb[0].mxu0
    %v1369 = vpop.f32.mrb[0].mxu0
    %v1370 = vadd.f32 0.0, %v1369
    %v1371 = vpop.f32.mrb[0].mxu0
    %1372 = vmatprep.mubr.bf16.mxu0 0
    %1373 = vmatmul.mubr.bf16.gmra.mrb[0].mxu0 %v1228
    %v1374 = vpop.f32.mrb[0].mxu0
    %v1375 = vadd.f32 0.0, %v1374
    %v1376 = vpop.f32.mrb[0].mxu0
    %v1377 = vpop.f32.mrb[0].mxu0
    %v1378 = vadd.f32 0.0, %v1377
    %v1379 = vpop.f32.mrb[0].mxu0
    %1380 = vmatprep.mubr.bf16.mxu0 0
    %1381 = vmatmul.mubr.bf16.gmra.mrb[0].mxu0 %v1231
    %v1382 = vpop.f32.mrb[0].mxu0
    %v1383 = vadd.f32 0.0, %v1382
    %v1384 = vpop.f32.mrb[0].mxu0
    %v1385 = vpop.f32.mrb[0].mxu0
    %v1386 = vadd.f32 0.0, %v1385
    %v1387 = vpop.f32.mrb[0].mxu0
    %1388 = vmatprep.mubr.bf16.mxu0 0
    %1389 = vmatmul.mubr.bf16.gmra.mrb[0].mxu0 %v1234
    %v1390 = vpop.f32.mrb[0].mxu0
    %v1391 = vadd.f32 0.0, %v1390
    %v1392 = vpop.f32.mrb[0].mxu0
    %v1393 = vpop.f32.mrb[0].mxu0
    %v1394 = vadd.f32 0.0, %v1393
    %v1395 = vpop.f32.mrb[0].mxu0
    %1396 = vdwg.mxu0
    %v1397 = vmul.f32 %v1271, %v1271
    %v1398 = vmul.f32 %v1274, %v1274
    %v1399 = vmul.f32 %v1279, %v1279
    %v1400 = vmul.f32 %v1282, %v1282
    %v1401 = vmul.f32 %v1287, %v1287
    %v1402 = vmul.f32 %v1290, %v1290
    %v1403 = vmul.f32 %v1295, %v1295
    %v1404 = vmul.f32 %v1298, %v1298
    %v1405 = vmul.f32 %v1303, %v1303
    %v1406 = vmul.f32 %v1306, %v1306
    %v1407 = vmul.f32 %v1311, %v1311
    %v1408 = vmul.f32 %v1314, %v1314
    %v1409 = vmul.f32 %v1319, %v1319
    %v1410 = vmul.f32 %v1322, %v1322
    %v1411 = vmul.f32 %v1327, %v1327
    %v1412 = vmul.f32 %v1330, %v1330
    %v1413 = vmul.f32 %v1335, %v1335
    %v1414 = vmul.f32 %v1338, %v1338
    %v1415 = vmul.f32 %v1343, %v1343
    %v1416 = vmul.f32 %v1346, %v1346
    %v1417 = vmul.f32 %v1351, %v1351
    %v1418 = vmul.f32 %v1354, %v1354
    %v1419 = vmul.f32 %v1359, %v1359
    %v1420 = vmul.f32 %v1362, %v1362
    %v1421 = vmul.f32 %v1367, %v1367
    %v1422 = vmul.f32 %v1370, %v1370
    %v1423 = vmul.f32 %v1375, %v1375
    %v1424 = vmul.f32 %v1378, %v1378
    %v1425 = vmul.f32 %v1383, %v1383
    %v1426 = vmul.f32 %v1386, %v1386
    %v1427 = vmul.f32 %v1391, %v1391
    %v1428 = vmul.f32 %v1394, %v1394
    %1461 = vrot.lane.b32.xlu0 %v1397, 16
    %v1462 = vpop.permute.xlu0 %1461
    %1463 = vrot.lane.b32.xlu0 %v1398, 16
    %v1464 = vpop.permute.xlu0 %1463
    %1465 = vrot.lane.b32.xlu0 %v1399, 16
    %v1466 = vpop.permute.xlu0 %1465
    %1467 = vrot.lane.b32.xlu0 %v1400, 16
    %v1468 = vpop.permute.xlu0 %1467
    %1469 = vrot.lane.b32.xlu0 %v1401, 16
    %v1470 = vpop.permute.xlu0 %1469
    %1471 = vrot.lane.b32.xlu0 %v1402, 16
    %v1472 = vpop.permute.xlu0 %1471
    %1473 = vrot.lane.b32.xlu0 %v1403, 16
    %v1474 = vpop.permute.xlu0 %1473
    %1475 = vrot.lane.b32.xlu0 %v1404, 16
    %v1476 = vpop.permute.xlu0 %1475
    %1477 = vrot.lane.b32.xlu0 %v1405, 16
    %v1478 = vpop.permute.xlu0 %1477
    %1479 = vrot.lane.b32.xlu0 %v1406, 16
    %v1480 = vpop.permute.xlu0 %1479
    %1481 = vrot.lane.b32.xlu0 %v1407, 16
    %v1482 = vpop.permute.xlu0 %1481
    %1483 = vrot.lane.b32.xlu0 %v1408, 16
    %v1484 = vpop.permute.xlu0 %1483
    %1485 = vrot.lane.b32.xlu0 %v1409, 16
    %v1486 = vpop.permute.xlu0 %1485
    %1487 = vrot.lane.b32.xlu0 %v1410, 16
    %v1488 = vpop.permute.xlu0 %1487
    %1489 = vrot.lane.b32.xlu0 %v1411, 16
    %v1490 = vpop.permute.xlu0 %1489
    %1491 = vrot.lane.b32.xlu0 %v1412, 16
    %v1492 = vpop.permute.xlu0 %1491
    %1493 = vrot.lane.b32.xlu0 %v1413, 16
    %v1494 = vpop.permute.xlu0 %1493
    %1495 = vrot.lane.b32.xlu0 %v1414, 16
    %v1496 = vpop.permute.xlu0 %1495
    %1497 = vrot.lane.b32.xlu0 %v1415, 16
    %v1498 = vpop.permute.xlu0 %1497
    %1499 = vrot.lane.b32.xlu0 %v1416, 16
    %v1500 = vpop.permute.xlu0 %1499
    %1501 = vrot.lane.b32.xlu0 %v1417, 16
    %v1502 = vpop.permute.xlu0 %1501
    %1503 = vrot.lane.b32.xlu0 %v1418, 16
    %v1504 = vpop.permute.xlu0 %1503
    %1505 = vrot.lane.b32.xlu0 %v1419, 16
    %v1506 = vpop.permute.xlu0 %1505
    %1507 = vrot.lane.b32.xlu0 %v1420, 16
    %v1508 = vpop.permute.xlu0 %1507
    %1509 = vrot.lane.b32.xlu0 %v1421, 16
    %v1510 = vpop.permute.xlu0 %1509
    %1511 = vrot.lane.b32.xlu0 %v1422, 16
    %v1512 = vpop.permute.xlu0 %1511
    %1513 = vrot.lane.b32.xlu0 %v1423, 16
    %v1514 = vpop.permute.xlu0 %1513
    %1515 = vrot.lane.b32.xlu0 %v1424, 16
    %v1516 = vpop.permute.xlu0 %1515
    %1517 = vrot.lane.b32.xlu0 %v1425, 16
    %v1518 = vpop.permute.xlu0 %1517
    %1519 = vrot.lane.b32.xlu0 %v1426, 16
    %v1520 = vpop.permute.xlu0 %1519
    %1521 = vrot.lane.b32.xlu0 %v1427, 16
    %v1522 = vpop.permute.xlu0 %1521
    %1523 = vrot.lane.b32.xlu0 %v1428, 16
    %v1524 = vpop.permute.xlu0 %1523
    %v1557 = vsel %vm16, %v1271, %v1462
    %v1558 = vsel %vm16, %v1274, %v1464
    %v1559 = vsel %vm16, %v1279, %v1466
    %v1560 = vsel %vm16, %v1282, %v1468
    %v1561 = vsel %vm16, %v1287, %v1470
    %v1562 = vsel %vm16, %v1290, %v1472
    %v1563 = vsel %vm16, %v1295, %v1474
    %v1564 = vsel %vm16, %v1298, %v1476
    %v1565 = vsel %vm16, %v1303, %v1478
    %v1566 = vsel %vm16, %v1306, %v1480
    %v1567 = vsel %vm16, %v1311, %v1482
    %v1568 = vsel %vm16, %v1314, %v1484
    %v1569 = vsel %vm16, %v1319, %v1486
    %v1570 = vsel %vm16, %v1322, %v1488
    %v1571 = vsel %vm16, %v1327, %v1490
    %v1572 = vsel %vm16, %v1330, %v1492
    %v1573 = vsel %vm16, %v1335, %v1494
    %v1574 = vsel %vm16, %v1338, %v1496
    %v1575 = vsel %vm16, %v1343, %v1498
    %v1576 = vsel %vm16, %v1346, %v1500
    %v1577 = vsel %vm16, %v1351, %v1502
    %v1578 = vsel %vm16, %v1354, %v1504
    %v1579 = vsel %vm16, %v1359, %v1506
    %v1580 = vsel %vm16, %v1362, %v1508
    %v1581 = vsel %vm16, %v1367, %v1510
    %v1582 = vsel %vm16, %v1370, %v1512
    %v1583 = vsel %vm16, %v1375, %v1514
    %v1584 = vsel %vm16, %v1378, %v1516
    %v1585 = vsel %vm16, %v1383, %v1518
    %v1586 = vsel %vm16, %v1386, %v1520
    %v1587 = vsel %vm16, %v1391, %v1522
    %v1588 = vsel %vm16, %v1394, %v1524
    %v1589 = vsel %vm569, %v1557, 0.0
    %v1590 = vsel %vm569, %v1558, 0.0
    %v1591 = vadd.f32 %v1589, %v1590
    %v1592 = vsel %vm569, %v1559, 0.0
    %v1593 = vadd.f32 %v1591, %v1592
    %v1594 = vsel %vm569, %v1560, 0.0
    %v1595 = vadd.f32 %v1593, %v1594
    %v1596 = vsel %vm569, %v1561, 0.0
    %v1597 = vadd.f32 %v1595, %v1596
    %v1598 = vsel %vm569, %v1562, 0.0
    %v1599 = vadd.f32 %v1597, %v1598
    %v1600 = vsel %vm569, %v1563, 0.0
    %v1601 = vadd.f32 %v1599, %v1600
    %v1602 = vsel %vm569, %v1564, 0.0
    %v1603 = vadd.f32 %v1601, %v1602
    %v1604 = vsel %vm569, %v1565, 0.0
    %v1605 = vadd.f32 %v1603, %v1604
    %v1606 = vsel %vm569, %v1566, 0.0
    %v1607 = vadd.f32 %v1605, %v1606
    %v1608 = vsel %vm569, %v1567, 0.0
    %v1609 = vadd.f32 %v1607, %v1608
    %v1610 = vsel %vm569, %v1568, 0.0
    %v1611 = vadd.f32 %v1609, %v1610
    %v1612 = vsel %vm569, %v1569, 0.0
    %v1613 = vadd.f32 %v1611, %v1612
    %v1614 = vsel %vm569, %v1570, 0.0
    %v1615 = vadd.f32 %v1613, %v1614
    %v1616 = vsel %vm569, %v1571, 0.0
    %v1617 = vadd.f32 %v1615, %v1616
    %v1618 = vsel %vm569, %v1572, 0.0
    %v1619 = vadd.f32 %v1617, %v1618
    %v1620 = vsel %vm569, %v1573, 0.0
    %v1621 = vadd.f32 %v1619, %v1620
    %v1622 = vsel %vm569, %v1574, 0.0
    %v1623 = vadd.f32 %v1621, %v1622
    %v1624 = vsel %vm569, %v1575, 0.0
    %v1625 = vadd.f32 %v1623, %v1624
    %v1626 = vsel %vm569, %v1576, 0.0
    %v1627 = vadd.f32 %v1625, %v1626
    %v1628 = vsel %vm569, %v1577, 0.0
    %v1629 = vadd.f32 %v1627, %v1628
    %v1630 = vsel %vm569, %v1578, 0.0
    %v1631 = vadd.f32 %v1629, %v1630
    %v1632 = vsel %vm569, %v1579, 0.0
    %v1633 = vadd.f32 %v1631, %v1632
    %v1634 = vsel %vm569, %v1580, 0.0
    %v1635 = vadd.f32 %v1633, %v1634
    %v1636 = vsel %vm569, %v1581, 0.0
    %v1637 = vadd.f32 %v1635, %v1636
    %v1638 = vsel %vm569, %v1582, 0.0
    %v1639 = vadd.f32 %v1637, %v1638
    %v1640 = vsel %vm569, %v1583, 0.0
    %v1641 = vadd.f32 %v1639, %v1640
    %v1642 = vsel %vm569, %v1584, 0.0
    %v1643 = vadd.f32 %v1641, %v1642
    %v1644 = vsel %vm569, %v1585, 0.0
    %v1645 = vadd.f32 %v1643, %v1644
    %v1646 = vsel %vm569, %v1586, 0.0
    %v1647 = vadd.f32 %v1645, %v1646
    %v1648 = vsel %vm569, %v1587, 0.0
    %v1649 = vadd.f32 %v1647, %v1648
    %v1650 = vsel %vm569, %v1588, 0.0
    %v1651 = vadd.f32 %v1649, %v1650
    %v1652 = vrot.slane %v1651, 4
    %v1653 = vadd.f32 %v1651, %v1652
    %v1654 = vrot.slane %v1653, 2
    %v1655 = vadd.f32 %v1653, %v1654
    %v1656 = vrot.slane %v1655, 1
    %v1657 = vadd.f32 %v1655, %v1656
    %v1658 = vmul.f32 %v1657, 0.00390625
    %v1659 = vmul.f32 %v1658, %v1658
    %1661 = vrot.lane.b32.xlu0 %v1659, 16
    %v1662 = vpop.permute.xlu0 %1661
    %v1664 = vsub.f32 %v1658, %v1662
    %v1665 = vmax.f32 %v1664, 0.0
    %v1666 = vadd.f32 %v1665, 1e-05
    %v1667 = vrsqrt.pop %v1666
    %v1669 = vrot.slane %v1667, 6
    %1670 = vrot.lane.b32.xlu0 %v1669, 112
    %v1671 = vpop.permute.xlu0 %1670
    %v1673 = vmul.f32 %v504, %v1671
    %v1674 = vlaneseq
    %v1675 = vshrl.u32 %v1674, 7
    %v1676 = vsub.s32 2, %v1675
    %v1677 = vrot.slane %v1673, %v1676
    %v1678 = vmul.f32 %v1271, %v1677
    %v1679 = vmul.f32 %v1274, %v1677
    %v1680 = vmul.f32 %v1279, %v1677
    %v1681 = vmul.f32 %v1282, %v1677
    %v1682 = vmul.f32 %v1287, %v1677
    %v1683 = vmul.f32 %v1290, %v1677
    %v1684 = vmul.f32 %v1295, %v1677
    %v1685 = vmul.f32 %v1298, %v1677
    %v1686 = vmul.f32 %v1303, %v1677
    %v1687 = vmul.f32 %v1306, %v1677
    %v1688 = vmul.f32 %v1311, %v1677
    %v1689 = vmul.f32 %v1314, %v1677
    %v1690 = vmul.f32 %v1319, %v1677
    %v1691 = vmul.f32 %v1322, %v1677
    %v1692 = vmul.f32 %v1327, %v1677
    %v1693 = vmul.f32 %v1330, %v1677
    %v1694 = vmul.f32 %v1335, %v1677
    %v1695 = vmul.f32 %v1338, %v1677
    %v1696 = vmul.f32 %v1343, %v1677
    %v1697 = vmul.f32 %v1346, %v1677
    %v1698 = vmul.f32 %v1351, %v1677
    %v1699 = vmul.f32 %v1354, %v1677
    %v1700 = vmul.f32 %v1359, %v1677
    %v1701 = vmul.f32 %v1362, %v1677
    %v1702 = vmul.f32 %v1367, %v1677
    %v1703 = vmul.f32 %v1370, %v1677
    %v1704 = vmul.f32 %v1375, %v1677
    %v1705 = vmul.f32 %v1378, %v1677
    %v1706 = vmul.f32 %v1383, %v1677
    %v1707 = vmul.f32 %v1386, %v1677
    %v1708 = vmul.f32 %v1391, %v1677
    %v1709 = vmul.f32 %v1394, %v1677
    %v1710 = vmul.f32 %v1658, %v1673
    %v1712 = vrot.slane %v1710, 7
    %v1714 = vsub.f32 %v504, %v1712
    %v1715 = vlaneseq
    %v1716 = vshrl.u32 %v1715, 7
    %v1717 = vsub.s32 3, %v1716
    %v1718 = vrot.slane %v1714, %v1717
    %v1719 = vadd.f32 %v1678, %v1718
    %v1720 = vadd.f32 %v1679, %v1718
    %v1721 = vadd.f32 %v1680, %v1718
    %v1722 = vadd.f32 %v1681, %v1718
    %v1723 = vadd.f32 %v1682, %v1718
    %v1724 = vadd.f32 %v1683, %v1718
    %v1725 = vadd.f32 %v1684, %v1718
    %v1726 = vadd.f32 %v1685, %v1718
    %v1727 = vadd.f32 %v1686, %v1718
    %v1728 = vadd.f32 %v1687, %v1718
    %v1729 = vadd.f32 %v1688, %v1718
    %v1730 = vadd.f32 %v1689, %v1718
    %v1731 = vadd.f32 %v1690, %v1718
    %v1732 = vadd.f32 %v1691, %v1718
    %v1733 = vadd.f32 %v1692, %v1718
    %v1734 = vadd.f32 %v1693, %v1718
    %v1735 = vadd.f32 %v1694, %v1718
    %v1736 = vadd.f32 %v1695, %v1718
    %v1737 = vadd.f32 %v1696, %v1718
    %v1738 = vadd.f32 %v1697, %v1718
    %v1739 = vadd.f32 %v1698, %v1718
    %v1740 = vadd.f32 %v1699, %v1718
    %v1741 = vadd.f32 %v1700, %v1718
    %v1742 = vadd.f32 %v1701, %v1718
    %v1743 = vadd.f32 %v1702, %v1718
    %v1744 = vadd.f32 %v1703, %v1718
    %v1745 = vadd.f32 %v1704, %v1718
    %v1746 = vadd.f32 %v1705, %v1718
    %v1747 = vadd.f32 %v1706, %v1718
    %v1748 = vadd.f32 %v1707, %v1718
    %v1749 = vadd.f32 %v1708, %v1718
    %v1750 = vadd.f32 %v1709, %v1718
    %v1751 = vmax.f32 %v1719, 0.0
    %v1752 = vmax.f32 %v1720, 0.0
    %v1753 = vmax.f32 %v1721, 0.0
    %v1754 = vmax.f32 %v1722, 0.0
    %v1755 = vmax.f32 %v1723, 0.0
    %v1756 = vmax.f32 %v1724, 0.0
    %v1757 = vmax.f32 %v1725, 0.0
    %v1758 = vmax.f32 %v1726, 0.0
    %v1759 = vmax.f32 %v1727, 0.0
    %v1760 = vmax.f32 %v1728, 0.0
    %v1761 = vmax.f32 %v1729, 0.0
    %v1762 = vmax.f32 %v1730, 0.0
    %v1763 = vmax.f32 %v1731, 0.0
    %v1764 = vmax.f32 %v1732, 0.0
    %v1765 = vmax.f32 %v1733, 0.0
    %v1766 = vmax.f32 %v1734, 0.0
    %v1767 = vmax.f32 %v1735, 0.0
    %v1768 = vmax.f32 %v1736, 0.0
    %v1769 = vmax.f32 %v1737, 0.0
    %v1770 = vmax.f32 %v1738, 0.0
    %v1771 = vmax.f32 %v1739, 0.0
    %v1772 = vmax.f32 %v1740, 0.0
    %v1773 = vmax.f32 %v1741, 0.0
    %v1774 = vmax.f32 %v1742, 0.0
    %v1775 = vmax.f32 %v1743, 0.0
    %v1776 = vmax.f32 %v1744, 0.0
    %v1777 = vmax.f32 %v1745, 0.0
    %v1778 = vmax.f32 %v1746, 0.0
    %v1779 = vmax.f32 %v1747, 0.0
    %v1780 = vmax.f32 %v1748, 0.0
    %v1781 = vmax.f32 %v1749, 0.0
    %v1782 = vmax.f32 %v1750, 0.0
    %1783 = vst.msk [vmem:[#allocation2 + $0x18] sm:$0xff] %vm16, %v1751
    %1784 = vst.msk [vmem:[#allocation2 + $0x20] sm:$0xff] %vm16, %v1752
    %1785 = vst.msk [vmem:[#allocation2 + $0x28] sm:$0xff] %vm16, %v1753
    %1786 = vst.msk [vmem:[#allocation2 + $0x30] sm:$0xff] %vm16, %v1754
    %1787 = vst.msk [vmem:[#allocation2 + $0x38] sm:$0xff] %vm16, %v1755
    %1788 = vst.msk [vmem:[#allocation2 + $0x40] sm:$0xff] %vm16, %v1756
    %1789 = vst.msk [vmem:[#allocation2 + $0x48] sm:$0xff] %vm16, %v1757
    %1790 = vst.msk [vmem:[#allocation2 + $0x50] sm:$0xff] %vm16, %v1758
    %1791 = vst.msk [vmem:[#allocation2 + $0x58] sm:$0xff] %vm16, %v1759
    %1792 = vst.msk [vmem:[#allocation2 + $0x60] sm:$0xff] %vm16, %v1760
    %1793 = vst.msk [vmem:[#allocation2 + $0x68] sm:$0xff] %vm16, %v1761
    %1794 = vst.msk [vmem:[#allocation2 + $0x70] sm:$0xff] %vm16, %v1762
    %1795 = vst.msk [vmem:[#allocation2 + $0x78] sm:$0xff] %vm16, %v1763
    %1796 = vst.msk [vmem:[#allocation2 + $0x80] sm:$0xff] %vm16, %v1764
    %1797 = vst.msk [vmem:[#allocation2 + $0x88] sm:$0xff] %vm16, %v1765
    %1798 = vst.msk [vmem:[#allocation2 + $0x90] sm:$0xff] %vm16, %v1766
    %1799 = vst.msk [vmem:[#allocation2 + $0x98] sm:$0xff] %vm16, %v1767
    %1800 = vst.msk [vmem:[#allocation2 + $0xa0] sm:$0xff] %vm16, %v1768
    %1801 = vst.msk [vmem:[#allocation2 + $0xa8] sm:$0xff] %vm16, %v1769
    %1802 = vst.msk [vmem:[#allocation2 + $0xb0] sm:$0xff] %vm16, %v1770
    %1803 = vst.msk [vmem:[#allocation2 + $0xb8] sm:$0xff] %vm16, %v1771
    %1804 = vst.msk [vmem:[#allocation2 + $0xc0] sm:$0xff] %vm16, %v1772
    %1805 = vst.msk [vmem:[#allocation2 + $0xc8] sm:$0xff] %vm16, %v1773
    %1806 = vst.msk [vmem:[#allocation2 + $0xd0] sm:$0xff] %vm16, %v1774
    %1807 = vst.msk [vmem:[#allocation2 + $0xd8] sm:$0xff] %vm16, %v1775
    %1808 = vst.msk [vmem:[#allocation2 + $0xe0] sm:$0xff] %vm16, %v1776
    %1809 = vst.msk [vmem:[#allocation2 + $0xe8] sm:$0xff] %vm16, %v1777
    %1810 = vst.msk [vmem:[#allocation2 + $0xf0] sm:$0xff] %vm16, %v1778
    %1811 = vst.msk [vmem:[#allocation2 + $0xf8] sm:$0xff] %vm16, %v1779
    %1812 = vst.msk [vmem:[#allocation2 + $0x100] sm:$0xff] %vm16, %v1780
    %1813 = vst.msk [vmem:[#allocation2 + $0x108] sm:$0xff] %vm16, %v1781
    %1814 = vst.msk [vmem:[#allocation2 + $0x110] sm:$0xff] %vm16, %v1782
    %v1815 = vld [vmem:[#allocation2 + $0x7] sm:$0xff]
    %v1816 = vld [vmem:[#allocation2 + $0xf] sm:$0xff]
    %v1817 = vld [vmem:[#allocation2 + $0x17] sm:$0xff]
    %v1818 = vld [vmem:[#allocation2 + $0x1f] sm:$0xff]
    %v1819 = vld [vmem:[#allocation2 + $0x27] sm:$0xff]
    %v1820 = vld [vmem:[#allocation2 + $0x2f] sm:$0xff]
    %v1821 = vld [vmem:[#allocation2 + $0x37] sm:$0xff]
    %v1822 = vld [vmem:[#allocation2 + $0x3f] sm:$0xff]
    %v1823 = vld [vmem:[#allocation2 + $0x47] sm:$0xff]
    %v1824 = vld [vmem:[#allocation2 + $0x4f] sm:$0xff]
    %v1825 = vld [vmem:[#allocation2 + $0x57] sm:$0xff]
    %v1826 = vld [vmem:[#allocation2 + $0x5f] sm:$0xff]
    %v1827 = vld [vmem:[#allocation2 + $0x67] sm:$0xff]
    %v1828 = vld [vmem:[#allocation2 + $0x6f] sm:$0xff]
    %v1829 = vld [vmem:[#allocation2 + $0x77] sm:$0xff]
    %v1830 = vld [vmem:[#allocation2 + $0x7f] sm:$0xff]
    %v1831 = vld [vmem:[#allocation2 + $0x87] sm:$0xff]
    %v1832 = vld [vmem:[#allocation2 + $0x8f] sm:$0xff]
    %v1833 = vld [vmem:[#allocation2 + $0x97] sm:$0xff]
    %v1834 = vld [vmem:[#allocation2 + $0x9f] sm:$0xff]
    %v1835 = vld [vmem:[#allocation2 + $0xa7] sm:$0xff]
    %v1836 = vld [vmem:[#allocation2 + $0xaf] sm:$0xff]
    %v1837 = vld [vmem:[#allocation2 + $0xb7] sm:$0xff]
    %v1838 = vld [vmem:[#allocation2 + $0xbf] sm:$0xff]
    %v1839 = vld [vmem:[#allocation2 + $0xc7] sm:$0xff]
    %v1840 = vld [vmem:[#allocation2 + $0xcf] sm:$0xff]
    %v1841 = vld [vmem:[#allocation2 + $0xd7] sm:$0xff]
    %v1842 = vld [vmem:[#allocation2 + $0xdf] sm:$0xff]
    %v1843 = vld [vmem:[#allocation2 + $0xe7] sm:$0xff]
    %v1844 = vld [vmem:[#allocation2 + $0xef] sm:$0xff]
    %v1845 = vld [vmem:[#allocation2 + $0xf7] sm:$0xff]
    %v1846 = vld [vmem:[#allocation2 + $0xff] sm:$0xff]
    %v1847 = vsel %vm440, %v1815, 0.0
    %v1848 = vsel %vm441, %v1816, 0.0
    %v1849 = vsel %vm442, %v1817, 0.0
    %v1850 = vsel %vm443, %v1818, 0.0
    %v1851 = vsel %vm444, %v1819, 0.0
    %v1852 = vsel %vm445, %v1820, 0.0
    %v1853 = vsel %vm446, %v1821, 0.0
    %v1854 = vsel %vm447, %v1822, 0.0
    %v1855 = vsel %vm448, %v1823, 0.0
    %v1856 = vsel %vm449, %v1824, 0.0
    %v1857 = vsel %vm450, %v1825, 0.0
    %v1858 = vsel %vm451, %v1826, 0.0
    %v1859 = vsel %vm452, %v1827, 0.0
    %v1860 = vsel %vm453, %v1828, 0.0
    %v1861 = vsel %vm454, %v1829, 0.0
    %v1862 = vsel %vm455, %v1830, 0.0
    %v1863 = vsel %vm456, %v1831, 0.0
    %v1864 = vsel %vm457, %v1832, 0.0
    %v1865 = vsel %vm458, %v1833, 0.0
    %v1866 = vsel %vm459, %v1834, 0.0
    %v1867 = vsel %vm460, %v1835, 0.0
    %v1868 = vsel %vm461, %v1836, 0.0
    %v1869 = vsel %vm462, %v1837, 0.0
    %v1870 = vsel %vm463, %v1838, 0.0
    %v1871 = vsel %vm464, %v1839, 0.0
    %v1872 = vsel %vm465, %v1840, 0.0
    %v1873 = vsel %vm466, %v1841, 0.0
    %v1874 = vsel %vm467, %v1842, 0.0
    %v1875 = vsel %vm468, %v1843, 0.0
    %v1876 = vsel %vm469, %v1844, 0.0
    %v1877 = vsel %vm470, %v1845, 0.0
    %v1878 = vsel %vm471, %v1846, 0.0
    %v1879 = vld [vmem:[#allocation2 + $0x8] sm:$0xff]
    %v1880 = vld [vmem:[#allocation2 + $0x10] sm:$0xff]
    %v1881 = vld [vmem:[#allocation2 + $0x18] sm:$0xff]
    %v1882 = vld [vmem:[#allocation2 + $0x20] sm:$0xff]
    %v1883 = vld [vmem:[#allocation2 + $0x28] sm:$0xff]
    %v1884 = vld [vmem:[#allocation2 + $0x30] sm:$0xff]
    %v1885 = vld [vmem:[#allocation2 + $0x38] sm:$0xff]
    %v1886 = vld [vmem:[#allocation2 + $0x40] sm:$0xff]
    %v1887 = vld [vmem:[#allocation2 + $0x48] sm:$0xff]
    %v1888 = vld [vmem:[#allocation2 + $0x50] sm:$0xff]
    %v1889 = vld [vmem:[#allocation2 + $0x58] sm:$0xff]
    %v1890 = vld [vmem:[#allocation2 + $0x60] sm:$0xff]
    %v1891 = vld [vmem:[#allocation2 + $0x68] sm:$0xff]
    %v1892 = vld [vmem:[#allocation2 + $0x70] sm:$0xff]
    %v1893 = vld [vmem:[#allocation2 + $0x78] sm:$0xff]
    %v1894 = vld [vmem:[#allocation2 + $0x80] sm:$0xff]
    %v1895 = vld [vmem:[#allocation2 + $0x88] sm:$0xff]
    %v1896 = vld [vmem:[#allocation2 + $0x90] sm:$0xff]
    %v1897 = vld [vmem:[#allocation2 + $0x98] sm:$0xff]
    %v1898 = vld [vmem:[#allocation2 + $0xa0] sm:$0xff]
    %v1899 = vld [vmem:[#allocation2 + $0xa8] sm:$0xff]
    %v1900 = vld [vmem:[#allocation2 + $0xb0] sm:$0xff]
    %v1901 = vld [vmem:[#allocation2 + $0xb8] sm:$0xff]
    %v1902 = vld [vmem:[#allocation2 + $0xc0] sm:$0xff]
    %v1903 = vld [vmem:[#allocation2 + $0xc8] sm:$0xff]
    %v1904 = vld [vmem:[#allocation2 + $0xd0] sm:$0xff]
    %v1905 = vld [vmem:[#allocation2 + $0xd8] sm:$0xff]
    %v1906 = vld [vmem:[#allocation2 + $0xe0] sm:$0xff]
    %v1907 = vld [vmem:[#allocation2 + $0xe8] sm:$0xff]
    %v1908 = vld [vmem:[#allocation2 + $0xf0] sm:$0xff]
    %v1909 = vld [vmem:[#allocation2 + $0xf8] sm:$0xff]
    %v1910 = vld [vmem:[#allocation2 + $0x100] sm:$0xff]
    %v1911 = vld [vmem:[#allocation2 + $0x9] sm:$0xff]
    %v1912 = vld [vmem:[#allocation2 + $0x11] sm:$0xff]
    %v1913 = vld [vmem:[#allocation2 + $0x19] sm:$0xff]
    %v1914 = vld [vmem:[#allocation2 + $0x21] sm:$0xff]
    %v1915 = vld [vmem:[#allocation2 + $0x29] sm:$0xff]
    %v1916 = vld [vmem:[#allocation2 + $0x31] sm:$0xff]
    %v1917 = vld [vmem:[#allocation2 + $0x39] sm:$0xff]
    %v1918 = vld [vmem:[#allocation2 + $0x41] sm:$0xff]
    %v1919 = vld [vmem:[#allocation2 + $0x49] sm:$0xff]
    %v1920 = vld [vmem:[#allocation2 + $0x51] sm:$0xff]
    %v1921 = vld [vmem:[#allocation2 + $0x59] sm:$0xff]
    %v1922 = vld [vmem:[#allocation2 + $0x61] sm:$0xff]
    %v1923 = vld [vmem:[#allocation2 + $0x69] sm:$0xff]
    %v1924 = vld [vmem:[#allocation2 + $0x71] sm:$0xff]
    %v1925 = vld [vmem:[#allocation2 + $0x79] sm:$0xff]
    %v1926 = vld [vmem:[#allocation2 + $0x81] sm:$0xff]
    %v1927 = vld [vmem:[#allocation2 + $0x89] sm:$0xff]
    %v1928 = vld [vmem:[#allocation2 + $0x91] sm:$0xff]
    %v1929 = vld [vmem:[#allocation2 + $0x99] sm:$0xff]
    %v1930 = vld [vmem:[#allocation2 + $0xa1] sm:$0xff]
    %v1931 = vld [vmem:[#allocation2 + $0xa9] sm:$0xff]
    %v1932 = vld [vmem:[#allocation2 + $0xb1] sm:$0xff]
    %v1933 = vld [vmem:[#allocation2 + $0xb9] sm:$0xff]
    %v1934 = vld [vmem:[#allocation2 + $0xc1] sm:$0xff]
    %v1935 = vld [vmem:[#allocation2 + $0xc9] sm:$0xff]
    %v1936 = vld [vmem:[#allocation2 + $0xd1] sm:$0xff]
    %v1937 = vld [vmem:[#allocation2 + $0xd9] sm:$0xff]
    %v1938 = vld [vmem:[#allocation2 + $0xe1] sm:$0xff]
    %v1939 = vld [vmem:[#allocation2 + $0xe9] sm:$0xff]
    %v1940 = vld [vmem:[#allocation2 + $0xf1] sm:$0xff]
    %v1941 = vld [vmem:[#allocation2 + $0xf9] sm:$0xff]
    %v1942 = vld [vmem:[#allocation2 + $0x101] sm:$0xff]
    %v1943 = vsel %vm472, %v1911, 0.0
    %v1944 = vsel %vm473, %v1912, 0.0
    %v1945 = vsel %vm474, %v1913, 0.0
    %v1946 = vsel %vm475, %v1914, 0.0
    %v1947 = vsel %vm476, %v1915, 0.0
    %v1948 = vsel %vm477, %v1916, 0.0
    %v1949 = vsel %vm478, %v1917, 0.0
    %v1950 = vsel %vm479, %v1918, 0.0
    %v1951 = vsel %vm480, %v1919, 0.0
    %v1952 = vsel %vm481, %v1920, 0.0
    %v1953 = vsel %vm482, %v1921, 0.0
    %v1954 = vsel %vm483, %v1922, 0.0
    %v1955 = vsel %vm484, %v1923, 0.0
    %v1956 = vsel %vm485, %v1924, 0.0
    %v1957 = vsel %vm486, %v1925, 0.0
    %v1958 = vsel %vm487, %v1926, 0.0
    %v1959 = vsel %vm488, %v1927, 0.0
    %v1960 = vsel %vm489, %v1928, 0.0
    %v1961 = vsel %vm490, %v1929, 0.0
    %v1962 = vsel %vm491, %v1930, 0.0
    %v1963 = vsel %vm492, %v1931, 0.0
    %v1964 = vsel %vm493, %v1932, 0.0
    %v1965 = vsel %vm494, %v1933, 0.0
    %v1966 = vsel %vm495, %v1934, 0.0
    %v1967 = vsel %vm496, %v1935, 0.0
    %v1968 = vsel %vm497, %v1936, 0.0
    %v1969 = vsel %vm498, %v1937, 0.0
    %v1970 = vsel %vm499, %v1938, 0.0
    %v1971 = vsel %vm500, %v1939, 0.0
    %v1972 = vsel %vm501, %v1940, 0.0
    %v1973 = vsel %vm502, %v1941, 0.0
    %v1974 = vsel %vm503, %v1942, 0.0
    %v1975 = vld [vmem:[#allocation2 + $0x107] sm:$0xff]
    %v1976 = vld [vmem:[#allocation2 + $0x10f] sm:$0xff]
    %v1977 = vsel %vm440, %v1817, 0.0
    %v1978 = vsel %vm441, %v1818, 0.0
    %v1979 = vsel %vm442, %v1819, 0.0
    %v1980 = vsel %vm443, %v1820, 0.0
    %v1981 = vsel %vm444, %v1821, 0.0
    %v1982 = vsel %vm445, %v1822, 0.0
    %v1983 = vsel %vm446, %v1823, 0.0
    %v1984 = vsel %vm447, %v1824, 0.0
    %v1985 = vsel %vm448, %v1825, 0.0
    %v1986 = vsel %vm449, %v1826, 0.0
    %v1987 = vsel %vm450, %v1827, 0.0
    %v1988 = vsel %vm451, %v1828, 0.0
    %v1989 = vsel %vm452, %v1829, 0.0
    %v1990 = vsel %vm453, %v1830, 0.0
    %v1991 = vsel %vm454, %v1831, 0.0
    %v1992 = vsel %vm455, %v1832, 0.0
    %v1993 = vsel %vm456, %v1833, 0.0
    %v1994 = vsel %vm457, %v1834, 0.0
    %v1995 = vsel %vm458, %v1835, 0.0
    %v1996 = vsel %vm459, %v1836, 0.0
    %v1997 = vsel %vm460, %v1837, 0.0
    %v1998 = vsel %vm461, %v1838, 0.0
    %v1999 = vsel %vm462, %v1839, 0.0
    %v2000 = vsel %vm463, %v1840, 0.0
    %v2001 = vsel %vm464, %v1841, 0.0
    %v2002 = vsel %vm465, %v1842, 0.0
    %v2003 = vsel %vm466, %v1843, 0.0
    %v2004 = vsel %vm467, %v1844, 0.0
    %v2005 = vsel %vm468, %v1845, 0.0
    %v2006 = vsel %vm469, %v1846, 0.0
    %v2007 = vsel %vm470, %v1975, 0.0
    %v2008 = vsel %vm471, %v1976, 0.0
    %v2009 = vld [vmem:[#allocation2 + $0x108] sm:$0xff]
    %v2010 = vld [vmem:[#allocation2 + $0x110] sm:$0xff]
    %v2011 = vld [vmem:[#allocation2 + $0x109] sm:$0xff]
    %v2012 = vld [vmem:[#allocation2 + $0x111] sm:$0xff]
    %v2013 = vsel %vm472, %v1913, 0.0
    %v2014 = vsel %vm473, %v1914, 0.0
    %v2015 = vsel %vm474, %v1915, 0.0
    %v2016 = vsel %vm475, %v1916, 0.0
    %v2017 = vsel %vm476, %v1917, 0.0
    %v2018 = vsel %vm477, %v1918, 0.0
    %v2019 = vsel %vm478, %v1919, 0.0
    %v2020 = vsel %vm479, %v1920, 0.0
    %v2021 = vsel %vm480, %v1921, 0.0
    %v2022 = vsel %vm481, %v1922, 0.0
    %v2023 = vsel %vm482, %v1923, 0.0
    %v2024 = vsel %vm483, %v1924, 0.0
    %v2025 = vsel %vm484, %v1925, 0.0
    %v2026 = vsel %vm485, %v1926, 0.0
    %v2027 = vsel %vm486, %v1927, 0.0
    %v2028 = vsel %vm487, %v1928, 0.0
    %v2029 = vsel %vm488, %v1929, 0.0
    %v2030 = vsel %vm489, %v1930, 0.0
    %v2031 = vsel %vm490, %v1931, 0.0
    %v2032 = vsel %vm491, %v1932, 0.0
    %v2033 = vsel %vm492, %v1933, 0.0
    %v2034 = vsel %vm493, %v1934, 0.0
    %v2035 = vsel %vm494, %v1935, 0.0
    %v2036 = vsel %vm495, %v1936, 0.0
    %v2037 = vsel %vm496, %v1937, 0.0
    %v2038 = vsel %vm497, %v1938, 0.0
    %v2039 = vsel %vm498, %v1939, 0.0
    %v2040 = vsel %vm499, %v1940, 0.0
    %v2041 = vsel %vm500, %v1941, 0.0
    %v2042 = vsel %vm501, %v1942, 0.0
    %v2043 = vsel %vm502, %v2011, 0.0
    %v2044 = vsel %vm503, %v2012, 0.0
    %v2045 = vld [vmem:[#allocation2 + $0x117] sm:$0xff]
    %v2046 = vld [vmem:[#allocation2 + $0x11f] sm:$0xff]
    %v2047 = vsel %vm440, %v1819, 0.0
    %v2048 = vsel %vm441, %v1820, 0.0
    %v2049 = vsel %vm442, %v1821, 0.0
    %v2050 = vsel %vm443, %v1822, 0.0
    %v2051 = vsel %vm444, %v1823, 0.0
    %v2052 = vsel %vm445, %v1824, 0.0
    %v2053 = vsel %vm446, %v1825, 0.0
    %v2054 = vsel %vm447, %v1826, 0.0
    %v2055 = vsel %vm448, %v1827, 0.0
    %v2056 = vsel %vm449, %v1828, 0.0
    %v2057 = vsel %vm450, %v1829, 0.0
    %v2058 = vsel %vm451, %v1830, 0.0
    %v2059 = vsel %vm452, %v1831, 0.0
    %v2060 = vsel %vm453, %v1832, 0.0
    %v2061 = vsel %vm454, %v1833, 0.0
    %v2062 = vsel %vm455, %v1834, 0.0
    %v2063 = vsel %vm456, %v1835, 0.0
    %v2064 = vsel %vm457, %v1836, 0.0
    %v2065 = vsel %vm458, %v1837, 0.0
    %v2066 = vsel %vm459, %v1838, 0.0
    %v2067 = vsel %vm460, %v1839, 0.0
    %v2068 = vsel %vm461, %v1840, 0.0
    %v2069 = vsel %vm462, %v1841, 0.0
    %v2070 = vsel %vm463, %v1842, 0.0
    %v2071 = vsel %vm464, %v1843, 0.0
    %v2072 = vsel %vm465, %v1844, 0.0
    %v2073 = vsel %vm466, %v1845, 0.0
    %v2074 = vsel %vm467, %v1846, 0.0
    %v2075 = vsel %vm468, %v1975, 0.0
    %v2076 = vsel %vm469, %v1976, 0.0
    %v2077 = vsel %vm470, %v2045, 0.0
    %v2078 = vsel %vm471, %v2046, 0.0
    %v2079 = vld [vmem:[#allocation2 + $0x118] sm:$0xff]
    %v2080 = vld [vmem:[#allocation2 + $0x120] sm:$0xff]
    %v2081 = vld [vmem:[#allocation2 + $0x119] sm:$0xff]
    %v2082 = vld [vmem:[#allocation2 + $0x121] sm:$0xff]
    %v2083 = vsel %vm472, %v1915, 0.0
    %v2084 = vsel %vm473, %v1916, 0.0
    %v2085 = vsel %vm474, %v1917, 0.0
    %v2086 = vsel %vm475, %v1918, 0.0
    %v2087 = vsel %vm476, %v1919, 0.0
    %v2088 = vsel %vm477, %v1920, 0.0
    %v2089 = vsel %vm478, %v1921, 0.0
    %v2090 = vsel %vm479, %v1922, 0.0
    %v2091 = vsel %vm480, %v1923, 0.0
    %v2092 = vsel %vm481, %v1924, 0.0
    %v2093 = vsel %vm482, %v1925, 0.0
    %v2094 = vsel %vm483, %v1926, 0.0
    %v2095 = vsel %vm484, %v1927, 0.0
    %v2096 = vsel %vm485, %v1928, 0.0
    %v2097 = vsel %vm486, %v1929, 0.0
    %v2098 = vsel %vm487, %v1930, 0.0
    %v2099 = vsel %vm488, %v1931, 0.0
    %v2100 = vsel %vm489, %v1932, 0.0
    %v2101 = vsel %vm490, %v1933, 0.0
    %v2102 = vsel %vm491, %v1934, 0.0
    %v2103 = vsel %vm492, %v1935, 0.0
    %v2104 = vsel %vm493, %v1936, 0.0
    %v2105 = vsel %vm494, %v1937, 0.0
    %v2106 = vsel %vm495, %v1938, 0.0
    %v2107 = vsel %vm496, %v1939, 0.0
    %v2108 = vsel %vm497, %v1940, 0.0
    %v2109 = vsel %vm498, %v1941, 0.0
    %v2110 = vsel %vm499, %v1942, 0.0
    %v2111 = vsel %vm500, %v2011, 0.0
    %v2112 = vsel %vm501, %v2012, 0.0
    %v2113 = vsel %vm502, %v2081, 0.0
    %v2114 = vsel %vm503, %v2082, 0.0
    %2147 = vrot.lane.b32.xlu0 %v1879, 16
    %v2148 = vpop.permute.xlu0 %2147
    %2149 = vrot.lane.b32.xlu0 %v1880, 16
    %v2150 = vpop.permute.xlu0 %2149
    %2151 = vrot.lane.b32.xlu0 %v1881, 16
    %v2152 = vpop.permute.xlu0 %2151
    %2153 = vrot.lane.b32.xlu0 %v1882, 16
    %v2154 = vpop.permute.xlu0 %2153
    %2155 = vrot.lane.b32.xlu0 %v1883, 16
    %v2156 = vpop.permute.xlu0 %2155
    %2157 = vrot.lane.b32.xlu0 %v1884, 16
    %v2158 = vpop.permute.xlu0 %2157
    %2159 = vrot.lane.b32.xlu0 %v1885, 16
    %v2160 = vpop.permute.xlu0 %2159
    %2161 = vrot.lane.b32.xlu0 %v1886, 16
    %v2162 = vpop.permute.xlu0 %2161
    %2163 = vrot.lane.b32.xlu0 %v1887, 16
    %v2164 = vpop.permute.xlu0 %2163
    %2165 = vrot.lane.b32.xlu0 %v1888, 16
    %v2166 = vpop.permute.xlu0 %2165
    %2167 = vrot.lane.b32.xlu0 %v1889, 16
    %v2168 = vpop.permute.xlu0 %2167
    %2169 = vrot.lane.b32.xlu0 %v1890, 16
    %v2170 = vpop.permute.xlu0 %2169
    %2171 = vrot.lane.b32.xlu0 %v1891, 16
    %v2172 = vpop.permute.xlu0 %2171
    %2173 = vrot.lane.b32.xlu0 %v1892, 16
    %v2174 = vpop.permute.xlu0 %2173
    %2175 = vrot.lane.b32.xlu0 %v1893, 16
    %v2176 = vpop.permute.xlu0 %2175
    %2177 = vrot.lane.b32.xlu0 %v1894, 16
    %v2178 = vpop.permute.xlu0 %2177
    %2179 = vrot.lane.b32.xlu0 %v1895, 16
    %v2180 = vpop.permute.xlu0 %2179
    %2181 = vrot.lane.b32.xlu0 %v1896, 16
    %v2182 = vpop.permute.xlu0 %2181
    %2183 = vrot.lane.b32.xlu0 %v1897, 16
    %v2184 = vpop.permute.xlu0 %2183
    %2185 = vrot.lane.b32.xlu0 %v1898, 16
    %v2186 = vpop.permute.xlu0 %2185
    %2187 = vrot.lane.b32.xlu0 %v1899, 16
    %v2188 = vpop.permute.xlu0 %2187
    %2189 = vrot.lane.b32.xlu0 %v1900, 16
    %v2190 = vpop.permute.xlu0 %2189
    %2191 = vrot.lane.b32.xlu0 %v1901, 16
    %v2192 = vpop.permute.xlu0 %2191
    %2193 = vrot.lane.b32.xlu0 %v1902, 16
    %v2194 = vpop.permute.xlu0 %2193
    %2195 = vrot.lane.b32.xlu0 %v1903, 16
    %v2196 = vpop.permute.xlu0 %2195
    %2197 = vrot.lane.b32.xlu0 %v1904, 16
    %v2198 = vpop.permute.xlu0 %2197
    %2199 = vrot.lane.b32.xlu0 %v1905, 16
    %v2200 = vpop.permute.xlu0 %2199
    %2201 = vrot.lane.b32.xlu0 %v1906, 16
    %v2202 = vpop.permute.xlu0 %2201
    %2203 = vrot.lane.b32.xlu0 %v1907, 16
    %v2204 = vpop.permute.xlu0 %2203
    %2205 = vrot.lane.b32.xlu0 %v1908, 16
    %v2206 = vpop.permute.xlu0 %2205
    %2207 = vrot.lane.b32.xlu0 %v1909, 16
    %v2208 = vpop.permute.xlu0 %2207
    %2209 = vrot.lane.b32.xlu0 %v1910, 16
    %v2210 = vpop.permute.xlu0 %2209
    %2275 = vrot.lane.b32.xlu0 %v1943, 32
    %v2276 = vpop.permute.xlu0 %2275
    %2277 = vrot.lane.b32.xlu0 %v1944, 32
    %v2278 = vpop.permute.xlu0 %2277
    %2279 = vrot.lane.b32.xlu0 %v1945, 32
    %v2280 = vpop.permute.xlu0 %2279
    %2281 = vrot.lane.b32.xlu0 %v1946, 32
    %v2282 = vpop.permute.xlu0 %2281
    %2283 = vrot.lane.b32.xlu0 %v1947, 32
    %v2284 = vpop.permute.xlu0 %2283
    %2285 = vrot.lane.b32.xlu0 %v1948, 32
    %v2286 = vpop.permute.xlu0 %2285
    %2287 = vrot.lane.b32.xlu0 %v1949, 32
    %v2288 = vpop.permute.xlu0 %2287
    %2289 = vrot.lane.b32.xlu0 %v1950, 32
    %v2290 = vpop.permute.xlu0 %2289
    %2291 = vrot.lane.b32.xlu0 %v1951, 32
    %v2292 = vpop.permute.xlu0 %2291
    %2293 = vrot.lane.b32.xlu0 %v1952, 32
    %v2294 = vpop.permute.xlu0 %2293
    %2295 = vrot.lane.b32.xlu0 %v1953, 32
    %v2296 = vpop.permute.xlu0 %2295
    %2297 = vrot.lane.b32.xlu0 %v1954, 32
    %v2298 = vpop.permute.xlu0 %2297
    %2299 = vrot.lane.b32.xlu0 %v1955, 32
    %v2300 = vpop.permute.xlu0 %2299
    %2301 = vrot.lane.b32.xlu0 %v1956, 32
    %v2302 = vpop.permute.xlu0 %2301
    %2303 = vrot.lane.b32.xlu0 %v1957, 32
    %v2304 = vpop.permute.xlu0 %2303
    %2305 = vrot.lane.b32.xlu0 %v1958, 32
    %v2306 = vpop.permute.xlu0 %2305
    %2307 = vrot.lane.b32.xlu0 %v1959, 32
    %v2308 = vpop.permute.xlu0 %2307
    %2309 = vrot.lane.b32.xlu0 %v1960, 32
    %v2310 = vpop.permute.xlu0 %2309
    %2311 = vrot.lane.b32.xlu0 %v1961, 32
    %v2312 = vpop.permute.xlu0 %2311
    %2313 = vrot.lane.b32.xlu0 %v1962, 32
    %v2314 = vpop.permute.xlu0 %2313
    %2315 = vrot.lane.b32.xlu0 %v1963, 32
    %v2316 = vpop.permute.xlu0 %2315
    %2317 = vrot.lane.b32.xlu0 %v1964, 32
    %v2318 = vpop.permute.xlu0 %2317
    %2319 = vrot.lane.b32.xlu0 %v1965, 32
    %v2320 = vpop.permute.xlu0 %2319
    %2321 = vrot.lane.b32.xlu0 %v1966, 32
    %v2322 = vpop.permute.xlu0 %2321
    %2323 = vrot.lane.b32.xlu0 %v1967, 32
    %v2324 = vpop.permute.xlu0 %2323
    %2325 = vrot.lane.b32.xlu0 %v1968, 32
    %v2326 = vpop.permute.xlu0 %2325
    %2327 = vrot.lane.b32.xlu0 %v1969, 32
    %v2328 = vpop.permute.xlu0 %2327
    %2329 = vrot.lane.b32.xlu0 %v1970, 32
    %v2330 = vpop.permute.xlu0 %2329
    %2331 = vrot.lane.b32.xlu0 %v1971, 32
    %v2332 = vpop.permute.xlu0 %2331
    %2333 = vrot.lane.b32.xlu0 %v1972, 32
    %v2334 = vpop.permute.xlu0 %2333
    %2335 = vrot.lane.b32.xlu0 %v1973, 32
    %v2336 = vpop.permute.xlu0 %2335
    %2337 = vrot.lane.b32.xlu0 %v1974, 32
    %v2338 = vpop.permute.xlu0 %2337
    %2403 = vrot.lane.b32.xlu0 %v1977, 48
    %v2404 = vpop.permute.xlu0 %2403
    %2405 = vrot.lane.b32.xlu0 %v1978, 48
    %v2406 = vpop.permute.xlu0 %2405
    %2407 = vrot.lane.b32.xlu0 %v1979, 48
    %v2408 = vpop.permute.xlu0 %2407
    %2409 = vrot.lane.b32.xlu0 %v1980, 48
    %v2410 = vpop.permute.xlu0 %2409
    %2411 = vrot.lane.b32.xlu0 %v1981, 48
    %v2412 = vpop.permute.xlu0 %2411
    %2413 = vrot.lane.b32.xlu0 %v1982, 48
    %v2414 = vpop.permute.xlu0 %2413
    %2415 = vrot.lane.b32.xlu0 %v1983, 48
    %v2416 = vpop.permute.xlu0 %2415
    %2417 = vrot.lane.b32.xlu0 %v1984, 48
    %v2418 = vpop.permute.xlu0 %2417
    %2419 = vrot.lane.b32.xlu0 %v1985, 48
    %v2420 = vpop.permute.xlu0 %2419
    %2421 = vrot.lane.b32.xlu0 %v1986, 48
    %v2422 = vpop.permute.xlu0 %2421
    %2423 = vrot.lane.b32.xlu0 %v1987, 48
    %v2424 = vpop.permute.xlu0 %2423
    %2425 = vrot.lane.b32.xlu0 %v1988, 48
    %v2426 = vpop.permute.xlu0 %2425
    %2427 = vrot.lane.b32.xlu0 %v1989, 48
    %v2428 = vpop.permute.xlu0 %2427
    %2429 = vrot.lane.b32.xlu0 %v1990, 48
    %v2430 = vpop.permute.xlu0 %2429
    %2431 = vrot.lane.b32.xlu0 %v1991, 48
    %v2432 = vpop.permute.xlu0 %2431
    %2433 = vrot.lane.b32.xlu0 %v1992, 48
    %v2434 = vpop.permute.xlu0 %2433
    %2435 = vrot.lane.b32.xlu0 %v1993, 48
    %v2436 = vpop.permute.xlu0 %2435
    %2437 = vrot.lane.b32.xlu0 %v1994, 48
    %v2438 = vpop.permute.xlu0 %2437
    %2439 = vrot.lane.b32.xlu0 %v1995, 48
    %v2440 = vpop.permute.xlu0 %2439
    %2441 = vrot.lane.b32.xlu0 %v1996, 48
    %v2442 = vpop.permute.xlu0 %2441
    %2443 = vrot.lane.b32.xlu0 %v1997, 48
    %v2444 = vpop.permute.xlu0 %2443
    %2445 = vrot.lane.b32.xlu0 %v1998, 48
    %v2446 = vpop.permute.xlu0 %2445
    %2447 = vrot.lane.b32.xlu0 %v1999, 48
    %v2448 = vpop.permute.xlu0 %2447
    %2449 = vrot.lane.b32.xlu0 %v2000, 48
    %v2450 = vpop.permute.xlu0 %2449
    %2451 = vrot.lane.b32.xlu0 %v2001, 48
    %v2452 = vpop.permute.xlu0 %2451
    %2453 = vrot.lane.b32.xlu0 %v2002, 48
    %v2454 = vpop.permute.xlu0 %2453
    %2455 = vrot.lane.b32.xlu0 %v2003, 48
    %v2456 = vpop.permute.xlu0 %2455
    %2457 = vrot.lane.b32.xlu0 %v2004, 48
    %v2458 = vpop.permute.xlu0 %2457
    %2459 = vrot.lane.b32.xlu0 %v2005, 48
    %v2460 = vpop.permute.xlu0 %2459
    %2461 = vrot.lane.b32.xlu0 %v2006, 48
    %v2462 = vpop.permute.xlu0 %2461
    %2463 = vrot.lane.b32.xlu0 %v2007, 48
    %v2464 = vpop.permute.xlu0 %2463
    %2465 = vrot.lane.b32.xlu0 %v2008, 48
    %v2466 = vpop.permute.xlu0 %2465
    %2501 = vrot.lane.b32.xlu0 %v1881, 64
    %v2502 = vpop.permute.xlu0 %2501
    %2503 = vrot.lane.b32.xlu0 %v1882, 64
    %v2504 = vpop.permute.xlu0 %2503
    %2505 = vrot.lane.b32.xlu0 %v1883, 64
    %v2506 = vpop.permute.xlu0 %2505
    %2507 = vrot.lane.b32.xlu0 %v1884, 64
    %v2508 = vpop.permute.xlu0 %2507
    %2509 = vrot.lane.b32.xlu0 %v1885, 64
    %v2510 = vpop.permute.xlu0 %2509
    %2511 = vrot.lane.b32.xlu0 %v1886, 64
    %v2512 = vpop.permute.xlu0 %2511
    %2513 = vrot.lane.b32.xlu0 %v1887, 64
    %v2514 = vpop.permute.xlu0 %2513
    %2515 = vrot.lane.b32.xlu0 %v1888, 64
    %v2516 = vpop.permute.xlu0 %2515
    %2517 = vrot.lane.b32.xlu0 %v1889, 64
    %v2518 = vpop.permute.xlu0 %2517
    %2519 = vrot.lane.b32.xlu0 %v1890, 64
    %v2520 = vpop.permute.xlu0 %2519
    %2521 = vrot.lane.b32.xlu0 %v1891, 64
    %v2522 = vpop.permute.xlu0 %2521
    %2523 = vrot.lane.b32.xlu0 %v1892, 64
    %v2524 = vpop.permute.xlu0 %2523
    %2525 = vrot.lane.b32.xlu0 %v1893, 64
    %v2526 = vpop.permute.xlu0 %2525
    %2527 = vrot.lane.b32.xlu0 %v1894, 64
    %v2528 = vpop.permute.xlu0 %2527
    %2529 = vrot.lane.b32.xlu0 %v1895, 64
    %v2530 = vpop.permute.xlu0 %2529
    %2531 = vrot.lane.b32.xlu0 %v1896, 64
    %v2532 = vpop.permute.xlu0 %2531
    %2533 = vrot.lane.b32.xlu0 %v1897, 64
    %v2534 = vpop.permute.xlu0 %2533
    %2535 = vrot.lane.b32.xlu0 %v1898, 64
    %v2536 = vpop.permute.xlu0 %2535
    %2537 = vrot.lane.b32.xlu0 %v1899, 64
    %v2538 = vpop.permute.xlu0 %2537
    %2539 = vrot.lane.b32.xlu0 %v1900, 64
    %v2540 = vpop.permute.xlu0 %2539
    %2541 = vrot.lane.b32.xlu0 %v1901, 64
    %v2542 = vpop.permute.xlu0 %2541
    %2543 = vrot.lane.b32.xlu0 %v1902, 64
    %v2544 = vpop.permute.xlu0 %2543
    %2545 = vrot.lane.b32.xlu0 %v1903, 64
    %v2546 = vpop.permute.xlu0 %2545
    %2547 = vrot.lane.b32.xlu0 %v1904, 64
    %v2548 = vpop.permute.xlu0 %2547
    %2549 = vrot.lane.b32.xlu0 %v1905, 64
    %v2550 = vpop.permute.xlu0 %2549
    %2551 = vrot.lane.b32.xlu0 %v1906, 64
    %v2552 = vpop.permute.xlu0 %2551
    %2553 = vrot.lane.b32.xlu0 %v1907, 64
    %v2554 = vpop.permute.xlu0 %2553
    %2555 = vrot.lane.b32.xlu0 %v1908, 64
    %v2556 = vpop.permute.xlu0 %2555
    %2557 = vrot.lane.b32.xlu0 %v1909, 64
    %v2558 = vpop.permute.xlu0 %2557
    %2559 = vrot.lane.b32.xlu0 %v1910, 64
    %v2560 = vpop.permute.xlu0 %2559
    %2561 = vrot.lane.b32.xlu0 %v2009, 64
    %v2562 = vpop.permute.xlu0 %2561
    %2563 = vrot.lane.b32.xlu0 %v2010, 64
    %v2564 = vpop.permute.xlu0 %2563
    %2629 = vrot.lane.b32.xlu0 %v2013, 80
    %v2630 = vpop.permute.xlu0 %2629
    %2631 = vrot.lane.b32.xlu0 %v2014, 80
    %v2632 = vpop.permute.xlu0 %2631
    %2633 = vrot.lane.b32.xlu0 %v2015, 80
    %v2634 = vpop.permute.xlu0 %2633
    %2635 = vrot.lane.b32.xlu0 %v2016, 80
    %v2636 = vpop.permute.xlu0 %2635
    %2637 = vrot.lane.b32.xlu0 %v2017, 80
    %v2638 = vpop.permute.xlu0 %2637
    %2639 = vrot.lane.b32.xlu0 %v2018, 80
    %v2640 = vpop.permute.xlu0 %2639
    %2641 = vrot.lane.b32.xlu0 %v2019, 80
    %v2642 = vpop.permute.xlu0 %2641
    %2643 = vrot.lane.b32.xlu0 %v2020, 80
    %v2644 = vpop.permute.xlu0 %2643
    %2645 = vrot.lane.b32.xlu0 %v2021, 80
    %v2646 = vpop.permute.xlu0 %2645
    %2647 = vrot.lane.b32.xlu0 %v2022, 80
    %v2648 = vpop.permute.xlu0 %2647
    %2649 = vrot.lane.b32.xlu0 %v2023, 80
    %v2650 = vpop.permute.xlu0 %2649
    %2651 = vrot.lane.b32.xlu0 %v2024, 80
    %v2652 = vpop.permute.xlu0 %2651
    %2653 = vrot.lane.b32.xlu0 %v2025, 80
    %v2654 = vpop.permute.xlu0 %2653
    %2655 = vrot.lane.b32.xlu0 %v2026, 80
    %v2656 = vpop.permute.xlu0 %2655
    %2657 = vrot.lane.b32.xlu0 %v2027, 80
    %v2658 = vpop.permute.xlu0 %2657
    %2659 = vrot.lane.b32.xlu0 %v2028, 80
    %v2660 = vpop.permute.xlu0 %2659
    %2661 = vrot.lane.b32.xlu0 %v2029, 80
    %v2662 = vpop.permute.xlu0 %2661
    %2663 = vrot.lane.b32.xlu0 %v2030, 80
    %v2664 = vpop.permute.xlu0 %2663
    %2665 = vrot.lane.b32.xlu0 %v2031, 80
    %v2666 = vpop.permute.xlu0 %2665
    %2667 = vrot.lane.b32.xlu0 %v2032, 80
    %v2668 = vpop.permute.xlu0 %2667
    %2669 = vrot.lane.b32.xlu0 %v2033, 80
    %v2670 = vpop.permute.xlu0 %2669
    %2671 = vrot.lane.b32.xlu0 %v2034, 80
    %v2672 = vpop.permute.xlu0 %2671
    %2673 = vrot.lane.b32.xlu0 %v2035, 80
    %v2674 = vpop.permute.xlu0 %2673
    %2675 = vrot.lane.b32.xlu0 %v2036, 80
    %v2676 = vpop.permute.xlu0 %2675
    %2677 = vrot.lane.b32.xlu0 %v2037, 80
    %v2678 = vpop.permute.xlu0 %2677
    %2679 = vrot.lane.b32.xlu0 %v2038, 80
    %v2680 = vpop.permute.xlu0 %2679
    %2681 = vrot.lane.b32.xlu0 %v2039, 80
    %v2682 = vpop.permute.xlu0 %2681
    %2683 = vrot.lane.b32.xlu0 %v2040, 80
    %v2684 = vpop.permute.xlu0 %2683
    %2685 = vrot.lane.b32.xlu0 %v2041, 80
    %v2686 = vpop.permute.xlu0 %2685
    %2687 = vrot.lane.b32.xlu0 %v2042, 80
    %v2688 = vpop.permute.xlu0 %2687
    %2689 = vrot.lane.b32.xlu0 %v2043, 80
    %v2690 = vpop.permute.xlu0 %2689
    %2691 = vrot.lane.b32.xlu0 %v2044, 80
    %v2692 = vpop.permute.xlu0 %2691
    %2757 = vrot.lane.b32.xlu0 %v2047, 96
    %v2758 = vpop.permute.xlu0 %2757
    %2759 = vrot.lane.b32.xlu0 %v2048, 96
    %v2760 = vpop.permute.xlu0 %2759
    %2761 = vrot.lane.b32.xlu0 %v2049, 96
    %v2762 = vpop.permute.xlu0 %2761
    %2763 = vrot.lane.b32.xlu0 %v2050, 96
    %v2764 = vpop.permute.xlu0 %2763
    %2765 = vrot.lane.b32.xlu0 %v2051, 96
    %v2766 = vpop.permute.xlu0 %2765
    %2767 = vrot.lane.b32.xlu0 %v2052, 96
    %v2768 = vpop.permute.xlu0 %2767
    %2769 = vrot.lane.b32.xlu0 %v2053, 96
    %v2770 = vpop.permute.xlu0 %2769
    %2771 = vrot.lane.b32.xlu0 %v2054, 96
    %v2772 = vpop.permute.xlu0 %2771
    %2773 = vrot.lane.b32.xlu0 %v2055, 96
    %v2774 = vpop.permute.xlu0 %2773
    %2775 = vrot.lane.b32.xlu0 %v2056, 96
    %v2776 = vpop.permute.xlu0 %2775
    %2777 = vrot.lane.b32.xlu0 %v2057, 96
    %v2778 = vpop.permute.xlu0 %2777
    %2779 = vrot.lane.b32.xlu0 %v2058, 96
    %v2780 = vpop.permute.xlu0 %2779
    %2781 = vrot.lane.b32.xlu0 %v2059, 96
    %v2782 = vpop.permute.xlu0 %2781
    %2783 = vrot.lane.b32.xlu0 %v2060, 96
    %v2784 = vpop.permute.xlu0 %2783
    %2785 = vrot.lane.b32.xlu0 %v2061, 96
    %v2786 = vpop.permute.xlu0 %2785
    %2787 = vrot.lane.b32.xlu0 %v2062, 96
    %v2788 = vpop.permute.xlu0 %2787
    %2789 = vrot.lane.b32.xlu0 %v2063, 96
    %v2790 = vpop.permute.xlu0 %2789
    %2791 = vrot.lane.b32.xlu0 %v2064, 96
    %v2792 = vpop.permute.xlu0 %2791
    %2793 = vrot.lane.b32.xlu0 %v2065, 96
    %v2794 = vpop.permute.xlu0 %2793
    %2795 = vrot.lane.b32.xlu0 %v2066, 96
    %v2796 = vpop.permute.xlu0 %2795
    %2797 = vrot.lane.b32.xlu0 %v2067, 96
    %v2798 = vpop.permute.xlu0 %2797
    %2799 = vrot.lane.b32.xlu0 %v2068, 96
    %v2800 = vpop.permute.xlu0 %2799
    %2801 = vrot.lane.b32.xlu0 %v2069, 96
    %v2802 = vpop.permute.xlu0 %2801
    %2803 = vrot.lane.b32.xlu0 %v2070, 96
    %v2804 = vpop.permute.xlu0 %2803
    %2805 = vrot.lane.b32.xlu0 %v2071, 96
    %v2806 = vpop.permute.xlu0 %2805
    %2807 = vrot.lane.b32.xlu0 %v2072, 96
    %v2808 = vpop.permute.xlu0 %2807
    %2809 = vrot.lane.b32.xlu0 %v2073, 96
    %v2810 = vpop.permute.xlu0 %2809
    %2811 = vrot.lane.b32.xlu0 %v2074, 96
    %v2812 = vpop.permute.xlu0 %2811
    %2813 = vrot.lane.b32.xlu0 %v2075, 96
    %v2814 = vpop.permute.xlu0 %2813
    %2815 = vrot.lane.b32.xlu0 %v2076, 96
    %v2816 = vpop.permute.xlu0 %2815
    %2817 = vrot.lane.b32.xlu0 %v2077, 96
    %v2818 = vpop.permute.xlu0 %2817
    %2819 = vrot.lane.b32.xlu0 %v2078, 96
    %v2820 = vpop.permute.xlu0 %2819
    %2855 = vrot.lane.b32.xlu0 %v1883, 112
    %v2856 = vpop.permute.xlu0 %2855
    %2857 = vrot.lane.b32.xlu0 %v1884, 112
    %v2858 = vpop.permute.xlu0 %2857
    %2859 = vrot.lane.b32.xlu0 %v1885, 112
    %v2860 = vpop.permute.xlu0 %2859
    %2861 = vrot.lane.b32.xlu0 %v1886, 112
    %v2862 = vpop.permute.xlu0 %2861
    %2863 = vrot.lane.b32.xlu0 %v1887, 112
    %v2864 = vpop.permute.xlu0 %2863
    %2865 = vrot.lane.b32.xlu0 %v1888, 112
    %v2866 = vpop.permute.xlu0 %2865
    %2867 = vrot.lane.b32.xlu0 %v1889, 112
    %v2868 = vpop.permute.xlu0 %2867
    %2869 = vrot.lane.b32.xlu0 %v1890, 112
    %v2870 = vpop.permute.xlu0 %2869
    %2871 = vrot.lane.b32.xlu0 %v1891, 112
    %v2872 = vpop.permute.xlu0 %2871
    %2873 = vrot.lane.b32.xlu0 %v1892, 112
    %v2874 = vpop.permute.xlu0 %2873
    %2875 = vrot.lane.b32.xlu0 %v1893, 112
    %v2876 = vpop.permute.xlu0 %2875
    %2877 = vrot.lane.b32.xlu0 %v1894, 112
    %v2878 = vpop.permute.xlu0 %2877
    %2879 = vrot.lane.b32.xlu0 %v1895, 112
    %v2880 = vpop.permute.xlu0 %2879
    %2881 = vrot.lane.b32.xlu0 %v1896, 112
    %v2882 = vpop.permute.xlu0 %2881
    %2883 = vrot.lane.b32.xlu0 %v1897, 112
    %v2884 = vpop.permute.xlu0 %2883
    %2885 = vrot.lane.b32.xlu0 %v1898, 112
    %v2886 = vpop.permute.xlu0 %2885
    %2887 = vrot.lane.b32.xlu0 %v1899, 112
    %v2888 = vpop.permute.xlu0 %2887
    %2889 = vrot.lane.b32.xlu0 %v1900, 112
    %v2890 = vpop.permute.xlu0 %2889
    %2891 = vrot.lane.b32.xlu0 %v1901, 112
    %v2892 = vpop.permute.xlu0 %2891
    %2893 = vrot.lane.b32.xlu0 %v1902, 112
    %v2894 = vpop.permute.xlu0 %2893
    %2895 = vrot.lane.b32.xlu0 %v1903, 112
    %v2896 = vpop.permute.xlu0 %2895
    %2897 = vrot.lane.b32.xlu0 %v1904, 112
    %v2898 = vpop.permute.xlu0 %2897
    %2899 = vrot.lane.b32.xlu0 %v1905, 112
    %v2900 = vpop.permute.xlu0 %2899
    %2901 = vrot.lane.b32.xlu0 %v1906, 112
    %v2902 = vpop.permute.xlu0 %2901
    %2903 = vrot.lane.b32.xlu0 %v1907, 112
    %v2904 = vpop.permute.xlu0 %2903
    %2905 = vrot.lane.b32.xlu0 %v1908, 112
    %v2906 = vpop.permute.xlu0 %2905
    %2907 = vrot.lane.b32.xlu0 %v1909, 112
    %v2908 = vpop.permute.xlu0 %2907
    %2909 = vrot.lane.b32.xlu0 %v1910, 112
    %v2910 = vpop.permute.xlu0 %2909
    %2911 = vrot.lane.b32.xlu0 %v2009, 112
    %v2912 = vpop.permute.xlu0 %2911
    %2913 = vrot.lane.b32.xlu0 %v2010, 112
    %v2914 = vpop.permute.xlu0 %2913
    %2915 = vrot.lane.b32.xlu0 %v2079, 112
    %v2916 = vpop.permute.xlu0 %2915
    %2917 = vrot.lane.b32.xlu0 %v2080, 112
    %v2918 = vpop.permute.xlu0 %2917
    %v2951 = vsel %vm16, %v1847, %v2148
    %v2952 = vsel %vm16, %v1848, %v2150
    %v2953 = vsel %vm16, %v1849, %v2152
    %v2954 = vsel %vm16, %v1850, %v2154
    %v2955 = vsel %vm16, %v1851, %v2156
    %v2956 = vsel %vm16, %v1852, %v2158
    %v2957 = vsel %vm16, %v1853, %v2160
    %v2958 = vsel %vm16, %v1854, %v2162
    %v2959 = vsel %vm16, %v1855, %v2164
    %v2960 = vsel %vm16, %v1856, %v2166
    %v2961 = vsel %vm16, %v1857, %v2168
    %v2962 = vsel %vm16, %v1858, %v2170
    %v2963 = vsel %vm16, %v1859, %v2172
    %v2964 = vsel %vm16, %v1860, %v2174
    %v2965 = vsel %vm16, %v1861, %v2176
    %v2966 = vsel %vm16, %v1862, %v2178
    %v2967 = vsel %vm16, %v1863, %v2180
    %v2968 = vsel %vm16, %v1864, %v2182
    %v2969 = vsel %vm16, %v1865, %v2184
    %v2970 = vsel %vm16, %v1866, %v2186
    %v2971 = vsel %vm16, %v1867, %v2188
    %v2972 = vsel %vm16, %v1868, %v2190
    %v2973 = vsel %vm16, %v1869, %v2192
    %v2974 = vsel %vm16, %v1870, %v2194
    %v2975 = vsel %vm16, %v1871, %v2196
    %v2976 = vsel %vm16, %v1872, %v2198
    %v2977 = vsel %vm16, %v1873, %v2200
    %v2978 = vsel %vm16, %v1874, %v2202
    %v2979 = vsel %vm16, %v1875, %v2204
    %v2980 = vsel %vm16, %v1876, %v2206
    %v2981 = vsel %vm16, %v1877, %v2208
    %v2982 = vsel %vm16, %v1878, %v2210
    %v2983 = vsel %vm569, %v2951, %v2276
    %v2984 = vsel %vm569, %v2952, %v2278
    %v2985 = vsel %vm569, %v2953, %v2280
    %v2986 = vsel %vm569, %v2954, %v2282
    %v2987 = vsel %vm569, %v2955, %v2284
    %v2988 = vsel %vm569, %v2956, %v2286
    %v2989 = vsel %vm569, %v2957, %v2288
    %v2990 = vsel %vm569, %v2958, %v2290
    %v2991 = vsel %vm569, %v2959, %v2292
    %v2992 = vsel %vm569, %v2960, %v2294
    %v2993 = vsel %vm569, %v2961, %v2296
    %v2994 = vsel %vm569, %v2962, %v2298
    %v2995 = vsel %vm569, %v2963, %v2300
    %v2996 = vsel %vm569, %v2964, %v2302
    %v2997 = vsel %vm569, %v2965, %v2304
    %v2998 = vsel %vm569, %v2966, %v2306
    %v2999 = vsel %vm569, %v2967, %v2308
    %v3000 = vsel %vm569, %v2968, %v2310
    %v3001 = vsel %vm569, %v2969, %v2312
    %v3002 = vsel %vm569, %v2970, %v2314
    %v3003 = vsel %vm569, %v2971, %v2316
    %v3004 = vsel %vm569, %v2972, %v2318
    %v3005 = vsel %vm569, %v2973, %v2320
    %v3006 = vsel %vm569, %v2974, %v2322
    %v3007 = vsel %vm569, %v2975, %v2324
    %v3008 = vsel %vm569, %v2976, %v2326
    %v3009 = vsel %vm569, %v2977, %v2328
    %v3010 = vsel %vm569, %v2978, %v2330
    %v3011 = vsel %vm569, %v2979, %v2332
    %v3012 = vsel %vm569, %v2980, %v2334
    %v3013 = vsel %vm569, %v2981, %v2336
    %v3014 = vsel %vm569, %v2982, %v2338
    %vm3015 = vcmask 392192
    %v3016 = vsel %vm3015, %v2983, %v2404
    %v3017 = vsel %vm3015, %v2984, %v2406
    %v3018 = vsel %vm3015, %v2985, %v2408
    %v3019 = vsel %vm3015, %v2986, %v2410
    %v3020 = vsel %vm3015, %v2987, %v2412
    %v3021 = vsel %vm3015, %v2988, %v2414
    %v3022 = vsel %vm3015, %v2989, %v2416
    %v3023 = vsel %vm3015, %v2990, %v2418
    %v3024 = vsel %vm3015, %v2991, %v2420
    %v3025 = vsel %vm3015, %v2992, %v2422
    %v3026 = vsel %vm3015, %v2993, %v2424
    %v3027 = vsel %vm3015, %v2994, %v2426
    %v3028 = vsel %vm3015, %v2995, %v2428
    %v3029 = vsel %vm3015, %v2996, %v2430
    %v3030 = vsel %vm3015, %v2997, %v2432
    %v3031 = vsel %vm3015, %v2998, %v2434
    %v3032 = vsel %vm3015, %v2999, %v2436
    %v3033 = vsel %vm3015, %v3000, %v2438
    %v3034 = vsel %vm3015, %v3001, %v2440
    %v3035 = vsel %vm3015, %v3002, %v2442
    %v3036 = vsel %vm3015, %v3003, %v2444
    %v3037 = vsel %vm3015, %v3004, %v2446
    %v3038 = vsel %vm3015, %v3005, %v2448
    %v3039 = vsel %vm3015, %v3006, %v2450
    %v3040 = vsel %vm3015, %v3007, %v2452
    %v3041 = vsel %vm3015, %v3008, %v2454
    %v3042 = vsel %vm3015, %v3009, %v2456
    %v3043 = vsel %vm3015, %v3010, %v2458
    %v3044 = vsel %vm3015, %v3011, %v2460
    %v3045 = vsel %vm3015, %v3012, %v2462
    %v3046 = vsel %vm3015, %v3013, %v2464
    %v3047 = vsel %vm3015, %v3014, %v2466
    %vm3048 = vcmask 523264
    %v3049 = vsel %vm3048, %v3016, %v2502
    %v3050 = vsel %vm3048, %v3017, %v2504
    %v3051 = vsel %vm3048, %v3018, %v2506
    %v3052 = vsel %vm3048, %v3019, %v2508
    %v3053 = vsel %vm3048, %v3020, %v2510
    %v3054 = vsel %vm3048, %v3021, %v2512
    %v3055 = vsel %vm3048, %v3022, %v2514
    %v3056 = vsel %vm3048, %v3023, %v2516
    %v3057 = vsel %vm3048, %v3024, %v2518
    %v3058 = vsel %vm3048, %v3025, %v2520
    %v3059 = vsel %vm3048, %v3026, %v2522
    %v3060 = vsel %vm3048, %v3027, %v2524
    %v3061 = vsel %vm3048, %v3028, %v2526
    %v3062 = vsel %vm3048, %v3029, %v2528
    %v3063 = vsel %vm3048, %v3030, %v2530
    %v3064 = vsel %vm3048, %v3031, %v2532
    %v3065 = vsel %vm3048, %v3032, %v2534
    %v3066 = vsel %vm3048, %v3033, %v2536
    %v3067 = vsel %vm3048, %v3034, %v2538
    %v3068 = vsel %vm3048, %v3035, %v2540
    %v3069 = vsel %vm3048, %v3036, %v2542
    %v3070 = vsel %vm3048, %v3037, %v2544
    %v3071 = vsel %vm3048, %v3038, %v2546
    %v3072 = vsel %vm3048, %v3039, %v2548
    %v3073 = vsel %vm3048, %v3040, %v2550
    %v3074 = vsel %vm3048, %v3041, %v2552
    %v3075 = vsel %vm3048, %v3042, %v2554
    %v3076 = vsel %vm3048, %v3043, %v2556
    %v3077 = vsel %vm3048, %v3044, %v2558
    %v3078 = vsel %vm3048, %v3045, %v2560
    %v3079 = vsel %vm3048, %v3046, %v2562
    %v3080 = vsel %vm3048, %v3047, %v2564
    %vm3081 = vcmask 654336
    %v3082 = vsel %vm3081, %v3049, %v2630
    %v3083 = vsel %vm3081, %v3050, %v2632
    %v3084 = vsel %vm3081, %v3051, %v2634
    %v3085 = vsel %vm3081, %v3052, %v2636
    %v3086 = vsel %vm3081, %v3053, %v2638
    %v3087 = vsel %vm3081, %v3054, %v2640
    %v3088 = vsel %vm3081, %v3055, %v2642
    %v3089 = vsel %vm3081, %v3056, %v2644
    %v3090 = vsel %vm3081, %v3057, %v2646
    %v3091 = vsel %vm3081, %v3058, %v2648
    %v3092 = vsel %vm3081, %v3059, %v2650
    %v3093 = vsel %vm3081, %v3060, %v2652
    %v3094 = vsel %vm3081, %v3061, %v2654
    %v3095 = vsel %vm3081, %v3062, %v2656
    %v3096 = vsel %vm3081, %v3063, %v2658
    %v3097 = vsel %vm3081, %v3064, %v2660
    %v3098 = vsel %vm3081, %v3065, %v2662
    %v3099 = vsel %vm3081, %v3066, %v2664
    %v3100 = vsel %vm3081, %v3067, %v2666
    %v3101 = vsel %vm3081, %v3068, %v2668
    %v3102 = vsel %vm3081, %v3069, %v2670
    %v3103 = vsel %vm3081, %v3070, %v2672
    %v3104 = vsel %vm3081, %v3071, %v2674
    %v3105 = vsel %vm3081, %v3072, %v2676
    %v3106 = vsel %vm3081, %v3073, %v2678
    %v3107 = vsel %vm3081, %v3074, %v2680
    %v3108 = vsel %vm3081, %v3075, %v2682
    %v3109 = vsel %vm3081, %v3076, %v2684
    %v3110 = vsel %vm3081, %v3077, %v2686
    %v3111 = vsel %vm3081, %v3078, %v2688
    %v3112 = vsel %vm3081, %v3079, %v2690
    %v3113 = vsel %vm3081, %v3080, %v2692
    %vm3114 = vcmask 785408
    %v3115 = vsel %vm3114, %v3082, %v2758
    %v3116 = vsel %vm3114, %v3083, %v2760
    %v3117 = vsel %vm3114, %v3084, %v2762
    %v3118 = vsel %vm3114, %v3085, %v2764
    %v3119 = vsel %vm3114, %v3086, %v2766
    %v3120 = vsel %vm3114, %v3087, %v2768
    %v3121 = vsel %vm3114, %v3088, %v2770
    %v3122 = vsel %vm3114, %v3089, %v2772
    %v3123 = vsel %vm3114, %v3090, %v2774
    %v3124 = vsel %vm3114, %v3091, %v2776
    %v3125 = vsel %vm3114, %v3092, %v2778
    %v3126 = vsel %vm3114, %v3093, %v2780
    %v3127 = vsel %vm3114, %v3094, %v2782
    %v3128 = vsel %vm3114, %v3095, %v2784
    %v3129 = vsel %vm3114, %v3096, %v2786
    %v3130 = vsel %vm3114, %v3097, %v2788
    %v3131 = vsel %vm3114, %v3098, %v2790
    %v3132 = vsel %vm3114, %v3099, %v2792
    %v3133 = vsel %vm3114, %v3100, %v2794
    %v3134 = vsel %vm3114, %v3101, %v2796
    %v3135 = vsel %vm3114, %v3102, %v2798
    %v3136 = vsel %vm3114, %v3103, %v2800
    %v3137 = vsel %vm3114, %v3104, %v2802
    %v3138 = vsel %vm3114, %v3105, %v2804
    %v3139 = vsel %vm3114, %v3106, %v2806
    %v3140 = vsel %vm3114, %v3107, %v2808
    %v3141 = vsel %vm3114, %v3108, %v2810
    %v3142 = vsel %vm3114, %v3109, %v2812
    %v3143 = vsel %vm3114, %v3110, %v2814
    %v3144 = vsel %vm3114, %v3111, %v2816
    %v3145 = vsel %vm3114, %v3112, %v2818
    %v3146 = vsel %vm3114, %v3113, %v2820
    %vm3147 = vcmask 916480
    %v3148 = vsel %vm3147, %v3115, %v2856
    %v3149 = vsel %vm3147, %v3116, %v2858
    %v3150 = vsel %vm3147, %v3117, %v2860
    %v3151 = vsel %vm3147, %v3118, %v2862
    %v3152 = vsel %vm3147, %v3119, %v2864
    %v3153 = vsel %vm3147, %v3120, %v2866
    %v3154 = vsel %vm3147, %v3121, %v2868
    %v3155 = vsel %vm3147, %v3122, %v2870
    %v3156 = vsel %vm3147, %v3123, %v2872
    %v3157 = vsel %vm3147, %v3124, %v2874
    %v3158 = vsel %vm3147, %v3125, %v2876
    %v3159 = vsel %vm3147, %v3126, %v2878
    %v3160 = vsel %vm3147, %v3127, %v2880
    %v3161 = vsel %vm3147, %v3128, %v2882
    %v3162 = vsel %vm3147, %v3129, %v2884
    %v3163 = vsel %vm3147, %v3130, %v2886
    %v3164 = vsel %vm3147, %v3131, %v2888
    %v3165 = vsel %vm3147, %v3132, %v2890
    %v3166 = vsel %vm3147, %v3133, %v2892
    %v3167 = vsel %vm3147, %v3134, %v2894
    %v3168 = vsel %vm3147, %v3135, %v2896
    %v3169 = vsel %vm3147, %v3136, %v2898
    %v3170 = vsel %vm3147, %v3137, %v2900
    %v3171 = vsel %vm3147, %v3138, %v2902
    %v3172 = vsel %vm3147, %v3139, %v2904
    %v3173 = vsel %vm3147, %v3140, %v2906
    %v3174 = vsel %vm3147, %v3141, %v2908
    %v3175 = vsel %vm3147, %v3142, %v2910
    %v3176 = vsel %vm3147, %v3143, %v2912
    %v3177 = vsel %vm3147, %v3144, %v2914
    %v3178 = vsel %vm3147, %v3145, %v2916
    %v3179 = vsel %vm3147, %v3146, %v2918
    %v3180 = vpack.c.bf16 %v3149, %v3148
    %v3181 = vpack.c.bf16 %v2084, %v2083
    %v3182 = vpack.c.bf16 %v3151, %v3150
    %v3183 = vpack.c.bf16 %v2086, %v2085
    %v3184 = vpack.c.bf16 %v3153, %v3152
    %v3185 = vpack.c.bf16 %v2088, %v2087
    %v3186 = vpack.c.bf16 %v3155, %v3154
    %v3187 = vpack.c.bf16 %v2090, %v2089
    %v3188 = vpack.c.bf16 %v3157, %v3156
    %v3189 = vpack.c.bf16 %v2092, %v2091
    %v3190 = vpack.c.bf16 %v3159, %v3158
    %v3191 = vpack.c.bf16 %v2094, %v2093
    %v3192 = vpack.c.bf16 %v3161, %v3160
    %v3193 = vpack.c.bf16 %v2096, %v2095
    %v3194 = vpack.c.bf16 %v3163, %v3162
    %v3195 = vpack.c.bf16 %v2098, %v2097
    %v3196 = vpack.c.bf16 %v3165, %v3164
    %v3197 = vpack.c.bf16 %v2100, %v2099
    %v3198 = vpack.c.bf16 %v3167, %v3166
    %v3199 = vpack.c.bf16 %v2102, %v2101
    %v3200 = vpack.c.bf16 %v3169, %v3168
    %v3201 = vpack.c.bf16 %v2104, %v2103
    %v3202 = vpack.c.bf16 %v3171, %v3170
    %v3203 = vpack.c.bf16 %v2106, %v2105
    %v3204 = vpack.c.bf16 %v3173, %v3172
    %v3205 = vpack.c.bf16 %v2108, %v2107
    %v3206 = vpack.c.bf16 %v3175, %v3174
    %v3207 = vpack.c.bf16 %v2110, %v2109
    %v3208 = vpack.c.bf16 %v3177, %v3176
    %v3209 = vpack.c.bf16 %v2112, %v2111
    %v3210 = vpack.c.bf16 %v3179, %v3178
    %v3211 = vpack.c.bf16 %v2114, %v2113
    %v3212 = vld [vmem:[%s1 + $0x18] sm:$0xf]
    %v3213 = vld [vmem:[%s1 + $0x1c] sm:$0xf]
    %v3214 = vld [vmem:[%s1 + $0x20] sm:$0xf]
    %v3215 = vld [vmem:[%s1 + $0x24] sm:$0xf]
    %v3216 = vld [vmem:[%s1 + $0x28] sm:$0xf]
    %v3217 = vld [vmem:[%s1 + $0x2c] sm:$0xf]
    %v3218 = vld [vmem:[%s1 + $0x30] sm:$0xf]
    %v3219 = vld [vmem:[%s1 + $0x34] sm:$0xf]
    %v3220 = vld [vmem:[%s1 + $0x38] sm:$0xf]
    %v3221 = vld [vmem:[%s1 + $0x3c] sm:$0xf]
    %v3222 = vld [vmem:[%s1 + $0x40] sm:$0xf]
    %v3223 = vld [vmem:[%s1 + $0x44] sm:$0xf]
    %v3224 = vld [vmem:[%s1 + $0x48] sm:$0xf]
    %v3225 = vld [vmem:[%s1 + $0x4c] sm:$0xf]
    %v3226 = vld [vmem:[%s1 + $0x50] sm:$0xf]
    %v3227 = vld [vmem:[%s1 + $0x54] sm:$0xf]
    %v3228 = vld [vmem:[%s1 + $0x58] sm:$0xf]
    %v3229 = vld [vmem:[%s1 + $0x5c] sm:$0xf]
    %v3248 = vunpack.c.l.b16 %v3212
    %v3249 = vunpack.c.l.b16 %v3213
    %v3250 = vunpack.c.l.b16 %v3214
    %v3251 = vunpack.c.l.b16 %v3215
    %v3252 = vunpack.c.l.b16 %v3216
    %v3253 = vunpack.c.l.b16 %v3217
    %v3254 = vunpack.c.l.b16 %v3218
    %v3255 = vunpack.c.l.b16 %v3219
    %v3256 = vunpack.c.l.b16 %v3220
    %v3257 = vunpack.c.l.b16 %v3221
    %v3258 = vunpack.c.l.b16 %v3222
    %v3259 = vunpack.c.l.b16 %v3223
    %v3260 = vunpack.c.l.b16 %v3224
    %v3261 = vunpack.c.l.b16 %v3225
    %v3262 = vunpack.c.l.b16 %v3226
    %v3263 = vunpack.c.l.b16 %v3227
    %v3264 = vunpack.c.l.b16 %v3228
    %v3265 = vunpack.c.l.b16 %v3229
    %v3266 = vpack.c.b16 %v3249, %v3248
    %v3267 = vpack.c.b16 %v3251, %v3250
    %v3268 = vpack.c.b16 %v3253, %v3252
    %v3269 = vpack.c.b16 %v3255, %v3254
    %v3270 = vpack.c.b16 %v3257, %v3256
    %v3271 = vpack.c.b16 %v3259, %v3258
    %v3272 = vpack.c.b16 %v3261, %v3260
    %v3273 = vpack.c.b16 %v3263, %v3262
    %v3274 = vpack.c.b16 %v3265, %v3264
    %v3285 = vsel %vm16, %v3181, 0
    %v3288 = vsel %vm16, %v3183, 0
    %v3291 = vsel %vm16, %v3185, 0
    %v3294 = vsel %vm16, %v3187, 0
    %v3297 = vsel %vm16, %v3189, 0
    %v3300 = vsel %vm16, %v3191, 0
    %v3303 = vsel %vm16, %v3193, 0
    %v3306 = vsel %vm16, %v3195, 0
    %v3309 = vsel %vm16, %v3197, 0
    %v3312 = vsel %vm16, %v3199, 0
    %v3315 = vsel %vm16, %v3201, 0
    %v3318 = vsel %vm16, %v3203, 0
    %v3321 = vsel %vm16, %v3205, 0
    %v3324 = vsel %vm16, %v3207, 0
    %v3327 = vsel %vm16, %v3209, 0
    %v3330 = vsel %vm16, %v3211, 0
    %3332 = vmatprep.subr.bf16.mxu0 0
    %3333 = vmatpush1.bf16.msra.mxu0 %v3266
    %3334 = vmatprep.subr.bf16.mxu0 0
    %3335 = vmatpush1.bf16.msra.mxu0 %v3267
    %3336 = vmatprep.subr.bf16.mxu0 0
    %3337 = vmatpush1.bf16.msra.mxu0 %v3268
    %3338 = vmatprep.subr.bf16.mxu0 0
    %3339 = vmatpush1.bf16.msra.mxu0 %v3269
    %3340 = vmatprep.subr.bf16.mxu0 0
    %3341 = vmatpush1.bf16.msra.mxu0 %v3270
    %3342 = vmatprep.subr.bf16.mxu0 0
    %3343 = vmatpush1.bf16.msra.mxu0 %v3271
    %3344 = vmatprep.subr.bf16.mxu0 0
    %3345 = vmatpush1.bf16.msra.mxu0 %v3272
    %3346 = vmatprep.subr.bf16.mxu0 0
    %3347 = vmatpush1.bf16.msra.mxu0 %v3273
    %3348 = vmatprep.subr.bf16.mxu0 0
    %3349 = vmatpush1.bf16.msra.mxu0 %v3274
    %3350 = vmatprep.subr.bf16.mxu0 0
    %3351 = vmatpush1.bf16.msra.mxu0 0
    %3352 = vmatprep.subr.bf16.mxu0 0
    %3353 = vmatpush1.bf16.msra.mxu0 0
    %3354 = vmatprep.subr.bf16.mxu0 0
    %3355 = vmatpush1.bf16.msra.mxu0 0
    %3356 = vmatprep.subr.bf16.mxu0 0
    %3357 = vmatpush1.bf16.msra.mxu0 0
    %3358 = vmatprep.subr.bf16.mxu0 0
    %3359 = vmatpush1.bf16.msra.mxu0 0
    %3360 = vmatprep.subr.bf16.mxu0 0
    %3361 = vmatpush1.bf16.msra.mxu0 0
    %3362 = vmatprep.subr.bf16.mxu0 0
    %3363 = vmatpush1.bf16.msra.mxu0 0
    %3364 = vmatprep.mubr.bf16.mxu0 %v3285
    %3365 = vmatmul.mubr.bf16.gmra.mrb[0].mxu0 %v3180
    %v3366 = vpop.f32.mrb[0].mxu0
    %v3367 = vadd.f32 0.0, %v3366
    %v3368 = vpop.f32.mrb[0].mxu0
    %v3369 = vpop.f32.mrb[0].mxu0
    %v3370 = vadd.f32 0.0, %v3369
    %v3371 = vpop.f32.mrb[0].mxu0
    %3372 = vmatprep.mubr.bf16.mxu0 %v3288
    %3373 = vmatmul.mubr.bf16.gmra.mrb[0].mxu0 %v3182
    %v3374 = vpop.f32.mrb[0].mxu0
    %v3375 = vadd.f32 0.0, %v3374
    %v3376 = vpop.f32.mrb[0].mxu0
    %v3377 = vpop.f32.mrb[0].mxu0
    %v3378 = vadd.f32 0.0, %v3377
    %v3379 = vpop.f32.mrb[0].mxu0
    %3380 = vmatprep.mubr.bf16.mxu0 %v3291
    %3381 = vmatmul.mubr.bf16.gmra.mrb[0].mxu0 %v3184
    %v3382 = vpop.f32.mrb[0].mxu0
    %v3383 = vadd.f32 0.0, %v3382
    %v3384 = vpop.f32.mrb[0].mxu0
    %v3385 = vpop.f32.mrb[0].mxu0
    %v3386 = vadd.f32 0.0, %v3385
    %v3387 = vpop.f32.mrb[0].mxu0
    %3388 = vmatprep.mubr.bf16.mxu0 %v3294
    %3389 = vmatmul.mubr.bf16.gmra.mrb[0].mxu0 %v3186
    %v3390 = vpop.f32.mrb[0].mxu0
    %v3391 = vadd.f32 0.0, %v3390
    %v3392 = vpop.f32.mrb[0].mxu0
    %v3393 = vpop.f32.mrb[0].mxu0
    %v3394 = vadd.f32 0.0, %v3393
    %v3395 = vpop.f32.mrb[0].mxu0
    %3396 = vmatprep.mubr.bf16.mxu0 %v3297
    %3397 = vmatmul.mubr.bf16.gmra.mrb[0].mxu0 %v3188
    %v3398 = vpop.f32.mrb[0].mxu0
    %v3399 = vadd.f32 0.0, %v3398
    %v3400 = vpop.f32.mrb[0].mxu0
    %v3401 = vpop.f32.mrb[0].mxu0
    %v3402 = vadd.f32 0.0, %v3401
    %v3403 = vpop.f32.mrb[0].mxu0
    %3404 = vmatprep.mubr.bf16.mxu0 %v3300
    %3405 = vmatmul.mubr.bf16.gmra.mrb[0].mxu0 %v3190
    %v3406 = vpop.f32.mrb[0].mxu0
    %v3407 = vadd.f32 0.0, %v3406
    %v3408 = vpop.f32.mrb[0].mxu0
    %v3409 = vpop.f32.mrb[0].mxu0
    %v3410 = vadd.f32 0.0, %v3409
    %v3411 = vpop.f32.mrb[0].mxu0
    %3412 = vmatprep.mubr.bf16.mxu0 %v3303
    %3413 = vmatmul.mubr.bf16.gmra.mrb[0].mxu0 %v3192
    %v3414 = vpop.f32.mrb[0].mxu0
    %v3415 = vadd.f32 0.0, %v3414
    %v3416 = vpop.f32.mrb[0].mxu0
    %v3417 = vpop.f32.mrb[0].mxu0
    %v3418 = vadd.f32 0.0, %v3417
    %v3419 = vpop.f32.mrb[0].mxu0
    %3420 = vmatprep.mubr.bf16.mxu0 %v3306
    %3421 = vmatmul.mubr.bf16.gmra.mrb[0].mxu0 %v3194
    %v3422 = vpop.f32.mrb[0].mxu0
    %v3423 = vadd.f32 0.0, %v3422
    %v3424 = vpop.f32.mrb[0].mxu0
    %v3425 = vpop.f32.mrb[0].mxu0
    %v3426 = vadd.f32 0.0, %v3425
    %v3427 = vpop.f32.mrb[0].mxu0
    %3428 = vmatprep.mubr.bf16.mxu0 %v3309
    %3429 = vmatmul.mubr.bf16.gmra.mrb[0].mxu0 %v3196
    %v3430 = vpop.f32.mrb[0].mxu0
    %v3431 = vadd.f32 0.0, %v3430
    %v3432 = vpop.f32.mrb[0].mxu0
    %v3433 = vpop.f32.mrb[0].mxu0
    %v3434 = vadd.f32 0.0, %v3433
    %v3435 = vpop.f32.mrb[0].mxu0
    %3436 = vmatprep.mubr.bf16.mxu0 %v3312
    %3437 = vmatmul.mubr.bf16.gmra.mrb[0].mxu0 %v3198
    %v3438 = vpop.f32.mrb[0].mxu0
    %v3439 = vadd.f32 0.0, %v3438
    %v3440 = vpop.f32.mrb[0].mxu0
    %v3441 = vpop.f32.mrb[0].mxu0
    %v3442 = vadd.f32 0.0, %v3441
    %v3443 = vpop.f32.mrb[0].mxu0
    %3444 = vmatprep.mubr.bf16.mxu0 %v3315
    %3445 = vmatmul.mubr.bf16.gmra.mrb[0].mxu0 %v3200
    %v3446 = vpop.f32.mrb[0].mxu0
    %v3447 = vadd.f32 0.0, %v3446
    %v3448 = vpop.f32.mrb[0].mxu0
    %v3449 = vpop.f32.mrb[0].mxu0
    %v3450 = vadd.f32 0.0, %v3449
    %v3451 = vpop.f32.mrb[0].mxu0
    %3452 = vmatprep.mubr.bf16.mxu0 %v3318
    %3453 = vmatmul.mubr.bf16.gmra.mrb[0].mxu0 %v3202
    %v3454 = vpop.f32.mrb[0].mxu0
    %v3455 = vadd.f32 0.0, %v3454
    %v3456 = vpop.f32.mrb[0].mxu0
    %v3457 = vpop.f32.mrb[0].mxu0
    %v3458 = vadd.f32 0.0, %v3457
    %v3459 = vpop.f32.mrb[0].mxu0
    %3460 = vmatprep.mubr.bf16.mxu0 %v3321
    %3461 = vmatmul.mubr.bf16.gmra.mrb[0].mxu0 %v3204
    %v3462 = vpop.f32.mrb[0].mxu0
    %v3463 = vadd.f32 0.0, %v3462
    %v3464 = vpop.f32.mrb[0].mxu0
    %v3465 = vpop.f32.mrb[0].mxu0
    %v3466 = vadd.f32 0.0, %v3465
    %v3467 = vpop.f32.mrb[0].mxu0
    %3468 = vmatprep.mubr.bf16.mxu0 %v3324
    %3469 = vmatmul.mubr.bf16.gmra.mrb[0].mxu0 %v3206
    %v3470 = vpop.f32.mrb[0].mxu0
    %v3471 = vadd.f32 0.0, %v3470
    %v3472 = vpop.f32.mrb[0].mxu0
    %v3473 = vpop.f32.mrb[0].mxu0
    %v3474 = vadd.f32 0.0, %v3473
    %v3475 = vpop.f32.mrb[0].mxu0
    %3476 = vmatprep.mubr.bf16.mxu0 %v3327
    %3477 = vmatmul.mubr.bf16.gmra.mrb[0].mxu0 %v3208
    %v3478 = vpop.f32.mrb[0].mxu0
    %v3479 = vadd.f32 0.0, %v3478
    %v3480 = vpop.f32.mrb[0].mxu0
    %v3481 = vpop.f32.mrb[0].mxu0
    %v3482 = vadd.f32 0.0, %v3481
    %v3483 = vpop.f32.mrb[0].mxu0
    %3484 = vmatprep.mubr.bf16.mxu0 %v3330
    %3485 = vmatmul.mubr.bf16.gmra.mrb[0].mxu0 %v3210
    %v3486 = vpop.f32.mrb[0].mxu0
    %v3487 = vadd.f32 0.0, %v3486
    %v3488 = vpop.f32.mrb[0].mxu0
    %v3489 = vpop.f32.mrb[0].mxu0
    %v3490 = vadd.f32 0.0, %v3489
    %v3491 = vpop.f32.mrb[0].mxu0
    %3492 = vdwg.mxu0
    %v3493 = vmul.f32 %v3367, %v3367
    %v3494 = vmul.f32 %v3370, %v3370
    %v3495 = vmul.f32 %v3375, %v3375
    %v3496 = vmul.f32 %v3378, %v3378
    %v3497 = vmul.f32 %v3383, %v3383
    %v3498 = vmul.f32 %v3386, %v3386
    %v3499 = vmul.f32 %v3391, %v3391
    %v3500 = vmul.f32 %v3394, %v3394
    %v3501 = vmul.f32 %v3399, %v3399
    %v3502 = vmul.f32 %v3402, %v3402
    %v3503 = vmul.f32 %v3407, %v3407
    %v3504 = vmul.f32 %v3410, %v3410
    %v3505 = vmul.f32 %v3415, %v3415
    %v3506 = vmul.f32 %v3418, %v3418
    %v3507 = vmul.f32 %v3423, %v3423
    %v3508 = vmul.f32 %v3426, %v3426
    %v3509 = vmul.f32 %v3431, %v3431
    %v3510 = vmul.f32 %v3434, %v3434
    %v3511 = vmul.f32 %v3439, %v3439
    %v3512 = vmul.f32 %v3442, %v3442
    %v3513 = vmul.f32 %v3447, %v3447
    %v3514 = vmul.f32 %v3450, %v3450
    %v3515 = vmul.f32 %v3455, %v3455
    %v3516 = vmul.f32 %v3458, %v3458
    %v3517 = vmul.f32 %v3463, %v3463
    %v3518 = vmul.f32 %v3466, %v3466
    %v3519 = vmul.f32 %v3471, %v3471
    %v3520 = vmul.f32 %v3474, %v3474
    %v3521 = vmul.f32 %v3479, %v3479
    %v3522 = vmul.f32 %v3482, %v3482
    %v3523 = vmul.f32 %v3487, %v3487
    %v3524 = vmul.f32 %v3490, %v3490
    %3557 = vrot.lane.b32.xlu0 %v3493, 16
    %v3558 = vpop.permute.xlu0 %3557
    %3559 = vrot.lane.b32.xlu0 %v3494, 16
    %v3560 = vpop.permute.xlu0 %3559
    %3561 = vrot.lane.b32.xlu0 %v3495, 16
    %v3562 = vpop.permute.xlu0 %3561
    %3563 = vrot.lane.b32.xlu0 %v3496, 16
    %v3564 = vpop.permute.xlu0 %3563
    %3565 = vrot.lane.b32.xlu0 %v3497, 16
    %v3566 = vpop.permute.xlu0 %3565
    %3567 = vrot.lane.b32.xlu0 %v3498, 16
    %v3568 = vpop.permute.xlu0 %3567
    %3569 = vrot.lane.b32.xlu0 %v3499, 16
    %v3570 = vpop.permute.xlu0 %3569
    %3571 = vrot.lane.b32.xlu0 %v3500, 16
    %v3572 = vpop.permute.xlu0 %3571
    %3573 = vrot.lane.b32.xlu0 %v3501, 16
    %v3574 = vpop.permute.xlu0 %3573
    %3575 = vrot.lane.b32.xlu0 %v3502, 16
    %v3576 = vpop.permute.xlu0 %3575
    %3577 = vrot.lane.b32.xlu0 %v3503, 16
    %v3578 = vpop.permute.xlu0 %3577
    %3579 = vrot.lane.b32.xlu0 %v3504, 16
    %v3580 = vpop.permute.xlu0 %3579
    %3581 = vrot.lane.b32.xlu0 %v3505, 16
    %v3582 = vpop.permute.xlu0 %3581
    %3583 = vrot.lane.b32.xlu0 %v3506, 16
    %v3584 = vpop.permute.xlu0 %3583
    %3585 = vrot.lane.b32.xlu0 %v3507, 16
    %v3586 = vpop.permute.xlu0 %3585
    %3587 = vrot.lane.b32.xlu0 %v3508, 16
    %v3588 = vpop.permute.xlu0 %3587
    %3589 = vrot.lane.b32.xlu0 %v3509, 16
    %v3590 = vpop.permute.xlu0 %3589
    %3591 = vrot.lane.b32.xlu0 %v3510, 16
    %v3592 = vpop.permute.xlu0 %3591
    %3593 = vrot.lane.b32.xlu0 %v3511, 16
    %v3594 = vpop.permute.xlu0 %3593
    %3595 = vrot.lane.b32.xlu0 %v3512, 16
    %v3596 = vpop.permute.xlu0 %3595
    %3597 = vrot.lane.b32.xlu0 %v3513, 16
    %v3598 = vpop.permute.xlu0 %3597
    %3599 = vrot.lane.b32.xlu0 %v3514, 16
    %v3600 = vpop.permute.xlu0 %3599
    %3601 = vrot.lane.b32.xlu0 %v3515, 16
    %v3602 = vpop.permute.xlu0 %3601
    %3603 = vrot.lane.b32.xlu0 %v3516, 16
    %v3604 = vpop.permute.xlu0 %3603
    %3605 = vrot.lane.b32.xlu0 %v3517, 16
    %v3606 = vpop.permute.xlu0 %3605
    %3607 = vrot.lane.b32.xlu0 %v3518, 16
    %v3608 = vpop.permute.xlu0 %3607
    %3609 = vrot.lane.b32.xlu0 %v3519, 16
    %v3610 = vpop.permute.xlu0 %3609
    %3611 = vrot.lane.b32.xlu0 %v3520, 16
    %v3612 = vpop.permute.xlu0 %3611
    %3613 = vrot.lane.b32.xlu0 %v3521, 16
    %v3614 = vpop.permute.xlu0 %3613
    %3615 = vrot.lane.b32.xlu0 %v3522, 16
    %v3616 = vpop.permute.xlu0 %3615
    %3617 = vrot.lane.b32.xlu0 %v3523, 16
    %v3618 = vpop.permute.xlu0 %3617
    %3619 = vrot.lane.b32.xlu0 %v3524, 16
    %v3620 = vpop.permute.xlu0 %3619
    %v3653 = vsel %vm16, %v3367, %v3558
    %v3654 = vsel %vm16, %v3370, %v3560
    %v3655 = vsel %vm16, %v3375, %v3562
    %v3656 = vsel %vm16, %v3378, %v3564
    %v3657 = vsel %vm16, %v3383, %v3566
    %v3658 = vsel %vm16, %v3386, %v3568
    %v3659 = vsel %vm16, %v3391, %v3570
    %v3660 = vsel %vm16, %v3394, %v3572
    %v3661 = vsel %vm16, %v3399, %v3574
    %v3662 = vsel %vm16, %v3402, %v3576
    %v3663 = vsel %vm16, %v3407, %v3578
    %v3664 = vsel %vm16, %v3410, %v3580
    %v3665 = vsel %vm16, %v3415, %v3582
    %v3666 = vsel %vm16, %v3418, %v3584
    %v3667 = vsel %vm16, %v3423, %v3586
    %v3668 = vsel %vm16, %v3426, %v3588
    %v3669 = vsel %vm16, %v3431, %v3590
    %v3670 = vsel %vm16, %v3434, %v3592
    %v3671 = vsel %vm16, %v3439, %v3594
    %v3672 = vsel %vm16, %v3442, %v3596
    %v3673 = vsel %vm16, %v3447, %v3598
    %v3674 = vsel %vm16, %v3450, %v3600
    %v3675 = vsel %vm16, %v3455, %v3602
    %v3676 = vsel %vm16, %v3458, %v3604
    %v3677 = vsel %vm16, %v3463, %v3606
    %v3678 = vsel %vm16, %v3466, %v3608
    %v3679 = vsel %vm16, %v3471, %v3610
    %v3680 = vsel %vm16, %v3474, %v3612
    %v3681 = vsel %vm16, %v3479, %v3614
    %v3682 = vsel %vm16, %v3482, %v3616
    %v3683 = vsel %vm16, %v3487, %v3618
    %v3684 = vsel %vm16, %v3490, %v3620
    %v3685 = vsel %vm569, %v3653, 0.0
    %v3686 = vsel %vm569, %v3654, 0.0
    %v3687 = vadd.f32 %v3685, %v3686
    %v3688 = vsel %vm569, %v3655, 0.0
    %v3689 = vadd.f32 %v3687, %v3688
    %v3690 = vsel %vm569, %v3656, 0.0
    %v3691 = vadd.f32 %v3689, %v3690
    %v3692 = vsel %vm569, %v3657, 0.0
    %v3693 = vadd.f32 %v3691, %v3692
    %v3694 = vsel %vm569, %v3658, 0.0
    %v3695 = vadd.f32 %v3693, %v3694
    %v3696 = vsel %vm569, %v3659, 0.0
    %v3697 = vadd.f32 %v3695, %v3696
    %v3698 = vsel %vm569, %v3660, 0.0
    %v3699 = vadd.f32 %v3697, %v3698
    %v3700 = vsel %vm569, %v3661, 0.0
    %v3701 = vadd.f32 %v3699, %v3700
    %v3702 = vsel %vm569, %v3662, 0.0
    %v3703 = vadd.f32 %v3701, %v3702
    %v3704 = vsel %vm569, %v3663, 0.0
    %v3705 = vadd.f32 %v3703, %v3704
    %v3706 = vsel %vm569, %v3664, 0.0
    %v3707 = vadd.f32 %v3705, %v3706
    %v3708 = vsel %vm569, %v3665, 0.0
    %v3709 = vadd.f32 %v3707, %v3708
    %v3710 = vsel %vm569, %v3666, 0.0
    %v3711 = vadd.f32 %v3709, %v3710
    %v3712 = vsel %vm569, %v3667, 0.0
    %v3713 = vadd.f32 %v3711, %v3712
    %v3714 = vsel %vm569, %v3668, 0.0
    %v3715 = vadd.f32 %v3713, %v3714
    %v3716 = vsel %vm569, %v3669, 0.0
    %v3717 = vadd.f32 %v3715, %v3716
    %v3718 = vsel %vm569, %v3670, 0.0
    %v3719 = vadd.f32 %v3717, %v3718
    %v3720 = vsel %vm569, %v3671, 0.0
    %v3721 = vadd.f32 %v3719, %v3720
    %v3722 = vsel %vm569, %v3672, 0.0
    %v3723 = vadd.f32 %v3721, %v3722
    %v3724 = vsel %vm569, %v3673, 0.0
    %v3725 = vadd.f32 %v3723, %v3724
    %v3726 = vsel %vm569, %v3674, 0.0
    %v3727 = vadd.f32 %v3725, %v3726
    %v3728 = vsel %vm569, %v3675, 0.0
    %v3729 = vadd.f32 %v3727, %v3728
    %v3730 = vsel %vm569, %v3676, 0.0
    %v3731 = vadd.f32 %v3729, %v3730
    %v3732 = vsel %vm569, %v3677, 0.0
    %v3733 = vadd.f32 %v3731, %v3732
    %v3734 = vsel %vm569, %v3678, 0.0
    %v3735 = vadd.f32 %v3733, %v3734
    %v3736 = vsel %vm569, %v3679, 0.0
    %v3737 = vadd.f32 %v3735, %v3736
    %v3738 = vsel %vm569, %v3680, 0.0
    %v3739 = vadd.f32 %v3737, %v3738
    %v3740 = vsel %vm569, %v3681, 0.0
    %v3741 = vadd.f32 %v3739, %v3740
    %v3742 = vsel %vm569, %v3682, 0.0
    %v3743 = vadd.f32 %v3741, %v3742
    %v3744 = vsel %vm569, %v3683, 0.0
    %v3745 = vadd.f32 %v3743, %v3744
    %v3746 = vsel %vm569, %v3684, 0.0
    %v3747 = vadd.f32 %v3745, %v3746
    %v3748 = vrot.slane %v3747, 4
    %v3749 = vadd.f32 %v3747, %v3748
    %v3750 = vrot.slane %v3749, 2
    %v3751 = vadd.f32 %v3749, %v3750
    %v3752 = vrot.slane %v3751, 1
    %v3753 = vadd.f32 %v3751, %v3752
    %v3754 = vmul.f32 %v3753, 0.00390625
    %v3755 = vmul.f32 %v3754, %v3754
    %3757 = vrot.lane.b32.xlu0 %v3755, 16
    %v3758 = vpop.permute.xlu0 %3757
    %v3760 = vsub.f32 %v3754, %v3758
    %v3761 = vmax.f32 %v3760, 0.0
    %v3762 = vadd.f32 %v3761, 1e-05
    %v3763 = vrsqrt.pop %v3762
    %v3765 = vrot.slane %v3763, 4
    %3766 = vrot.lane.b32.xlu0 %v3765, 112
    %v3767 = vpop.permute.xlu0 %3766
    %v3769 = vmul.f32 %v504, %v3767
    %v3770 = vlaneseq
    %v3771 = vshrl.u32 %v3770, 7
    %v3772 = vsub.s32 4, %v3771
    %v3773 = vrot.slane %v3769, %v3772
    %v3774 = vmul.f32 %v3367, %v3773
    %v3775 = vmul.f32 %v3370, %v3773
    %v3776 = vmul.f32 %v3375, %v3773
    %v3777 = vmul.f32 %v3378, %v3773
    %v3778 = vmul.f32 %v3383, %v3773
    %v3779 = vmul.f32 %v3386, %v3773
    %v3780 = vmul.f32 %v3391, %v3773
    %v3781 = vmul.f32 %v3394, %v3773
    %v3782 = vmul.f32 %v3399, %v3773
    %v3783 = vmul.f32 %v3402, %v3773
    %v3784 = vmul.f32 %v3407, %v3773
    %v3785 = vmul.f32 %v3410, %v3773
    %v3786 = vmul.f32 %v3415, %v3773
    %v3787 = vmul.f32 %v3418, %v3773
    %v3788 = vmul.f32 %v3423, %v3773
    %v3789 = vmul.f32 %v3426, %v3773
    %v3790 = vmul.f32 %v3431, %v3773
    %v3791 = vmul.f32 %v3434, %v3773
    %v3792 = vmul.f32 %v3439, %v3773
    %v3793 = vmul.f32 %v3442, %v3773
    %v3794 = vmul.f32 %v3447, %v3773
    %v3795 = vmul.f32 %v3450, %v3773
    %v3796 = vmul.f32 %v3455, %v3773
    %v3797 = vmul.f32 %v3458, %v3773
    %v3798 = vmul.f32 %v3463, %v3773
    %v3799 = vmul.f32 %v3466, %v3773
    %v3800 = vmul.f32 %v3471, %v3773
    %v3801 = vmul.f32 %v3474, %v3773
    %v3802 = vmul.f32 %v3479, %v3773
    %v3803 = vmul.f32 %v3482, %v3773
    %v3804 = vmul.f32 %v3487, %v3773
    %v3805 = vmul.f32 %v3490, %v3773
    %v3806 = vmul.f32 %v3754, %v3769
    %v3808 = vrot.slane %v3806, 7
    %v3810 = vsub.f32 %v504, %v3808
    %v3811 = vlaneseq
    %v3812 = vshrl.u32 %v3811, 7
    %v3813 = vsub.s32 5, %v3812
    %v3814 = vrot.slane %v3810, %v3813
    %v3815 = vadd.f32 %v3774, %v3814
    %v3816 = vadd.f32 %v3775, %v3814
    %v3817 = vadd.f32 %v3776, %v3814
    %v3818 = vadd.f32 %v3777, %v3814
    %v3819 = vadd.f32 %v3778, %v3814
    %v3820 = vadd.f32 %v3779, %v3814
    %v3821 = vadd.f32 %v3780, %v3814
    %v3822 = vadd.f32 %v3781, %v3814
    %v3823 = vadd.f32 %v3782, %v3814
    %v3824 = vadd.f32 %v3783, %v3814
    %v3825 = vadd.f32 %v3784, %v3814
    %v3826 = vadd.f32 %v3785, %v3814
    %v3827 = vadd.f32 %v3786, %v3814
    %v3828 = vadd.f32 %v3787, %v3814
    %v3829 = vadd.f32 %v3788, %v3814
    %v3830 = vadd.f32 %v3789, %v3814
    %v3831 = vadd.f32 %v3790, %v3814
    %v3832 = vadd.f32 %v3791, %v3814
    %v3833 = vadd.f32 %v3792, %v3814
    %v3834 = vadd.f32 %v3793, %v3814
    %v3835 = vadd.f32 %v3794, %v3814
    %v3836 = vadd.f32 %v3795, %v3814
    %v3837 = vadd.f32 %v3796, %v3814
    %v3838 = vadd.f32 %v3797, %v3814
    %v3839 = vadd.f32 %v3798, %v3814
    %v3840 = vadd.f32 %v3799, %v3814
    %v3841 = vadd.f32 %v3800, %v3814
    %v3842 = vadd.f32 %v3801, %v3814
    %v3843 = vadd.f32 %v3802, %v3814
    %v3844 = vadd.f32 %v3803, %v3814
    %v3845 = vadd.f32 %v3804, %v3814
    %v3846 = vadd.f32 %v3805, %v3814
    %v3847 = vmax.f32 %v3815, 0.0
    %v3848 = vmax.f32 %v3816, 0.0
    %v3849 = vmax.f32 %v3817, 0.0
    %v3850 = vmax.f32 %v3818, 0.0
    %v3851 = vmax.f32 %v3819, 0.0
    %v3852 = vmax.f32 %v3820, 0.0
    %v3853 = vmax.f32 %v3821, 0.0
    %v3854 = vmax.f32 %v3822, 0.0
    %v3855 = vmax.f32 %v3823, 0.0
    %v3856 = vmax.f32 %v3824, 0.0
    %v3857 = vmax.f32 %v3825, 0.0
    %v3858 = vmax.f32 %v3826, 0.0
    %v3859 = vmax.f32 %v3827, 0.0
    %v3860 = vmax.f32 %v3828, 0.0
    %v3861 = vmax.f32 %v3829, 0.0
    %v3862 = vmax.f32 %v3830, 0.0
    %v3863 = vmax.f32 %v3831, 0.0
    %v3864 = vmax.f32 %v3832, 0.0
    %v3865 = vmax.f32 %v3833, 0.0
    %v3866 = vmax.f32 %v3834, 0.0
    %v3867 = vmax.f32 %v3835, 0.0
    %v3868 = vmax.f32 %v3836, 0.0
    %v3869 = vmax.f32 %v3837, 0.0
    %v3870 = vmax.f32 %v3838, 0.0
    %v3871 = vmax.f32 %v3839, 0.0
    %v3872 = vmax.f32 %v3840, 0.0
    %v3873 = vmax.f32 %v3841, 0.0
    %v3874 = vmax.f32 %v3842, 0.0
    %v3875 = vmax.f32 %v3843, 0.0
    %v3876 = vmax.f32 %v3844, 0.0
    %v3877 = vmax.f32 %v3845, 0.0
    %v3878 = vmax.f32 %v3846, 0.0
    %v3879 = vsel %vm16, %v3847, 0.0
    %v3880 = vsel %vm16, %v3848, 0.0
    %v3881 = vadd.f32 %v3879, %v3880
    %v3882 = vsel %vm16, %v3849, 0.0
    %v3883 = vadd.f32 %v3881, %v3882
    %v3884 = vsel %vm16, %v3850, 0.0
    %v3885 = vadd.f32 %v3883, %v3884
    %v3886 = vsel %vm16, %v3851, 0.0
    %v3887 = vadd.f32 %v3885, %v3886
    %v3888 = vsel %vm16, %v3852, 0.0
    %v3889 = vadd.f32 %v3887, %v3888
    %v3890 = vsel %vm16, %v3853, 0.0
    %v3891 = vadd.f32 %v3889, %v3890
    %v3892 = vsel %vm16, %v3854, 0.0
    %v3893 = vadd.f32 %v3891, %v3892
    %v3894 = vsel %vm16, %v3855, 0.0
    %v3895 = vadd.f32 %v3893, %v3894
    %v3896 = vsel %vm16, %v3856, 0.0
    %v3897 = vadd.f32 %v3895, %v3896
    %v3898 = vsel %vm16, %v3857, 0.0
    %v3899 = vadd.f32 %v3897, %v3898
    %v3900 = vsel %vm16, %v3858, 0.0
    %v3901 = vadd.f32 %v3899, %v3900
    %v3902 = vsel %vm16, %v3859, 0.0
    %v3903 = vadd.f32 %v3901, %v3902
    %v3904 = vsel %vm16, %v3860, 0.0
    %v3905 = vadd.f32 %v3903, %v3904
    %v3906 = vsel %vm16, %v3861, 0.0
    %v3907 = vadd.f32 %v3905, %v3906
    %v3908 = vsel %vm16, %v3862, 0.0
    %v3909 = vadd.f32 %v3907, %v3908
    %v3910 = vsel %vm16, %v3863, 0.0
    %v3911 = vadd.f32 %v3909, %v3910
    %v3912 = vsel %vm16, %v3864, 0.0
    %v3913 = vadd.f32 %v3911, %v3912
    %v3914 = vsel %vm16, %v3865, 0.0
    %v3915 = vadd.f32 %v3913, %v3914
    %v3916 = vsel %vm16, %v3866, 0.0
    %v3917 = vadd.f32 %v3915, %v3916
    %v3918 = vsel %vm16, %v3867, 0.0
    %v3919 = vadd.f32 %v3917, %v3918
    %v3920 = vsel %vm16, %v3868, 0.0
    %v3921 = vadd.f32 %v3919, %v3920
    %v3922 = vsel %vm16, %v3869, 0.0
    %v3923 = vadd.f32 %v3921, %v3922
    %v3924 = vsel %vm16, %v3870, 0.0
    %v3925 = vadd.f32 %v3923, %v3924
    %v3926 = vsel %vm16, %v3871, 0.0
    %v3927 = vadd.f32 %v3925, %v3926
    %v3928 = vsel %vm16, %v3872, 0.0
    %v3929 = vadd.f32 %v3927, %v3928
    %v3930 = vsel %vm16, %v3873, 0.0
    %v3931 = vadd.f32 %v3929, %v3930
    %v3932 = vsel %vm16, %v3874, 0.0
    %v3933 = vadd.f32 %v3931, %v3932
    %v3934 = vsel %vm16, %v3875, 0.0
    %v3935 = vadd.f32 %v3933, %v3934
    %v3936 = vsel %vm16, %v3876, 0.0
    %v3937 = vadd.f32 %v3935, %v3936
    %v3938 = vsel %vm16, %v3877, 0.0
    %v3939 = vadd.f32 %v3937, %v3938
    %v3940 = vsel %vm16, %v3878, 0.0
    %v3941 = vadd.f32 %v3939, %v3940
    %v3942 = vrot.slane %v3941, 4
    %v3943 = vadd.f32 %v3941, %v3942
    %v3944 = vrot.slane %v3943, 2
    %v3945 = vadd.f32 %v3943, %v3944
    %v3946 = vrot.slane %v3945, 1
    %v3947 = vadd.f32 %v3945, %v3946
    %v3948 = vsel %vm569, %v505, 0.0
    %v3949 = vsel %vm569, %v506, 0.0
    %v3950 = vadd.f32 %v3948, %v3949
    %v3951 = vsel %vm569, %v507, 0.0
    %v3952 = vadd.f32 %v3950, %v3951
    %v3953 = vsel %vm569, %v508, 0.0
    %v3954 = vadd.f32 %v3952, %v3953
    %v3955 = vsel %vm569, %v509, 0.0
    %v3956 = vadd.f32 %v3954, %v3955
    %v3957 = vsel %vm569, %v510, 0.0
    %v3958 = vadd.f32 %v3956, %v3957
    %v3959 = vsel %vm569, %v511, 0.0
    %v3960 = vadd.f32 %v3958, %v3959
    %v3961 = vsel %vm569, %v512, 0.0
    %v3962 = vadd.f32 %v3960, %v3961
    %v3963 = vsel %vm569, %v513, 0.0
    %v3964 = vadd.f32 %v3962, %v3963
    %v3965 = vsel %vm569, %v514, 0.0
    %v3966 = vadd.f32 %v3964, %v3965
    %v3967 = vsel %vm569, %v515, 0.0
    %v3968 = vadd.f32 %v3966, %v3967
    %v3969 = vsel %vm569, %v516, 0.0
    %v3970 = vadd.f32 %v3968, %v3969
    %v3971 = vsel %vm569, %v517, 0.0
    %v3972 = vadd.f32 %v3970, %v3971
    %v3973 = vsel %vm569, %v518, 0.0
    %v3974 = vadd.f32 %v3972, %v3973
    %v3975 = vsel %vm569, %v519, 0.0
    %v3976 = vadd.f32 %v3974, %v3975
    %v3977 = vsel %vm569, %v520, 0.0
    %v3978 = vadd.f32 %v3976, %v3977
    %v3979 = vsel %vm569, %v521, 0.0
    %v3980 = vadd.f32 %v3978, %v3979
    %v3981 = vsel %vm569, %v522, 0.0
    %v3982 = vadd.f32 %v3980, %v3981
    %v3983 = vsel %vm569, %v523, 0.0
    %v3984 = vadd.f32 %v3982, %v3983
    %v3985 = vsel %vm569, %v524, 0.0
    %v3986 = vadd.f32 %v3984, %v3985
    %v3987 = vsel %vm569, %v525, 0.0
    %v3988 = vadd.f32 %v3986, %v3987
    %v3989 = vsel %vm569, %v526, 0.0
    %v3990 = vadd.f32 %v3988, %v3989
    %v3991 = vsel %vm569, %v527, 0.0
    %v3992 = vadd.f32 %v3990, %v3991
    %v3993 = vsel %vm569, %v528, 0.0
    %v3994 = vadd.f32 %v3992, %v3993
    %v3995 = vsel %vm569, %v529, 0.0
    %v3996 = vadd.f32 %v3994, %v3995
    %v3997 = vsel %vm569, %v530, 0.0
    %v3998 = vadd.f32 %v3996, %v3997
    %v3999 = vsel %vm569, %v531, 0.0
    %v4000 = vadd.f32 %v3998, %v3999
    %v4001 = vsel %vm569, %v532, 0.0
    %v4002 = vadd.f32 %v4000, %v4001
    %v4003 = vsel %vm569, %v533, 0.0
    %v4004 = vadd.f32 %v4002, %v4003
    %v4005 = vsel %vm569, %v534, 0.0
    %v4006 = vadd.f32 %v4004, %v4005
    %v4007 = vsel %vm569, %v535, 0.0
    %v4008 = vadd.f32 %v4006, %v4007
    %v4009 = vsel %vm569, %v536, 0.0
    %v4010 = vadd.f32 %v4008, %v4009
    %v4011 = vrot.slane %v4010, 4
    %v4012 = vadd.f32 %v4010, %v4011
    %v4013 = vrot.slane %v4012, 2
    %v4014 = vadd.f32 %v4012, %v4013
    %v4015 = vrot.slane %v4014, 1
    %v4016 = vadd.f32 %v4014, %v4015
    %4018 = vrot.lane.b32.xlu0 %v4016, 16
    %v4019 = vpop.permute.xlu0 %4018
    %v4021 = vsel %vm16, %v3947, %v4019
    %v4022 = vld [vmem:[%s2 + $0x8] sm:$0xff]
    %v4023 = vld [vmem:[%s2 + $0x10] sm:$0xff]
    %v4024 = vld [vmem:[%s2 + $0x18] sm:$0xff]
    %v4025 = vld [vmem:[%s2 + $0x20] sm:$0xff]
    %v4026 = vld [vmem:[%s2 + $0x28] sm:$0xff]
    %v4027 = vld [vmem:[%s2 + $0x30] sm:$0xff]
    %v4028 = vld [vmem:[%s2 + $0x38] sm:$0x1]
    %v4030 = vsel %vm3015, %v4021, 0
    %4032 = vmatprep.subr.mxu0 0.0
    %4033 = vmatpush1.msra.mxu0 %v4022
    %4034 = vmatprep.subr.mxu0 0.0
    %4035 = vmatpush1.msra.mxu0 %v4023
    %4036 = vmatprep.subr.mxu0 0.0
    %4037 = vmatpush1.msra.mxu0 %v4024
    %4038 = vmatprep.subr.mxu0 0.0
    %4039 = vmatpush1.msra.mxu0 %v4025
    %4040 = vmatprep.subr.mxu0 0.0
    %4041 = vmatpush1.msra.mxu0 %v4026
    %4042 = vmatprep.subr.mxu0 0.0
    %4043 = vmatpush1.msra.mxu0 %v4027
    %4044 = vmatprep.subr.mxu0 0.0
    %4045 = vmatpush1.msra.mxu0 0.0
    %4046 = vmatprep.subr.mxu0 0.0
    %4047 = vmatpush1.msra.mxu0 0.0
    %4048 = vmatprep.subr.mxu0 0.0
    %4049 = vmatpush1.msra.mxu0 0.0
    %4050 = vmatprep.subr.mxu0 0.0
    %4051 = vmatpush1.msra.mxu0 0.0
    %4052 = vmatprep.subr.mxu0 0.0
    %4053 = vmatpush1.msra.mxu0 0.0
    %4054 = vmatprep.subr.mxu0 0.0
    %4055 = vmatpush1.msra.mxu0 0.0
    %4056 = vmatprep.subr.mxu0 0.0
    %4057 = vmatpush1.msra.mxu0 0.0
    %4058 = vmatprep.subr.mxu0 0.0
    %4059 = vmatpush1.msra.mxu0 0.0
    %4060 = vmatprep.subr.mxu0 0.0
    %4061 = vmatpush1.msra.mxu0 0.0
    %4062 = vmatprep.subr.mxu0 0.0
    %4063 = vmatpush1.msra.mxu0 0.0
    %4064 = vmatprep.subr.mxu0 0.0
    %4065 = vmatpush1.msra.mxu0 0.0
    %4066 = vmatprep.subr.mxu0 0.0
    %4067 = vmatpush1.msra.mxu0 0.0
    %4068 = vmatprep.subr.mxu0 0.0
    %4069 = vmatpush1.msra.mxu0 0.0
    %4070 = vmatprep.subr.mxu0 0.0
    %4071 = vmatpush1.msra.mxu0 0.0
    %4072 = vmatprep.subr.mxu0 0.0
    %4073 = vmatpush1.msra.mxu0 0.0
    %4074 = vmatprep.subr.mxu0 0.0
    %4075 = vmatpush1.msra.mxu0 0.0
    %4076 = vmatprep.subr.mxu0 0.0
    %4077 = vmatpush1.msra.mxu0 0.0
    %4078 = vmatprep.subr.mxu0 0.0
    %4079 = vmatpush1.msra.mxu0 0.0
    %4080 = vmatprep.subr.mxu0 0.0
    %4081 = vmatpush1.msra.mxu0 0.0
    %4082 = vmatprep.subr.mxu0 0.0
    %4083 = vmatpush1.msra.mxu0 0.0
    %4084 = vmatprep.subr.mxu0 0.0
    %4085 = vmatpush1.msra.mxu0 0.0
    %4086 = vmatprep.subr.mxu0 0.0
    %4087 = vmatpush1.msra.mxu0 0.0
    %4088 = vmatprep.subr.mxu0 0.0
    %4089 = vmatpush1.msra.mxu0 0.0
    %4090 = vmatprep.subr.mxu0 0.0
    %4091 = vmatpush1.msra.mxu0 0.0
    %4092 = vmatprep.subr.mxu0 0.0
    %4093 = vmatpush1.msra.mxu0 0.0
    %4094 = vmatprep.subr.mxu0 0.0
    %4095 = vmatpush1.msra.mxu0 0.0
    %4096 = vmatprep.mubr.f32.mxu0 0.0
    %4097 = vmatmul.mubr.f32.gmra.mrb[0].mxu0 %v4030
    %v4098 = vpop.f32.mrb[0].mxu0
    %v4099 = vadd.f32 %v4028, %v4098
    %v4100 = vpop.f32.mrb[0].mxu0
    %4101 = vdwg.mxu0
    %4102 = vst [vmem:[#allocation3] sm:$0x1] %v4099
    // Predicated region
    $region14: #{test_model_forward.1} parent=1 // pred_check
      _
    $region15: #{test_model_forward.1} parent=1 // pred_check_branch
      %4104 = sbr.rel (0) target = $region17
    $region16: #{test_model_forward.1} parent=1 // pred_region
      %s4106 = ssub.s32 16, 16
      %4107 = vsyncadd [#allocation4], %s4106
      %s4109 = sshll.u32 [#allocation3], 4
      %s4110 = int_to_ptr.vmem [resolvable:$true] %s4109
      %4112 = dma.vmem_to_hbm [thread:$0]  %s4110, 16, %s3, [#allocation4]
    $region17: #{test_model_forward.1} parent=1 // pred_fallthru
      _
    // Predicated region
    $region18: #{test_model_forward.1} parent=1 // pred_check
      _
    $region19: #{test_model_forward.1} parent=1 // pred_check_branch
      %4114 = sbr.rel (0) target = $region21
    $region20: #{test_model_forward.1} parent=1 // pred_region
      %4115 = dma.done [#allocation4], 16
    $region21: #{test_model_forward.1} parent=1 // pred_fallthru
      _
    %4116 = vsyncpa [#allocation4], 1

</llo_original>
